<compile_context>
chip_gen: v7x
topology: tpu7x:2x2x1
jax: 0.10.0
libtpu: 0.0.40
codegen_flags: <defaults>
</compile_context>

<pallas_src>
import jax
import jax.numpy as jnp
from jax.experimental import pallas as pl
from jax.experimental.pallas import tpu as pltpu


CHW0, CHW1, CHW2, CHW3, DIM_O = 64, 256, 512, 256, 1
DIM_I = 3 * 3 * 11          # 99 input features per row
TB_MAX = 256                # batch rows per grid tile


def _round_up(n, m):
    return (n + m - 1) // m * m


# --------------------------------------------------------------------------
# Single fused Pallas kernel: the entire forward pass on one batch tile.
# --------------------------------------------------------------------------
def _fused_forward_kernel(x_ref, w0_ref, b0_ref, w1_ref, b1_ref,
                          w2_ref, b2_ref, wf1_ref, bf1_ref,
                          wf2_ref, bf2_ref, o_ref):
    f32, bf16 = jnp.float32, jnp.bfloat16

    # conv0 (1x1, 11->64) over all 9 pixels: one MXU dot on the native layout.
    x = x_ref[...].astype(bf16)                                    # (TB, 99)
    h0 = jnp.maximum(
        jnp.dot(x, w0_ref[...], preferred_element_type=f32) + b0_ref[...],
        0.0)                                                       # (TB, 576)

    # conv1 (2x2 VALID on 3x3, 64->256): one full-depth K=576 dot producing
    # all 4 output positions side by side in the lane dimension.
    h1 = jnp.maximum(
        jnp.dot(h0.astype(bf16), w1_ref[...], preferred_element_type=f32)
        + b1_ref[...], 0.0)                                        # (TB, 1024)

    # conv2 (2x2 VALID on 2x2, 256->512): dense (TB,1024)@(1024,512).
    h2 = jnp.maximum(
        jnp.dot(h1.astype(bf16), w2_ref[...], preferred_element_type=f32)
        + b2_ref[...], 0.0)                                        # (TB, 512)

    # fc1 (512->256) + ReLU.
    h3 = jnp.maximum(
        jnp.dot(h2.astype(bf16), wf1_ref[...], preferred_element_type=f32)
        + bf1_ref[...], 0.0)                                       # (TB, 256)

    # fc2 (256->1): f32 lane reduction; broadcast to a lane-dense output tile.
    res = jnp.sum(h3 * wf2_ref[...], axis=-1, keepdims=True) + bf2_ref[...]
    o_ref[...] = jnp.broadcast_to(res, o_ref.shape).astype(o_ref.dtype)


def _const_map(i):
    return (0, 0)


def _fused_call(x2, prep, tb):
    """x2: (Bp, 99) with Bp a multiple of tb -> (Bp, 128) lane-dense output."""
    bp = x2.shape[0]
    args = (x2,
            prep["w0"], prep["b0"], prep["w1"], prep["b1"],
            prep["w2"], prep["b2"], prep["wf1"], prep["bf1"],
            prep["wf2"], prep["bf2"])
    in_specs = [pl.BlockSpec((tb, DIM_I), lambda i: (i, 0))]
    in_specs += [pl.BlockSpec(a.shape, _const_map) for a in args[1:]]
    return pl.pallas_call(
        _fused_forward_kernel,
        out_shape=jax.ShapeDtypeStruct((bp, 128), jnp.float32),
        grid=(bp // tb,),
        in_specs=in_specs,
        out_specs=pl.BlockSpec((tb, 128), lambda i: (i, 0)),
        compiler_params=pltpu.CompilerParams(
            dimension_semantics=("parallel",),
            vmem_limit_bytes=32 * 1024 * 1024),
    )(*args)


# --------------------------------------------------------------------------
# Parameters (deterministic, PyTorch-default-like uniform init) + one-time
# kernel-ready prep (scatter / concat / transpose / bf16 cast).
# --------------------------------------------------------------------------
def init_params(key):
    ks = jax.random.split(key, 10)

    def u(k, shape, fan_in):
        bound = 1.0 / jnp.sqrt(jnp.float32(fan_in))
        return jax.random.uniform(k, shape, jnp.float32, -bound, bound)

    return {
        "w_conv0": u(ks[0], (CHW0, 11, 1, 1), 11),              # OIHW
        "b_conv0": u(ks[1], (CHW0,), 11),
        "w_conv1": u(ks[2], (CHW1, CHW0, 2, 2), CHW0 * 4),
        "b_conv1": u(ks[3], (CHW1,), CHW0 * 4),
        "w_conv2": u(ks[4], (CHW2, CHW1, 2, 2), CHW1 * 4),
        "b_conv2": u(ks[5], (CHW2,), CHW1 * 4),
        "w_fc1": u(ks[6], (CHW3, CHW2), CHW2),                  # (out, in)
        "b_fc1": u(ks[7], (CHW3,), CHW2),
        "w_fc2": u(ks[8], (DIM_O, CHW3), CHW3),
        "b_fc2": u(ks[9], (DIM_O,), CHW3),
    }


def prep_params(p):
    """One-time weight prep.  Column layouts:
         input row  : c*9 + pix                 (native x.view(B, 99))
         h0 columns : pix*64 + o                (pix = h*3 + w of the 3x3 grid)
         h1 columns : q*256 + o                 (q = qi*2 + qj, 2x2 conv1 output)
    """
    f32, bf16 = jnp.float32, jnp.bfloat16

    # conv0: (O, I, 1, 1) -> scattered block-diagonal (99, 576).
    w0 = p["w_conv0"].reshape(CHW0, 11)                       # (64, 11) [o, c]
    eye9 = jnp.eye(9, dtype=f32)
    w0_big = jnp.einsum("oc,pq->cpqo", w0, eye9).reshape(DIM_I, 9 * CHW0)
    b0_big = jnp.tile(p["b_conv0"], 9).reshape(1, 9 * CHW0)

    # conv1: OIHW -> (576, 1024); output block q gathers its 4 input pixels.
    w1 = p["w_conv1"]                                          # (256, 64, 2, 2)
    w1_big = jnp.zeros((9, CHW0, 4, CHW1), f32)
    for qi in range(2):
        for qj in range(2):
            q = qi * 2 + qj
            for kh in range(2):
                for kw in range(2):
                    pix = (qi + kh) * 3 + (qj + kw)
                    w1_big = w1_big.at[pix, :, q, :].set(w1[:, :, kh, kw].T)
    w1_big = w1_big.reshape(9 * CHW0, 4 * CHW1)
    b1_big = jnp.tile(p["b_conv1"], 4).reshape(1, 4 * CHW1)

    # conv2: OIHW -> (1024, 512), rows ordered (kh, kw, i) to match h1 columns.
    w2_cat = jnp.transpose(p["w_conv2"], (2, 3, 1, 0)).reshape(4 * CHW1, CHW2)
    b2 = p["b_conv2"].reshape(1, CHW2)

    return {
        "w0": w0_big.astype(bf16), "b0": b0_big.astype(f32),
        "w1": w1_big.astype(bf16), "b1": b1_big.astype(f32),
        "w2": w2_cat.astype(bf16), "b2": b2.astype(f32),
        "wf1": p["w_fc1"].T.astype(bf16),                      # (512, 256)
        "bf1": p["b_fc1"].reshape(1, CHW3).astype(f32),
        "wf2": p["w_fc2"].reshape(1, CHW3).astype(f32),        # f32 lane reduce
        "bf2": p["b_fc2"].reshape(1, 1).astype(f32),
    }


# --------------------------------------------------------------------------
# Forward pass: native-layout input, one fused batch-tiled kernel, tiny slice.
# --------------------------------------------------------------------------
@jax.jit
def forward(x, prep):
    x2 = x.reshape(-1, DIM_I)                  # native (B, 99) layout
    b = x2.shape[0]
    tb = min(TB_MAX, _round_up(b, 8))          # whole batch elements per tile
    bp = _round_up(b, tb)
    if bp != b:
        x2 = jnp.pad(x2, ((0, bp - b), (0, 0)))
    out = _fused_call(x2, prep, tb)            # (Bp, 128) lane-dense
    return out[:b, :1]                         # (B, 1)


# --------------------------------------------------------------------------
# References.
#  * reference_bf16: plain-JAX mirror of the kernel math (same prepped bf16
#    weights / casts) -> tight tolerance.
#  * reference_f32: PyTorch-faithful f32 NCHW convs -> loose tolerance
#    (difference == bf16 quantization only).
# --------------------------------------------------------------------------
def reference_bf16(x, prep):
    f32, bf16 = jnp.float32, jnp.bfloat16
    x2 = x.reshape(-1, DIM_I).astype(bf16)
    h0 = jax.nn.relu(jnp.dot(x2, prep["w0"], preferred_element_type=f32)
                     + prep["b0"])
    h1 = jax.nn.relu(jnp.dot(h0.astype(bf16), prep["w1"],
                             preferred_element_type=f32) + prep["b1"])
    h2 = jax.nn.relu(jnp.dot(h1.astype(bf16), prep["w2"],
                             preferred_element_type=f32) + prep["b2"])
    h3 = jax.nn.relu(jnp.dot(h2.astype(bf16), prep["wf1"],
                             preferred_element_type=f32) + prep["bf1"])
    return jnp.sum(h3 * prep["wf2"], axis=-1, keepdims=True) + prep["bf2"]


def reference_f32(x, p):
    hi = jax.lax.Precision.HIGHEST
    xr = x.reshape(-1, 11, 3, 3)
    h = jax.nn.relu(jax.lax.conv(xr, p["w_conv0"], (1, 1), "VALID", precision=hi)
                    + p["b_conv0"][None, :, None, None])
    h = jax.nn.relu(jax.lax.conv(h, p["w_conv1"], (1, 1), "VALID", precision=hi)
                    + p["b_conv1"][None, :, None, None])
    h = jax.nn.relu(jax.lax.conv(h, p["w_conv2"], (1, 1), "VALID", precision=hi)
                    + p["b_conv2"][None, :, None, None])
    h = h.reshape(-1, CHW2)
    h = jax.nn.relu(jnp.dot(h, p["w_fc1"].T, precision=hi) + p["b_fc1"])
    return jnp.dot(h, p["w_fc2"].T, precision=hi) + p["b_fc2"]


if __name__ == "__main__":
    key = jax.random.PRNGKey(0)
    kp, kx, kx2 = jax.random.split(key, 3)
    params = init_params(kp)
    prep = prep_params(params)          # one-time weight prep (not per forward)

    # Each row flattens to 11*3*3 = 99 features, as in the PyTorch module.
    x = jax.random.normal(kx, (2, 99), dtype=jnp.float32)

    out = jax.block_until_ready(forward(x, prep))
    assert out.shape == (2, 1), out.shape

    ref_q = jax.block_until_ready(reference_bf16(x, prep))
    ref_f = jax.block_until_ready(reference_f32(x, params))
    assert jnp.allclose(out, ref_q, atol=2e-3, rtol=2e-3), (out, ref_q)
    assert jnp.allclose(out, ref_f, atol=5e-2, rtol=5e-2), (out, ref_f)

    # Exercise the batch-tiled grid path (grid > 1) as well.
    xb = jax.random.normal(kx2, (600, 99), dtype=jnp.float32)
    out_b = jax.block_until_ready(forward(xb, prep))
    ref_b = jax.block_until_ready(reference_bf16(xb, prep))
    assert out_b.shape == (600, 1), out_b.shape
    assert jnp.allclose(out_b, ref_b, atol=2e-3, rtol=2e-3)

    print("KERNEL_OK")
</pallas_src>

<mosaic_0001>
module attributes {stable_mosaic.version = 11 : i64} {
  func.func @_fused_forward_kernel(%arg0: i32, %arg1: memref<8x99xf32, #tpu.memory_space<vmem>>, %arg2: memref<99x576xbf16, #tpu.memory_space<vmem>>, %arg3: memref<1x576xf32, #tpu.memory_space<vmem>>, %arg4: memref<576x1024xbf16, #tpu.memory_space<vmem>>, %arg5: memref<1x1024xf32, #tpu.memory_space<vmem>>, %arg6: memref<1024x512xbf16, #tpu.memory_space<vmem>>, %arg7: memref<1x512xf32, #tpu.memory_space<vmem>>, %arg8: memref<512x256xbf16, #tpu.memory_space<vmem>>, %arg9: memref<1x256xf32, #tpu.memory_space<vmem>>, %arg10: memref<1x256xf32, #tpu.memory_space<vmem>>, %arg11: memref<1x1xf32, #tpu.memory_space<vmem>>, %arg12: memref<8x128xf32, #tpu.memory_space<vmem>>) attributes {dimension_semantics = [#tpu.dimension_semantics<parallel>], iteration_bounds = array<i64: 1>, scalar_prefetch = 0 : i64, scratch_operands = 0 : i64, tpu.core_type = #tpu.core_type<tc>, window_params = [{transform_indices = @transform_0, window_bounds = array<i64: 8, 99>}, {pipeline_mode = #tpu.pipeline_mode<synchronous>, transform_indices = @transform_1, window_bounds = array<i64: 99, 576>}, {pipeline_mode = #tpu.pipeline_mode<synchronous>, transform_indices = @transform_2, window_bounds = array<i64: 1, 576>}, {pipeline_mode = #tpu.pipeline_mode<synchronous>, transform_indices = @transform_3, window_bounds = array<i64: 576, 1024>}, {pipeline_mode = #tpu.pipeline_mode<synchronous>, transform_indices = @transform_4, window_bounds = array<i64: 1, 1024>}, {pipeline_mode = #tpu.pipeline_mode<synchronous>, transform_indices = @transform_5, window_bounds = array<i64: 1024, 512>}, {pipeline_mode = #tpu.pipeline_mode<synchronous>, transform_indices = @transform_6, window_bounds = array<i64: 1, 512>}, {pipeline_mode = #tpu.pipeline_mode<synchronous>, transform_indices = @transform_7, window_bounds = array<i64: 512, 256>}, {pipeline_mode = #tpu.pipeline_mode<synchronous>, transform_indices = @transform_8, window_bounds = array<i64: 1, 256>}, {pipeline_mode = #tpu.pipeline_mode<synchronous>, transform_indices = @transform_9, window_bounds = array<i64: 1, 256>}, {pipeline_mode = #tpu.pipeline_mode<synchronous>, transform_indices = @transform_10, window_bounds = array<i64: 1, 1>}, {transform_indices = @transform_11, window_bounds = array<i64: 8, 128>}]} {
    %c0 = arith.constant 0 : index
    %c0_0 = arith.constant 0 : index
    %0 = vector.load %arg1[%c0, %c0_0] : memref<8x99xf32, #tpu.memory_space<vmem>>, vector<8x99xf32>
    %1 = arith.truncf %0 : vector<8x99xf32> to vector<8x99xbf16>
    %c0_1 = arith.constant 0 : index
    %c0_2 = arith.constant 0 : index
    %2 = vector.load %arg2[%c0_1, %c0_2] : memref<99x576xbf16, #tpu.memory_space<vmem>>, vector<99x576xbf16>
    %cst = arith.constant dense<0.000000e+00> : vector<8x576xf32>
    %3 = tpu.matmul %1, %2, %cst {dimension_numbers = #tpu.dot_dimension_numbers<[1], [0], [0], [1], [0, 0, 1, 1], [], []>} : vector<8x99xbf16>, vector<99x576xbf16>, vector<8x576xf32> -> vector<8x576xf32>
    %c0_3 = arith.constant 0 : index
    %c0_4 = arith.constant 0 : index
    %4 = vector.load %arg3[%c0_3, %c0_4] : memref<1x576xf32, #tpu.memory_space<vmem>>, vector<1x576xf32>
    %5 = vector.broadcast %4 : vector<1x576xf32> to vector<8x576xf32>
    %6 = arith.addf %3, %5 : vector<8x576xf32>
    %cst_5 = arith.constant 0.000000e+00 : f32
    %7 = vector.broadcast %cst_5 : f32 to vector<8x576xf32>
    %8 = arith.maximumf %6, %7 : vector<8x576xf32>
    %9 = arith.truncf %8 : vector<8x576xf32> to vector<8x576xbf16>
    %c0_6 = arith.constant 0 : index
    %c0_7 = arith.constant 0 : index
    %10 = vector.load %arg4[%c0_6, %c0_7] : memref<576x1024xbf16, #tpu.memory_space<vmem>>, vector<576x1024xbf16>
    %cst_8 = arith.constant dense<0.000000e+00> : vector<8x1024xf32>
    %11 = tpu.matmul %9, %10, %cst_8 {dimension_numbers = #tpu.dot_dimension_numbers<[1], [0], [0], [1], [0, 0, 1, 1], [], []>} : vector<8x576xbf16>, vector<576x1024xbf16>, vector<8x1024xf32> -> vector<8x1024xf32>
    %c0_9 = arith.constant 0 : index
    %c0_10 = arith.constant 0 : index
    %12 = vector.load %arg5[%c0_9, %c0_10] : memref<1x1024xf32, #tpu.memory_space<vmem>>, vector<1x1024xf32>
    %13 = vector.broadcast %12 : vector<1x1024xf32> to vector<8x1024xf32>
    %14 = arith.addf %11, %13 : vector<8x1024xf32>
    %cst_11 = arith.constant 0.000000e+00 : f32
    %15 = vector.broadcast %cst_11 : f32 to vector<8x1024xf32>
    %16 = arith.maximumf %14, %15 : vector<8x1024xf32>
    %17 = arith.truncf %16 : vector<8x1024xf32> to vector<8x1024xbf16>
    %c0_12 = arith.constant 0 : index
    %c0_13 = arith.constant 0 : index
    %18 = vector.load %arg6[%c0_12, %c0_13] : memref<1024x512xbf16, #tpu.memory_space<vmem>>, vector<1024x512xbf16>
    %cst_14 = arith.constant dense<0.000000e+00> : vector<8x512xf32>
    %19 = tpu.matmul %17, %18, %cst_14 {dimension_numbers = #tpu.dot_dimension_numbers<[1], [0], [0], [1], [0, 0, 1, 1], [], []>} : vector<8x1024xbf16>, vector<1024x512xbf16>, vector<8x512xf32> -> vector<8x512xf32>
    %c0_15 = arith.constant 0 : index
    %c0_16 = arith.constant 0 : index
    %20 = vector.load %arg7[%c0_15, %c0_16] : memref<1x512xf32, #tpu.memory_space<vmem>>, vector<1x512xf32>
    %21 = vector.broadcast %20 : vector<1x512xf32> to vector<8x512xf32>
    %22 = arith.addf %19, %21 : vector<8x512xf32>
    %cst_17 = arith.constant 0.000000e+00 : f32
    %23 = vector.broadcast %cst_17 : f32 to vector<8x512xf32>
    %24 = arith.maximumf %22, %23 : vector<8x512xf32>
    %25 = arith.truncf %24 : vector<8x512xf32> to vector<8x512xbf16>
    %c0_18 = arith.constant 0 : index
    %c0_19 = arith.constant 0 : index
    %26 = vector.load %arg8[%c0_18, %c0_19] : memref<512x256xbf16, #tpu.memory_space<vmem>>, vector<512x256xbf16>
    %cst_20 = arith.constant dense<0.000000e+00> : vector<8x256xf32>
    %27 = tpu.matmul %25, %26, %cst_20 {dimension_numbers = #tpu.dot_dimension_numbers<[1], [0], [0], [1], [0, 0, 1, 1], [], []>} : vector<8x512xbf16>, vector<512x256xbf16>, vector<8x256xf32> -> vector<8x256xf32>
    %c0_21 = arith.constant 0 : index
    %c0_22 = arith.constant 0 : index
    %28 = vector.load %arg9[%c0_21, %c0_22] : memref<1x256xf32, #tpu.memory_space<vmem>>, vector<1x256xf32>
    %29 = vector.broadcast %28 : vector<1x256xf32> to vector<8x256xf32>
    %30 = arith.addf %27, %29 : vector<8x256xf32>
    %cst_23 = arith.constant 0.000000e+00 : f32
    %31 = vector.broadcast %cst_23 : f32 to vector<8x256xf32>
    %32 = arith.maximumf %30, %31 : vector<8x256xf32>
    %c0_24 = arith.constant 0 : index
    %c0_25 = arith.constant 0 : index
    %33 = vector.load %arg10[%c0_24, %c0_25] : memref<1x256xf32, #tpu.memory_space<vmem>>, vector<1x256xf32>
    %34 = vector.broadcast %33 : vector<1x256xf32> to vector<8x256xf32>
    %35 = arith.mulf %32, %34 : vector<8x256xf32>
    %cst_26 = arith.constant dense<0.000000e+00> : vector<8xf32>
    %36 = vector.multi_reduction <add>, %35, %cst_26 [1] : vector<8x256xf32> to vector<8xf32>
    %37 = vector.shape_cast %36 : vector<8xf32> to vector<8x1xf32>
    %c0_27 = arith.constant 0 : index
    %c0_28 = arith.constant 0 : index
    %38 = vector.load %arg11[%c0_27, %c0_28] : memref<1x1xf32, #tpu.memory_space<vmem>>, vector<1x1xf32>
    %39 = vector.broadcast %38 : vector<1x1xf32> to vector<8x1xf32>
    %40 = arith.addf %37, %39 : vector<8x1xf32>
    %41 = vector.shape_cast %40 : vector<8x1xf32> to vector<8x1xf32>
    %42 = vector.broadcast %41 : vector<8x1xf32> to vector<8x128xf32>
    %c0_29 = arith.constant 0 : index
    %c0_30 = arith.constant 0 : index
    %43 = vector.load %arg12[%c0_29, %c0_30] : memref<8x128xf32, #tpu.memory_space<vmem>>, vector<8x128xf32>
    tpu.vector_store %arg12[%c0_29, %c0_30], %42 {strides = array<i32>} : memref<8x128xf32, #tpu.memory_space<vmem>>, vector<8x128xf32>,
    return
  }
  func.func @transform_0(%arg0: i32) -> (i32, i32) {
    %c0_i32 = arith.constant 0 : i32
    %c0_i32_0 = arith.constant 0 : i32
    return %arg0, %c0_i32 : i32, i32
  }
  func.func @transform_1(%arg0: i32) -> (i32, i32) {
    %c0_i32 = arith.constant 0 : i32
    %c0_i32_0 = arith.constant 0 : i32
    %c0_i32_1 = arith.constant 0 : i32
    return %c0_i32, %c0_i32_0 : i32, i32
  }
  func.func @transform_2(%arg0: i32) -> (i32, i32) {
    %c0_i32 = arith.constant 0 : i32
    %c0_i32_0 = arith.constant 0 : i32
    %c0_i32_1 = arith.constant 0 : i32
    return %c0_i32, %c0_i32_0 : i32, i32
  }
  func.func @transform_3(%arg0: i32) -> (i32, i32) {
    %c0_i32 = arith.constant 0 : i32
    %c0_i32_0 = arith.constant 0 : i32
    %c0_i32_1 = arith.constant 0 : i32
    return %c0_i32, %c0_i32_0 : i32, i32
  }
  func.func @transform_4(%arg0: i32) -> (i32, i32) {
    %c0_i32 = arith.constant 0 : i32
    %c0_i32_0 = arith.constant 0 : i32
    %c0_i32_1 = arith.constant 0 : i32
    return %c0_i32, %c0_i32_0 : i32, i32
  }
  func.func @transform_5(%arg0: i32) -> (i32, i32) {
    %c0_i32 = arith.constant 0 : i32
    %c0_i32_0 = arith.constant 0 : i32
    %c0_i32_1 = arith.constant 0 : i32
    return %c0_i32, %c0_i32_0 : i32, i32
  }
  func.func @transform_6(%arg0: i32) -> (i32, i32) {
    %c0_i32 = arith.constant 0 : i32
    %c0_i32_0 = arith.constant 0 : i32
    %c0_i32_1 = arith.constant 0 : i32
    return %c0_i32, %c0_i32_0 : i32, i32
  }
  func.func @transform_7(%arg0: i32) -> (i32, i32) {
    %c0_i32 = arith.constant 0 : i32
    %c0_i32_0 = arith.constant 0 : i32
    %c0_i32_1 = arith.constant 0 : i32
    return %c0_i32, %c0_i32_0 : i32, i32
  }
  func.func @transform_8(%arg0: i32) -> (i32, i32) {
    %c0_i32 = arith.constant 0 : i32
    %c0_i32_0 = arith.constant 0 : i32
    %c0_i32_1 = arith.constant 0 : i32
    return %c0_i32, %c0_i32_0 : i32, i32
  }
  func.func @transform_9(%arg0: i32) -> (i32, i32) {
    %c0_i32 = arith.constant 0 : i32
    %c0_i32_0 = arith.constant 0 : i32
    %c0_i32_1 = arith.constant 0 : i32
    return %c0_i32, %c0_i32_0 : i32, i32
  }
  func.func @transform_10(%arg0: i32) -> (i32, i32) {
    %c0_i32 = arith.constant 0 : i32
    %c0_i32_0 = arith.constant 0 : i32
    %c0_i32_1 = arith.constant 0 : i32
    return %c0_i32, %c0_i32_0 : i32, i32
  }
  func.func @transform_11(%arg0: i32) -> (i32, i32) {
    %c0_i32 = arith.constant 0 : i32
    %c0_i32_0 = arith.constant 0 : i32
    return %arg0, %c0_i32 : i32, i32
  }
}

</mosaic_0001>

<llo_original>
// kernel: forward.1
$region0: #{forward.1}
  #allocation0 [shape = 'u32[]', space=smem, size = 0x4, offset = 0x4, fixed_abs, tag = 'smem constant byte address 0x4 - core index']
  #allocation1 [shape = 'u32[144,128]{1,0:T(1,128)}', space=vmem, size = 0x12000, scoped, tag = 'internal scratch']
  #allocation2 [shape = 'f32[1,1]{1,0:T(1,128)S(1)}', space=vmem, size = 0x200, scoped, tag = 'scoped memory for forward.1']
  %s0 = inlined_call_operand.vmem [shape: f32[8,99], index: 0, kind: input, shape index: {}]
  %s1 = inlined_call_operand.hbm [shape: bf16[99,576], index: 1, kind: input, shape index: {}]
  %s2 = inlined_call_operand.hbm [shape: f32[1,576], index: 2, kind: input, shape index: {}]
  %s3 = inlined_call_operand.hbm [shape: bf16[576,1024], index: 3, kind: input, shape index: {}]
  %s4 = inlined_call_operand.hbm [shape: f32[1,1024], index: 4, kind: input, shape index: {}]
  %s5 = inlined_call_operand.hbm [shape: bf16[1024,512], index: 5, kind: input, shape index: {}]
  %s6 = inlined_call_operand.hbm [shape: f32[1,512], index: 6, kind: input, shape index: {}]
  %s7 = inlined_call_operand.hbm [shape: bf16[512,256], index: 7, kind: input, shape index: {}]
  %s8 = inlined_call_operand.hbm [shape: f32[1,256], index: 8, kind: input, shape index: {}]
  %s9 = inlined_call_operand.hbm [shape: f32[1,256], index: 9, kind: input, shape index: {}]
  %s10 = inlined_call_operand.<no memory space> [shape: f32[1,1], index: 10, kind: input, shape index: {}]
  %s11 = inlined_call_operand.vmem [shape: f32[8,128], index: 11, kind: output, shape index: {}]
  %s12 = sld [smem:[#allocation0]]
  $region90: #{forward.1} parent=0
    _
  %s14 = ssub.s32 1, %s12
  %s15 = scalar_select 0, %s14, %s12
  %v16 = vstv %s10
  %17 = vst [vmem:[#allocation2] sm:$0x1] %v16
  $region1: #{forward.1} parent=0
    #allocation3 [shape = 'u8[133120]{0}', space=vmem, size = 0x20800, scoped, tag = 'input window, operand 1, single buffered']
    #allocation4 [shape = 's32[1]{0}', space=sflag, size = 0x4, scoped, tag = 'scoped memory for forward.1']
    #allocation5 [shape = 'u8[2560]{0}', space=vmem, size = 0xc00, scoped, tag = 'input window, operand 2, single buffered']
    #allocation6 [shape = 's32[1]{0}', space=sflag, size = 0x4, scoped, tag = 'scoped memory for forward.1']
    #allocation7 [shape = 'u8[1179648]{0}', space=vmem, size = 0x120000, scoped, tag = 'input window, operand 3, single buffered']
    #allocation8 [shape = 'u8[4096]{0}', space=vmem, size = 0x1000, scoped, tag = 'input window, operand 4, single buffered']
    #allocation9 [shape = 's32[1]{0}', space=sflag, size = 0x4, scoped, tag = 'scoped memory for forward.1']
    #allocation10 [shape = 'u8[1048576]{0}', space=vmem, size = 0x100000, scoped, tag = 'input window, operand 5, single buffered']
    #allocation11 [shape = 'u8[2048]{0}', space=vmem, size = 0x800, scoped, tag = 'input window, operand 6, single buffered']
    #allocation12 [shape = 's32[1]{0}', space=sflag, size = 0x4, scoped, tag = 'scoped memory for forward.1']
    #allocation13 [shape = 'u8[262144]{0}', space=vmem, size = 0x40000, scoped, tag = 'input window, operand 7, single buffered']
    #allocation14 [shape = 'u8[1024]{0}', space=vmem, size = 0x400, scoped, tag = 'input window, operand 8, single buffered']
    #allocation15 [shape = 's32[1]{0}', space=sflag, size = 0x4, scoped, tag = 'scoped memory for forward.1']
    #allocation16 [shape = 'u8[1024]{0}', space=vmem, size = 0x400, scoped, tag = 'input window, operand 9, single buffered']
    %18 = vsyncpa [#allocation4], 0
    %19 = vsyncpa [#allocation6], 0
    %20 = vsyncpa [#allocation9], 0
    %21 = vsyncpa [#allocation12], 0
    %22 = vsyncpa [#allocation15], 0
    // Predicated region
    $region2: #{forward.1} parent=1 // pred_check
      _
    $region3: #{forward.1} parent=1 // pred_check_branch
      %24 = sbr.rel (0) target = $region5
    $region4: #{forward.1} parent=1 // pred_region
      _
    $region5: #{forward.1} parent=1 // pred_fallthru
      _
    // Predicated region
    $region6: #{forward.1} parent=1 // pred_check
      _
    $region7: #{forward.1} parent=1 // pred_check_branch
      %26 = sbr.rel (0) target = $region9
    $region8: #{forward.1} parent=1 // pred_region
      %s28 = ssub.s32 4160, 4160
      %29 = vsyncadd [#allocation4], %s28
      %s30 = sshll.u32 [#allocation3], 4
      %s31 = int_to_ptr.vmem [resolvable:$true] %s30
      %36 = dma.hbm_to_vmem [thread:$0]  %s1, 4160, %s31, [#allocation4], 320, 320, 20
    $region9: #{forward.1} parent=1 // pred_fallthru
      _
    // Predicated region
    $region10: #{forward.1} parent=1 // pred_check
      _
    $region11: #{forward.1} parent=1 // pred_check_branch
      %38 = sbr.rel (0) target = $region13
    $region12: #{forward.1} parent=1 // pred_region
      %s40 = ssub.s32 80, 80
      %41 = vsyncadd [#allocation6], %s40
      %s43 = sshll.u32 [#allocation5], 4
      %s44 = int_to_ptr.vmem [resolvable:$true] %s43
      %46 = dma.hbm_to_vmem [thread:$0]  %s2, 80, %s44, [#allocation6]
    $region13: #{forward.1} parent=1 // pred_fallthru
      _
    // Predicated region
    $region14: #{forward.1} parent=1 // pred_check
      _
    $region15: #{forward.1} parent=1 // pred_check_branch
      %48 = sbr.rel (0) target = $region17
    $region16: #{forward.1} parent=1 // pred_region
      %s50 = ssub.s32 36864, 36864
      %51 = vsyncadd [#allocation6], %s50
      %s52 = sshll.u32 [#allocation7], 4
      %s53 = int_to_ptr.vmem [resolvable:$true] %s52
      %58 = dma.hbm_to_vmem [thread:$0]  %s3, 36864, %s53, [#allocation6], 512, 512, 32
    $region17: #{forward.1} parent=1 // pred_fallthru
      _
    // Predicated region
    $region18: #{forward.1} parent=1 // pred_check
      _
    $region19: #{forward.1} parent=1 // pred_check_branch
      %60 = sbr.rel (0) target = $region21
    $region20: #{forward.1} parent=1 // pred_region
      %s62 = ssub.s32 128, 128
      %63 = vsyncadd [#allocation9], %s62
      %s65 = sshll.u32 [#allocation8], 4
      %s66 = int_to_ptr.vmem [resolvable:$true] %s65
      %68 = dma.hbm_to_vmem [thread:$0]  %s4, 128, %s66, [#allocation9]
    $region21: #{forward.1} parent=1 // pred_fallthru
      _
    // Predicated region
    $region22: #{forward.1} parent=1 // pred_check
      _
    $region23: #{forward.1} parent=1 // pred_check_branch
      %70 = sbr.rel (0) target = $region25
    $region24: #{forward.1} parent=1 // pred_region
      %s72 = ssub.s32 32768, 32768
      %73 = vsyncadd [#allocation9], %s72
      %s74 = sshll.u32 [#allocation10], 4
      %s75 = int_to_ptr.vmem [resolvable:$true] %s74
      %80 = dma.hbm_to_vmem [thread:$0]  %s5, 32768, %s75, [#allocation9], 256, 256, 16
    $region25: #{forward.1} parent=1 // pred_fallthru
      _
    // Predicated region
    $region26: #{forward.1} parent=1 // pred_check
      _
    $region27: #{forward.1} parent=1 // pred_check_branch
      %82 = sbr.rel (0) target = $region29
    $region28: #{forward.1} parent=1 // pred_region
      %s84 = ssub.s32 64, 64
      %85 = vsyncadd [#allocation12], %s84
      %s87 = sshll.u32 [#allocation11], 4
      %s88 = int_to_ptr.vmem [resolvable:$true] %s87
      %90 = dma.hbm_to_vmem [thread:$0]  %s6, 64, %s88, [#allocation12]
    $region29: #{forward.1} parent=1 // pred_fallthru
      _
    // Predicated region
    $region30: #{forward.1} parent=1 // pred_check
      _
    $region31: #{forward.1} parent=1 // pred_check_branch
      %92 = sbr.rel (0) target = $region33
    $region32: #{forward.1} parent=1 // pred_region
      %s94 = ssub.s32 8192, 8192
      %95 = vsyncadd [#allocation12], %s94
      %s96 = sshll.u32 [#allocation13], 4
      %s97 = int_to_ptr.vmem [resolvable:$true] %s96
      %102 = dma.hbm_to_vmem [thread:$0]  %s7, 8192, %s97, [#allocation12], 128, 128, 8
    $region33: #{forward.1} parent=1 // pred_fallthru
      _
    // Predicated region
    $region34: #{forward.1} parent=1 // pred_check
      _
    $region35: #{forward.1} parent=1 // pred_check_branch
      %104 = sbr.rel (0) target = $region37
    $region36: #{forward.1} parent=1 // pred_region
      %s106 = ssub.s32 32, 32
      %107 = vsyncadd [#allocation15], %s106
      %s109 = sshll.u32 [#allocation14], 4
      %s110 = int_to_ptr.vmem [resolvable:$true] %s109
      %112 = dma.hbm_to_vmem [thread:$0]  %s8, 32, %s110, [#allocation15]
    $region37: #{forward.1} parent=1 // pred_fallthru
      _
    // Predicated region
    $region38: #{forward.1} parent=1 // pred_check
      _
    $region39: #{forward.1} parent=1 // pred_check_branch
      %114 = sbr.rel (0) target = $region41
    $region40: #{forward.1} parent=1 // pred_region
      %s116 = ssub.s32 32, 32
      %117 = vsyncadd [#allocation15], %s116
      %s119 = sshll.u32 [#allocation16], 4
      %s120 = int_to_ptr.vmem [resolvable:$true] %s119
      %122 = dma.hbm_to_vmem [thread:$0]  %s9, 32, %s120, [#allocation15]
    $region41: #{forward.1} parent=1 // pred_fallthru
      _
    // Predicated region
    $region42: #{forward.1} parent=1 // pred_check
      _
    $region43: #{forward.1} parent=1 // pred_check_branch
      %124 = sbr.rel (0) target = $region45
    $region44: #{forward.1} parent=1 // pred_region
      _
    $region45: #{forward.1} parent=1 // pred_fallthru
      _
    // Predicated region
    $region46: #{forward.1} parent=1 // pred_check
      _
    $region47: #{forward.1} parent=1 // pred_check_branch
      %126 = sbr.rel (0) target = $region49
    $region48: #{forward.1} parent=1 // pred_region
      %127 = dma.done [#allocation4], 4160
    $region49: #{forward.1} parent=1 // pred_fallthru
      _
    // Predicated region
    $region50: #{forward.1} parent=1 // pred_check
      _
    $region51: #{forward.1} parent=1 // pred_check_branch
      %129 = sbr.rel (0) target = $region53
    $region52: #{forward.1} parent=1 // pred_region
      %130 = dma.done [#allocation6], 80
    $region53: #{forward.1} parent=1 // pred_fallthru
      _
    // Predicated region
    $region54: #{forward.1} parent=1 // pred_check
      _
    $region55: #{forward.1} parent=1 // pred_check_branch
      %132 = sbr.rel (0) target = $region57
    $region56: #{forward.1} parent=1 // pred_region
      %133 = dma.done [#allocation6], 36864
    $region57: #{forward.1} parent=1 // pred_fallthru
      _
    // Predicated region
    $region58: #{forward.1} parent=1 // pred_check
      _
    $region59: #{forward.1} parent=1 // pred_check_branch
      %135 = sbr.rel (0) target = $region61
    $region60: #{forward.1} parent=1 // pred_region
      %136 = dma.done [#allocation9], 128
    $region61: #{forward.1} parent=1 // pred_fallthru
      _
    // Predicated region
    $region62: #{forward.1} parent=1 // pred_check
      _
    $region63: #{forward.1} parent=1 // pred_check_branch
      %138 = sbr.rel (0) target = $region65
    $region64: #{forward.1} parent=1 // pred_region
      %139 = dma.done [#allocation9], 32768
    $region65: #{forward.1} parent=1 // pred_fallthru
      _
    // Predicated region
    $region66: #{forward.1} parent=1 // pred_check
      _
    $region67: #{forward.1} parent=1 // pred_check_branch
      %141 = sbr.rel (0) target = $region69
    $region68: #{forward.1} parent=1 // pred_region
      %142 = dma.done [#allocation12], 64
    $region69: #{forward.1} parent=1 // pred_fallthru
      _
    // Predicated region
    $region70: #{forward.1} parent=1 // pred_check
      _
    $region71: #{forward.1} parent=1 // pred_check_branch
      %144 = sbr.rel (0) target = $region73
    $region72: #{forward.1} parent=1 // pred_region
      %145 = dma.done [#allocation12], 8192
    $region73: #{forward.1} parent=1 // pred_fallthru
      _
    // Predicated region
    $region74: #{forward.1} parent=1 // pred_check
      _
    $region75: #{forward.1} parent=1 // pred_check_branch
      %147 = sbr.rel (0) target = $region77
    $region76: #{forward.1} parent=1 // pred_region
      %148 = dma.done [#allocation15], 32
    $region77: #{forward.1} parent=1 // pred_fallthru
      _
    // Predicated region
    $region78: #{forward.1} parent=1 // pred_check
      _
    $region79: #{forward.1} parent=1 // pred_check_branch
      %150 = sbr.rel (0) target = $region81
    $region80: #{forward.1} parent=1 // pred_region
      %151 = dma.done [#allocation15], 32
    $region81: #{forward.1} parent=1 // pred_fallthru
      _
    %v153 = vld [vmem:[%s0] sm:$0xff]
    %v154 = vpack.c.bf16 %v153, %v153
    %v155 = vld [vmem:[#allocation3] sm:$0xff]
    %v156 = vld [vmem:[#allocation3 + $0x8] sm:$0xff]
    %v157 = vld [vmem:[#allocation3 + $0x10] sm:$0xf]
    %v158 = vld [vmem:[#allocation3 + $0x14] sm:$0xff]
    %v159 = vld [vmem:[#allocation3 + $0x1c] sm:$0xff]
    %v160 = vld [vmem:[#allocation3 + $0x24] sm:$0xf]
    %v161 = vld [vmem:[#allocation3 + $0x28] sm:$0xff]
    %v162 = vld [vmem:[#allocation3 + $0x30] sm:$0xff]
    %v163 = vld [vmem:[#allocation3 + $0x38] sm:$0xf]
    %v164 = vld [vmem:[#allocation3 + $0x3c] sm:$0xff]
    %v165 = vld [vmem:[#allocation3 + $0x44] sm:$0xff]
    %v166 = vld [vmem:[#allocation3 + $0x4c] sm:$0xf]
    %v167 = vld [vmem:[#allocation3 + $0x50] sm:$0xff]
    %v168 = vld [vmem:[#allocation3 + $0x58] sm:$0xff]
    %v169 = vld [vmem:[#allocation3 + $0x60] sm:$0xf]
    %v170 = vld [vmem:[#allocation3 + $0x64] sm:$0xff]
    %v171 = vld [vmem:[#allocation3 + $0x6c] sm:$0xff]
    %v172 = vld [vmem:[#allocation3 + $0x74] sm:$0xf]
    %v173 = vld [vmem:[#allocation3 + $0x78] sm:$0xff]
    %v174 = vld [vmem:[#allocation3 + $0x80] sm:$0xff]
    %v175 = vld [vmem:[#allocation3 + $0x88] sm:$0xf]
    %v176 = vld [vmem:[#allocation3 + $0x8c] sm:$0xff]
    %v177 = vld [vmem:[#allocation3 + $0x94] sm:$0xff]
    %v178 = vld [vmem:[#allocation3 + $0x9c] sm:$0xf]
    %v179 = vld [vmem:[#allocation3 + $0xa0] sm:$0xff]
    %v180 = vld [vmem:[#allocation3 + $0xa8] sm:$0xff]
    %v181 = vld [vmem:[#allocation3 + $0xb0] sm:$0xf]
    %v182 = vld [vmem:[#allocation3 + $0xb4] sm:$0xff]
    %v183 = vld [vmem:[#allocation3 + $0xbc] sm:$0xff]
    %v184 = vld [vmem:[#allocation3 + $0xc4] sm:$0xf]
    %v185 = vld [vmem:[#allocation3 + $0xc8] sm:$0xff]
    %v186 = vld [vmem:[#allocation3 + $0xd0] sm:$0xff]
    %v187 = vld [vmem:[#allocation3 + $0xd8] sm:$0xf]
    %v188 = vld [vmem:[#allocation3 + $0xdc] sm:$0xff]
    %v189 = vld [vmem:[#allocation3 + $0xe4] sm:$0xff]
    %v190 = vld [vmem:[#allocation3 + $0xec] sm:$0xf]
    %v191 = vld [vmem:[#allocation3 + $0xf0] sm:$0x33]
    %v192 = vld [vmem:[#allocation3 + $0xf8] sm:$0x33]
    %v193 = vld [vmem:[#allocation3 + $0x100] sm:$0x3]
    %v194 = vld [vmem:[#allocation5] sm:$0x1f]
    %v196 = vlaneseq
    %v197 = vshrl.u32 %v196, 7
    %v198 = vsub.s32 0, %v197
    %v199 = vrot.slane %v194, %v198
    %v200 = vlaneseq
    %v201 = vshrl.u32 %v200, 7
    %v202 = vsub.s32 1, %v201
    %v203 = vrot.slane %v194, %v202
    %v204 = vlaneseq
    %v205 = vshrl.u32 %v204, 7
    %v206 = vsub.s32 2, %v205
    %v207 = vrot.slane %v194, %v206
    %v208 = vlaneseq
    %v209 = vshrl.u32 %v208, 7
    %v210 = vsub.s32 3, %v209
    %v211 = vrot.slane %v194, %v210
    %v212 = vlaneseq
    %v213 = vshrl.u32 %v212, 7
    %v214 = vsub.s32 4, %v213
    %v215 = vrot.slane %v194, %v214
    %v260 = vunpack.c.l.b16 %v155
    %v261 = vunpack.c.h.b16 %v155
    %v262 = vunpack.c.l.b16 %v156
    %v263 = vunpack.c.h.b16 %v156
    %v264 = vunpack.c.l.b16 %v157
    %v265 = vunpack.c.l.b16 %v158
    %v266 = vunpack.c.h.b16 %v158
    %v267 = vunpack.c.l.b16 %v159
    %v268 = vunpack.c.h.b16 %v159
    %v269 = vunpack.c.l.b16 %v160
    %v270 = vunpack.c.l.b16 %v161
    %v271 = vunpack.c.h.b16 %v161
    %v272 = vunpack.c.l.b16 %v162
    %v273 = vunpack.c.h.b16 %v162
    %v274 = vunpack.c.l.b16 %v163
    %v275 = vunpack.c.l.b16 %v164
    %v276 = vunpack.c.h.b16 %v164
    %v277 = vunpack.c.l.b16 %v165
    %v278 = vunpack.c.h.b16 %v165
    %v279 = vunpack.c.l.b16 %v166
    %v280 = vunpack.c.l.b16 %v167
    %v281 = vunpack.c.h.b16 %v167
    %v282 = vunpack.c.l.b16 %v168
    %v283 = vunpack.c.h.b16 %v168
    %v284 = vunpack.c.l.b16 %v169
    %v285 = vunpack.c.l.b16 %v170
    %v286 = vunpack.c.h.b16 %v170
    %v287 = vunpack.c.l.b16 %v171
    %v288 = vunpack.c.h.b16 %v171
    %v289 = vunpack.c.l.b16 %v172
    %v290 = vunpack.c.l.b16 %v173
    %v291 = vunpack.c.h.b16 %v173
    %v292 = vunpack.c.l.b16 %v174
    %v293 = vunpack.c.h.b16 %v174
    %v294 = vunpack.c.l.b16 %v175
    %v295 = vunpack.c.l.b16 %v176
    %v296 = vunpack.c.h.b16 %v176
    %v297 = vunpack.c.l.b16 %v177
    %v298 = vunpack.c.h.b16 %v177
    %v299 = vunpack.c.l.b16 %v178
    %v300 = vunpack.c.l.b16 %v179
    %v301 = vunpack.c.h.b16 %v179
    %v302 = vunpack.c.l.b16 %v180
    %v303 = vunpack.c.h.b16 %v180
    %v304 = vunpack.c.l.b16 %v181
    %v305 = vunpack.c.l.b16 %v182
    %v306 = vunpack.c.h.b16 %v182
    %v307 = vunpack.c.l.b16 %v183
    %v308 = vunpack.c.h.b16 %v183
    %v309 = vunpack.c.l.b16 %v184
    %v310 = vunpack.c.l.b16 %v185
    %v311 = vunpack.c.h.b16 %v185
    %v312 = vunpack.c.l.b16 %v186
    %v313 = vunpack.c.h.b16 %v186
    %v314 = vunpack.c.l.b16 %v187
    %v315 = vunpack.c.l.b16 %v188
    %v316 = vunpack.c.h.b16 %v188
    %v317 = vunpack.c.l.b16 %v189
    %v318 = vunpack.c.h.b16 %v189
    %v319 = vunpack.c.l.b16 %v190
    %v320 = vunpack.c.l.b16 %v191
    %v321 = vunpack.c.h.b16 %v191
    %v322 = vunpack.c.l.b16 %v192
    %v323 = vunpack.c.h.b16 %v192
    %v324 = vunpack.c.l.b16 %v193
    %v325 = vpack.c.b16 %v265, %v260
    %v326 = vpack.c.b16 %v266, %v261
    %v327 = vpack.c.b16 %v267, %v262
    %v328 = vpack.c.b16 %v268, %v263
    %v329 = vpack.c.b16 %v269, %v264
    %v330 = vpack.c.b16 %v275, %v270
    %v331 = vpack.c.b16 %v276, %v271
    %v332 = vpack.c.b16 %v277, %v272
    %v333 = vpack.c.b16 %v278, %v273
    %v334 = vpack.c.b16 %v279, %v274
    %v335 = vpack.c.b16 %v285, %v280
    %v336 = vpack.c.b16 %v286, %v281
    %v337 = vpack.c.b16 %v287, %v282
    %v338 = vpack.c.b16 %v288, %v283
    %v339 = vpack.c.b16 %v289, %v284
    %v340 = vpack.c.b16 %v295, %v290
    %v341 = vpack.c.b16 %v296, %v291
    %v342 = vpack.c.b16 %v297, %v292
    %v343 = vpack.c.b16 %v298, %v293
    %v344 = vpack.c.b16 %v299, %v294
    %v345 = vpack.c.b16 %v305, %v300
    %v346 = vpack.c.b16 %v306, %v301
    %v347 = vpack.c.b16 %v307, %v302
    %v348 = vpack.c.b16 %v308, %v303
    %v349 = vpack.c.b16 %v309, %v304
    %v350 = vpack.c.b16 %v315, %v310
    %v351 = vpack.c.b16 %v316, %v311
    %v352 = vpack.c.b16 %v317, %v312
    %v353 = vpack.c.b16 %v318, %v313
    %v354 = vpack.c.b16 %v319, %v314
    %v355 = vpack.c.b16 %v320, %v320
    %v356 = vpack.c.b16 %v321, %v321
    %v357 = vpack.c.b16 %v322, %v322
    %v358 = vpack.c.b16 %v323, %v323
    %v359 = vpack.c.b16 %v324, %v324
    %vm390 = vcmask 809984
    %v392 = vsel %vm390, %v154, 0
    %vm394 = vcmask 1040384
    %vm395 = vcmask 1041408
    %v396 = vsel %vm394, 4294967295, 65535
    %v397 = vsel %vm395, %v396, 0
    %v399 = vand.u32 %v355, %v397
    %v402 = vand.u32 %v356, %v397
    %v405 = vand.u32 %v357, %v397
    %v408 = vand.u32 %v358, %v397
    %v411 = vand.u32 %v359, %v397
    %413 = vmatprep.subr.bf16.mxu0 %v326
    %414 = vmatpush1.bf16.msra.mxu0 %v325
    %415 = vmatprep.subr.bf16.mxu0 %v331
    %416 = vmatpush1.bf16.msra.mxu0 %v330
    %417 = vmatprep.subr.bf16.mxu0 %v336
    %418 = vmatpush1.bf16.msra.mxu0 %v335
    %419 = vmatprep.subr.bf16.mxu0 %v341
    %420 = vmatpush1.bf16.msra.mxu0 %v340
    %421 = vmatprep.subr.bf16.mxu0 %v346
    %422 = vmatpush1.bf16.msra.mxu0 %v345
    %423 = vmatprep.subr.bf16.mxu0 %v351
    %424 = vmatpush1.bf16.msra.mxu0 %v350
    %425 = vmatprep.subr.bf16.mxu0 %v402
    %426 = vmatpush1.bf16.msra.mxu0 %v399
    %427 = vmatprep.subr.bf16.mxu0 0
    %428 = vmatpush1.bf16.msra.mxu0 0
    %429 = vmatprep.subr.bf16.mxu0 0
    %430 = vmatpush1.bf16.msra.mxu0 0
    %431 = vmatprep.subr.bf16.mxu0 0
    %432 = vmatpush1.bf16.msra.mxu0 0
    %433 = vmatprep.subr.bf16.mxu0 0
    %434 = vmatpush1.bf16.msra.mxu0 0
    %435 = vmatprep.subr.bf16.mxu0 0
    %436 = vmatpush1.bf16.msra.mxu0 0
    %437 = vmatprep.subr.bf16.mxu0 0
    %438 = vmatpush1.bf16.msra.mxu0 0
    %439 = vmatprep.subr.bf16.mxu0 0
    %440 = vmatpush1.bf16.msra.mxu0 0
    %441 = vmatprep.subr.bf16.mxu0 0
    %442 = vmatpush1.bf16.msra.mxu0 0
    %443 = vmatprep.subr.bf16.mxu0 0
    %444 = vmatpush1.bf16.msra.mxu0 0
    %445 = vmatprep.mubr.bf16.mxu0 0
    %446 = vmatmul.mubr.bf16.gmra.mrb[0].mxu0 %v392
    %v447 = vpop.f32.mrb[0].mxu0
    %v448 = vadd.f32 %v199, %v447
    %v449 = vpop.f32.mrb[0].mxu0
    %v450 = vadd.f32 %v203, %v449
    %v451 = vpop.f32.mrb[0].mxu0
    %v452 = vpop.f32.mrb[0].mxu0
    %453 = vdwg.mxu0
    %454 = vmatprep.subr.bf16.mxu0 %v328
    %455 = vmatpush1.bf16.msra.mxu0 %v327
    %456 = vmatprep.subr.bf16.mxu0 %v333
    %457 = vmatpush1.bf16.msra.mxu0 %v332
    %458 = vmatprep.subr.bf16.mxu0 %v338
    %459 = vmatpush1.bf16.msra.mxu0 %v337
    %460 = vmatprep.subr.bf16.mxu0 %v343
    %461 = vmatpush1.bf16.msra.mxu0 %v342
    %462 = vmatprep.subr.bf16.mxu0 %v348
    %463 = vmatpush1.bf16.msra.mxu0 %v347
    %464 = vmatprep.subr.bf16.mxu0 %v353
    %465 = vmatpush1.bf16.msra.mxu0 %v352
    %466 = vmatprep.subr.bf16.mxu0 %v408
    %467 = vmatpush1.bf16.msra.mxu0 %v405
    %468 = vmatprep.subr.bf16.mxu0 0
    %469 = vmatpush1.bf16.msra.mxu0 0
    %470 = vmatprep.subr.bf16.mxu0 0
    %471 = vmatpush1.bf16.msra.mxu0 0
    %472 = vmatprep.subr.bf16.mxu0 0
    %473 = vmatpush1.bf16.msra.mxu0 0
    %474 = vmatprep.subr.bf16.mxu0 0
    %475 = vmatpush1.bf16.msra.mxu0 0
    %476 = vmatprep.subr.bf16.mxu0 0
    %477 = vmatpush1.bf16.msra.mxu0 0
    %478 = vmatprep.subr.bf16.mxu0 0
    %479 = vmatpush1.bf16.msra.mxu0 0
    %480 = vmatprep.subr.bf16.mxu0 0
    %481 = vmatpush1.bf16.msra.mxu0 0
    %482 = vmatprep.subr.bf16.mxu0 0
    %483 = vmatpush1.bf16.msra.mxu0 0
    %484 = vmatprep.subr.bf16.mxu0 0
    %485 = vmatpush1.bf16.msra.mxu0 0
    %486 = vmatprep.mubr.bf16.mxu0 0
    %487 = vmatmul.mubr.bf16.gmra.mrb[0].mxu0 %v392
    %v488 = vpop.f32.mrb[0].mxu0
    %v489 = vadd.f32 %v207, %v488
    %v490 = vpop.f32.mrb[0].mxu0
    %v491 = vadd.f32 %v211, %v490
    %v492 = vpop.f32.mrb[0].mxu0
    %v493 = vpop.f32.mrb[0].mxu0
    %494 = vdwg.mxu0
    %495 = vmatprep.subr.bf16.mxu0 0
    %496 = vmatpush1.bf16.msra.mxu0 %v329
    %497 = vmatprep.subr.bf16.mxu0 0
    %498 = vmatpush1.bf16.msra.mxu0 %v334
    %499 = vmatprep.subr.bf16.mxu0 0
    %500 = vmatpush1.bf16.msra.mxu0 %v339
    %501 = vmatprep.subr.bf16.mxu0 0
    %502 = vmatpush1.bf16.msra.mxu0 %v344
    %503 = vmatprep.subr.bf16.mxu0 0
    %504 = vmatpush1.bf16.msra.mxu0 %v349
    %505 = vmatprep.subr.bf16.mxu0 0
    %506 = vmatpush1.bf16.msra.mxu0 %v354
    %507 = vmatprep.subr.bf16.mxu0 0
    %508 = vmatpush1.bf16.msra.mxu0 %v411
    %509 = vmatprep.subr.bf16.mxu0 0
    %510 = vmatpush1.bf16.msra.mxu0 0
    %511 = vmatprep.subr.bf16.mxu0 0
    %512 = vmatpush1.bf16.msra.mxu0 0
    %513 = vmatprep.subr.bf16.mxu0 0
    %514 = vmatpush1.bf16.msra.mxu0 0
    %515 = vmatprep.subr.bf16.mxu0 0
    %516 = vmatpush1.bf16.msra.mxu0 0
    %517 = vmatprep.subr.bf16.mxu0 0
    %518 = vmatpush1.bf16.msra.mxu0 0
    %519 = vmatprep.subr.bf16.mxu0 0
    %520 = vmatpush1.bf16.msra.mxu0 0
    %521 = vmatprep.subr.bf16.mxu0 0
    %522 = vmatpush1.bf16.msra.mxu0 0
    %523 = vmatprep.subr.bf16.mxu0 0
    %524 = vmatpush1.bf16.msra.mxu0 0
    %525 = vmatprep.subr.bf16.mxu0 0
    %526 = vmatpush1.bf16.msra.mxu0 0
    %527 = vmatprep.mubr.bf16.mxu0 0
    %528 = vmatmul.mubr.bf16.gmra.mrb[0].mxu0 %v392
    %v529 = vpop.f32.mrb[0].mxu0
    %v530 = vadd.f32 %v215, %v529
    %v531 = vpop.f32.mrb[0].mxu0
    %v532 = vpop.f32.mrb[0].mxu0
    %v533 = vpop.f32.mrb[0].mxu0
    %534 = vdwg.mxu0
    %v535 = vmax.f32 %v448, 0.0
    %v536 = vmax.f32 %v450, 0.0
    %v537 = vmax.f32 %v489, 0.0
    %v538 = vmax.f32 %v491, 0.0
    %v539 = vmax.f32 %v530, 0.0
    %v540 = vpack.c.bf16 %v535, %v535
    %v541 = vpack.c.bf16 %v536, %v536
    %v542 = vpack.c.bf16 %v537, %v537
    %v543 = vpack.c.bf16 %v538, %v538
    %v544 = vpack.c.bf16 %v539, %v539
    %v545 = vld [vmem:[#allocation7] sm:$0xff]
    %v546 = vld [vmem:[#allocation7 + $0x8] sm:$0xff]
    %v547 = vld [vmem:[#allocation7 + $0x10] sm:$0xff]
    %v548 = vld [vmem:[#allocation7 + $0x18] sm:$0xff]
    %v549 = vld [vmem:[#allocation7 + $0x20] sm:$0xff]
    %v550 = vld [vmem:[#allocation7 + $0x28] sm:$0xff]
    %v551 = vld [vmem:[#allocation7 + $0x30] sm:$0xff]
    %v552 = vld [vmem:[#allocation7 + $0x38] sm:$0xff]
    %v553 = vld [vmem:[#allocation7 + $0x40] sm:$0xff]
    %v554 = vld [vmem:[#allocation7 + $0x48] sm:$0xff]
    %v555 = vld [vmem:[#allocation7 + $0x50] sm:$0xff]
    %v556 = vld [vmem:[#allocation7 + $0x58] sm:$0xff]
    %v557 = vld [vmem:[#allocation7 + $0x60] sm:$0xff]
    %v558 = vld [vmem:[#allocation7 + $0x68] sm:$0xff]
    %v559 = vld [vmem:[#allocation7 + $0x70] sm:$0xff]
    %v560 = vld [vmem:[#allocation7 + $0x78] sm:$0xff]
    %v561 = vld [vmem:[#allocation7 + $0x80] sm:$0xff]
    %v562 = vld [vmem:[#allocation7 + $0x88] sm:$0xff]
    %v563 = vld [vmem:[#allocation7 + $0x90] sm:$0xff]
    %v564 = vld [vmem:[#allocation7 + $0x98] sm:$0xff]
    %v565 = vld [vmem:[#allocation7 + $0xa0] sm:$0xff]
    %v566 = vld [vmem:[#allocation7 + $0xa8] sm:$0xff]
    %v567 = vld [vmem:[#allocation7 + $0xb0] sm:$0xff]
    %v568 = vld [vmem:[#allocation7 + $0xb8] sm:$0xff]
    %v569 = vld [vmem:[#allocation7 + $0xc0] sm:$0xff]
    %v570 = vld [vmem:[#allocation7 + $0xc8] sm:$0xff]
    %v571 = vld [vmem:[#allocation7 + $0xd0] sm:$0xff]
    %v572 = vld [vmem:[#allocation7 + $0xd8] sm:$0xff]
    %v573 = vld [vmem:[#allocation7 + $0xe0] sm:$0xff]
    %v574 = vld [vmem:[#allocation7 + $0xe8] sm:$0xff]
    %v575 = vld [vmem:[#allocation7 + $0xf0] sm:$0xff]
    %v576 = vld [vmem:[#allocation7 + $0xf8] sm:$0xff]
    %v577 = vld [vmem:[#allocation7 + $0x100] sm:$0xff]
    %v578 = vld [vmem:[#allocation7 + $0x108] sm:$0xff]
    %v579 = vld [vmem:[#allocation7 + $0x110] sm:$0xff]
    %v580 = vld [vmem:[#allocation7 + $0x118] sm:$0xff]
    %v581 = vld [vmem:[#allocation7 + $0x120] sm:$0xff]
    %v582 = vld [vmem:[#allocation7 + $0x128] sm:$0xff]
    %v583 = vld [vmem:[#allocation7 + $0x130] sm:$0xff]
    %v584 = vld [vmem:[#allocation7 + $0x138] sm:$0xff]
    %v585 = vld [vmem:[#allocation7 + $0x140] sm:$0xff]
    %v586 = vld [vmem:[#allocation7 + $0x148] sm:$0xff]
    %v587 = vld [vmem:[#allocation7 + $0x150] sm:$0xff]
    %v588 = vld [vmem:[#allocation7 + $0x158] sm:$0xff]
    %v589 = vld [vmem:[#allocation7 + $0x160] sm:$0xff]
    %v590 = vld [vmem:[#allocation7 + $0x168] sm:$0xff]
    %v591 = vld [vmem:[#allocation7 + $0x170] sm:$0xff]
    %v592 = vld [vmem:[#allocation7 + $0x178] sm:$0xff]
    %v593 = vld [vmem:[#allocation7 + $0x180] sm:$0xff]
    %v594 = vld [vmem:[#allocation7 + $0x188] sm:$0xff]
    %v595 = vld [vmem:[#allocation7 + $0x190] sm:$0xff]
    %v596 = vld [vmem:[#allocation7 + $0x198] sm:$0xff]
    %v597 = vld [vmem:[#allocation7 + $0x1a0] sm:$0xff]
    %v598 = vld [vmem:[#allocation7 + $0x1a8] sm:$0xff]
    %v599 = vld [vmem:[#allocation7 + $0x1b0] sm:$0xff]
    %v600 = vld [vmem:[#allocation7 + $0x1b8] sm:$0xff]
    %v601 = vld [vmem:[#allocation7 + $0x1c0] sm:$0xff]
    %v602 = vld [vmem:[#allocation7 + $0x1c8] sm:$0xff]
    %v603 = vld [vmem:[#allocation7 + $0x1d0] sm:$0xff]
    %v604 = vld [vmem:[#allocation7 + $0x1d8] sm:$0xff]
    %v605 = vld [vmem:[#allocation7 + $0x1e0] sm:$0xff]
    %v606 = vld [vmem:[#allocation7 + $0x1e8] sm:$0xff]
    %v607 = vld [vmem:[#allocation7 + $0x1f0] sm:$0xff]
    %v608 = vld [vmem:[#allocation7 + $0x1f8] sm:$0xff]
    %v609 = vld [vmem:[#allocation7 + $0x200] sm:$0xff]
    %v610 = vld [vmem:[#allocation7 + $0x208] sm:$0xff]
    %v611 = vld [vmem:[#allocation7 + $0x210] sm:$0xff]
    %v612 = vld [vmem:[#allocation7 + $0x218] sm:$0xff]
    %v613 = vld [vmem:[#allocation7 + $0x220] sm:$0xff]
    %v614 = vld [vmem:[#allocation7 + $0x228] sm:$0xff]
    %v615 = vld [vmem:[#allocation7 + $0x230] sm:$0xff]
    %v616 = vld [vmem:[#allocation7 + $0x238] sm:$0xff]
    %v617 = vld [vmem:[#allocation7 + $0x240] sm:$0xff]
    %v618 = vld [vmem:[#allocation7 + $0x248] sm:$0xff]
    %v619 = vld [vmem:[#allocation7 + $0x250] sm:$0xff]
    %v620 = vld [vmem:[#allocation7 + $0x258] sm:$0xff]
    %v621 = vld [vmem:[#allocation7 + $0x260] sm:$0xff]
    %v622 = vld [vmem:[#allocation7 + $0x268] sm:$0xff]
    %v623 = vld [vmem:[#allocation7 + $0x270] sm:$0xff]
    %v624 = vld [vmem:[#allocation7 + $0x278] sm:$0xff]
    %v625 = vld [vmem:[#allocation7 + $0x280] sm:$0xff]
    %v626 = vld [vmem:[#allocation7 + $0x288] sm:$0xff]
    %v627 = vld [vmem:[#allocation7 + $0x290] sm:$0xff]
    %v628 = vld [vmem:[#allocation7 + $0x298] sm:$0xff]
    %v629 = vld [vmem:[#allocation7 + $0x2a0] sm:$0xff]
    %v630 = vld [vmem:[#allocation7 + $0x2a8] sm:$0xff]
    %v631 = vld [vmem:[#allocation7 + $0x2b0] sm:$0xff]
    %v632 = vld [vmem:[#allocation7 + $0x2b8] sm:$0xff]
    %v633 = vld [vmem:[#allocation7 + $0x2c0] sm:$0xff]
    %v634 = vld [vmem:[#allocation7 + $0x2c8] sm:$0xff]
    %v635 = vld [vmem:[#allocation7 + $0x2d0] sm:$0xff]
    %v636 = vld [vmem:[#allocation7 + $0x2d8] sm:$0xff]
    %v637 = vld [vmem:[#allocation7 + $0x2e0] sm:$0xff]
    %v638 = vld [vmem:[#allocation7 + $0x2e8] sm:$0xff]
    %v639 = vld [vmem:[#allocation7 + $0x2f0] sm:$0xff]
    %v640 = vld [vmem:[#allocation7 + $0x2f8] sm:$0xff]
    %v641 = vld [vmem:[#allocation7 + $0x300] sm:$0xff]
    %v642 = vld [vmem:[#allocation7 + $0x308] sm:$0xff]
    %v643 = vld [vmem:[#allocation7 + $0x310] sm:$0xff]
    %v644 = vld [vmem:[#allocation7 + $0x318] sm:$0xff]
    %v645 = vld [vmem:[#allocation7 + $0x320] sm:$0xff]
    %v646 = vld [vmem:[#allocation7 + $0x328] sm:$0xff]
    %v647 = vld [vmem:[#allocation7 + $0x330] sm:$0xff]
    %v648 = vld [vmem:[#allocation7 + $0x338] sm:$0xff]
    %v649 = vld [vmem:[#allocation7 + $0x340] sm:$0xff]
    %v650 = vld [vmem:[#allocation7 + $0x348] sm:$0xff]
    %v651 = vld [vmem:[#allocation7 + $0x350] sm:$0xff]
    %v652 = vld [vmem:[#allocation7 + $0x358] sm:$0xff]
    %v653 = vld [vmem:[#allocation7 + $0x360] sm:$0xff]
    %v654 = vld [vmem:[#allocation7 + $0x368] sm:$0xff]
    %v655 = vld [vmem:[#allocation7 + $0x370] sm:$0xff]
    %v656 = vld [vmem:[#allocation7 + $0x378] sm:$0xff]
    %v657 = vld [vmem:[#allocation7 + $0x380] sm:$0xff]
    %v658 = vld [vmem:[#allocation7 + $0x388] sm:$0xff]
    %v659 = vld [vmem:[#allocation7 + $0x390] sm:$0xff]
    %v660 = vld [vmem:[#allocation7 + $0x398] sm:$0xff]
    %v661 = vld [vmem:[#allocation7 + $0x3a0] sm:$0xff]
    %v662 = vld [vmem:[#allocation7 + $0x3a8] sm:$0xff]
    %v663 = vld [vmem:[#allocation7 + $0x3b0] sm:$0xff]
    %v664 = vld [vmem:[#allocation7 + $0x3b8] sm:$0xff]
    %v665 = vld [vmem:[#allocation7 + $0x3c0] sm:$0xff]
    %v666 = vld [vmem:[#allocation7 + $0x3c8] sm:$0xff]
    %v667 = vld [vmem:[#allocation7 + $0x3d0] sm:$0xff]
    %v668 = vld [vmem:[#allocation7 + $0x3d8] sm:$0xff]
    %v669 = vld [vmem:[#allocation7 + $0x3e0] sm:$0xff]
    %v670 = vld [vmem:[#allocation7 + $0x3e8] sm:$0xff]
    %v671 = vld [vmem:[#allocation7 + $0x3f0] sm:$0xff]
    %v672 = vld [vmem:[#allocation7 + $0x3f8] sm:$0xff]
    %v673 = vld [vmem:[#allocation7 + $0x400] sm:$0xff]
    %v674 = vld [vmem:[#allocation7 + $0x408] sm:$0xff]
    %v675 = vld [vmem:[#allocation7 + $0x410] sm:$0xff]
    %v676 = vld [vmem:[#allocation7 + $0x418] sm:$0xff]
    %v677 = vld [vmem:[#allocation7 + $0x420] sm:$0xff]
    %v678 = vld [vmem:[#allocation7 + $0x428] sm:$0xff]
    %v679 = vld [vmem:[#allocation7 + $0x430] sm:$0xff]
    %v680 = vld [vmem:[#allocation7 + $0x438] sm:$0xff]
    %v681 = vld [vmem:[#allocation7 + $0x440] sm:$0xff]
    %v682 = vld [vmem:[#allocation7 + $0x448] sm:$0xff]
    %v683 = vld [vmem:[#allocation7 + $0x450] sm:$0xff]
    %v684 = vld [vmem:[#allocation7 + $0x458] sm:$0xff]
    %v685 = vld [vmem:[#allocation7 + $0x460] sm:$0xff]
    %v686 = vld [vmem:[#allocation7 + $0x468] sm:$0xff]
    %v687 = vld [vmem:[#allocation7 + $0x470] sm:$0xff]
    %v688 = vld [vmem:[#allocation7 + $0x478] sm:$0xff]
    %v689 = vld [vmem:[#allocation7 + $0x480] sm:$0xff]
    %v690 = vld [vmem:[#allocation7 + $0x488] sm:$0xff]
    %v691 = vld [vmem:[#allocation7 + $0x490] sm:$0xff]
    %v692 = vld [vmem:[#allocation7 + $0x498] sm:$0xff]
    %v693 = vld [vmem:[#allocation7 + $0x4a0] sm:$0xff]
    %v694 = vld [vmem:[#allocation7 + $0x4a8] sm:$0xff]
    %v695 = vld [vmem:[#allocation7 + $0x4b0] sm:$0xff]
    %v696 = vld [vmem:[#allocation7 + $0x4b8] sm:$0xff]
    %v697 = vld [vmem:[#allocation7 + $0x4c0] sm:$0xff]
    %v698 = vld [vmem:[#allocation7 + $0x4c8] sm:$0xff]
    %v699 = vld [vmem:[#allocation7 + $0x4d0] sm:$0xff]
    %v700 = vld [vmem:[#allocation7 + $0x4d8] sm:$0xff]
    %v701 = vld [vmem:[#allocation7 + $0x4e0] sm:$0xff]
    %v702 = vld [vmem:[#allocation7 + $0x4e8] sm:$0xff]
    %v703 = vld [vmem:[#allocation7 + $0x4f0] sm:$0xff]
    %v704 = vld [vmem:[#allocation7 + $0x4f8] sm:$0xff]
    %v705 = vld [vmem:[#allocation7 + $0x500] sm:$0xff]
    %v706 = vld [vmem:[#allocation7 + $0x508] sm:$0xff]
    %v707 = vld [vmem:[#allocation7 + $0x510] sm:$0xff]
    %v708 = vld [vmem:[#allocation7 + $0x518] sm:$0xff]
    %v709 = vld [vmem:[#allocation7 + $0x520] sm:$0xff]
    %v710 = vld [vmem:[#allocation7 + $0x528] sm:$0xff]
    %v711 = vld [vmem:[#allocation7 + $0x530] sm:$0xff]
    %v712 = vld [vmem:[#allocation7 + $0x538] sm:$0xff]
    %v713 = vld [vmem:[#allocation7 + $0x540] sm:$0xff]
    %v714 = vld [vmem:[#allocation7 + $0x548] sm:$0xff]
    %v715 = vld [vmem:[#allocation7 + $0x550] sm:$0xff]
    %v716 = vld [vmem:[#allocation7 + $0x558] sm:$0xff]
    %v717 = vld [vmem:[#allocation7 + $0x560] sm:$0xff]
    %v718 = vld [vmem:[#allocation7 + $0x568] sm:$0xff]
    %v719 = vld [vmem:[#allocation7 + $0x570] sm:$0xff]
    %v720 = vld [vmem:[#allocation7 + $0x578] sm:$0xff]
    %v721 = vld [vmem:[#allocation7 + $0x580] sm:$0xff]
    %v722 = vld [vmem:[#allocation7 + $0x588] sm:$0xff]
    %v723 = vld [vmem:[#allocation7 + $0x590] sm:$0xff]
    %v724 = vld [vmem:[#allocation7 + $0x598] sm:$0xff]
    %v725 = vld [vmem:[#allocation7 + $0x5a0] sm:$0xff]
    %v726 = vld [vmem:[#allocation7 + $0x5a8] sm:$0xff]
    %v727 = vld [vmem:[#allocation7 + $0x5b0] sm:$0xff]
    %v728 = vld [vmem:[#allocation7 + $0x5b8] sm:$0xff]
    %v729 = vld [vmem:[#allocation7 + $0x5c0] sm:$0xff]
    %v730 = vld [vmem:[#allocation7 + $0x5c8] sm:$0xff]
    %v731 = vld [vmem:[#allocation7 + $0x5d0] sm:$0xff]
    %v732 = vld [vmem:[#allocation7 + $0x5d8] sm:$0xff]
    %v733 = vld [vmem:[#allocation7 + $0x5e0] sm:$0xff]
    %v734 = vld [vmem:[#allocation7 + $0x5e8] sm:$0xff]
    %v735 = vld [vmem:[#allocation7 + $0x5f0] sm:$0xff]
    %v736 = vld [vmem:[#allocation7 + $0x5f8] sm:$0xff]
    %v737 = vld [vmem:[#allocation7 + $0x600] sm:$0xff]
    %v738 = vld [vmem:[#allocation7 + $0x608] sm:$0xff]
    %v739 = vld [vmem:[#allocation7 + $0x610] sm:$0xff]
    %v740 = vld [vmem:[#allocation7 + $0x618] sm:$0xff]
    %v741 = vld [vmem:[#allocation7 + $0x620] sm:$0xff]
    %v742 = vld [vmem:[#allocation7 + $0x628] sm:$0xff]
    %v743 = vld [vmem:[#allocation7 + $0x630] sm:$0xff]
    %v744 = vld [vmem:[#allocation7 + $0x638] sm:$0xff]
    %v745 = vld [vmem:[#allocation7 + $0x640] sm:$0xff]
    %v746 = vld [vmem:[#allocation7 + $0x648] sm:$0xff]
    %v747 = vld [vmem:[#allocation7 + $0x650] sm:$0xff]
    %v748 = vld [vmem:[#allocation7 + $0x658] sm:$0xff]
    %v749 = vld [vmem:[#allocation7 + $0x660] sm:$0xff]
    %v750 = vld [vmem:[#allocation7 + $0x668] sm:$0xff]
    %v751 = vld [vmem:[#allocation7 + $0x670] sm:$0xff]
    %v752 = vld [vmem:[#allocation7 + $0x678] sm:$0xff]
    %v753 = vld [vmem:[#allocation7 + $0x680] sm:$0xff]
    %v754 = vld [vmem:[#allocation7 + $0x688] sm:$0xff]
    %v755 = vld [vmem:[#allocation7 + $0x690] sm:$0xff]
    %v756 = vld [vmem:[#allocation7 + $0x698] sm:$0xff]
    %v757 = vld [vmem:[#allocation7 + $0x6a0] sm:$0xff]
    %v758 = vld [vmem:[#allocation7 + $0x6a8] sm:$0xff]
    %v759 = vld [vmem:[#allocation7 + $0x6b0] sm:$0xff]
    %v760 = vld [vmem:[#allocation7 + $0x6b8] sm:$0xff]
    %v761 = vld [vmem:[#allocation7 + $0x6c0] sm:$0xff]
    %v762 = vld [vmem:[#allocation7 + $0x6c8] sm:$0xff]
    %v763 = vld [vmem:[#allocation7 + $0x6d0] sm:$0xff]
    %v764 = vld [vmem:[#allocation7 + $0x6d8] sm:$0xff]
    %v765 = vld [vmem:[#allocation7 + $0x6e0] sm:$0xff]
    %v766 = vld [vmem:[#allocation7 + $0x6e8] sm:$0xff]
    %v767 = vld [vmem:[#allocation7 + $0x6f0] sm:$0xff]
    %v768 = vld [vmem:[#allocation7 + $0x6f8] sm:$0xff]
    %v769 = vld [vmem:[#allocation7 + $0x700] sm:$0xff]
    %v770 = vld [vmem:[#allocation7 + $0x708] sm:$0xff]
    %v771 = vld [vmem:[#allocation7 + $0x710] sm:$0xff]
    %v772 = vld [vmem:[#allocation7 + $0x718] sm:$0xff]
    %v773 = vld [vmem:[#allocation7 + $0x720] sm:$0xff]
    %v774 = vld [vmem:[#allocation7 + $0x728] sm:$0xff]
    %v775 = vld [vmem:[#allocation7 + $0x730] sm:$0xff]
    %v776 = vld [vmem:[#allocation7 + $0x738] sm:$0xff]
    %v777 = vld [vmem:[#allocation7 + $0x740] sm:$0xff]
    %v778 = vld [vmem:[#allocation7 + $0x748] sm:$0xff]
    %v779 = vld [vmem:[#allocation7 + $0x750] sm:$0xff]
    %v780 = vld [vmem:[#allocation7 + $0x758] sm:$0xff]
    %v781 = vld [vmem:[#allocation7 + $0x760] sm:$0xff]
    %v782 = vld [vmem:[#allocation7 + $0x768] sm:$0xff]
    %v783 = vld [vmem:[#allocation7 + $0x770] sm:$0xff]
    %v784 = vld [vmem:[#allocation7 + $0x778] sm:$0xff]
    %v785 = vld [vmem:[#allocation7 + $0x780] sm:$0xff]
    %v786 = vld [vmem:[#allocation7 + $0x788] sm:$0xff]
    %v787 = vld [vmem:[#allocation7 + $0x790] sm:$0xff]
    %v788 = vld [vmem:[#allocation7 + $0x798] sm:$0xff]
    %v789 = vld [vmem:[#allocation7 + $0x7a0] sm:$0xff]
    %v790 = vld [vmem:[#allocation7 + $0x7a8] sm:$0xff]
    %v791 = vld [vmem:[#allocation7 + $0x7b0] sm:$0xff]
    %v792 = vld [vmem:[#allocation7 + $0x7b8] sm:$0xff]
    %v793 = vld [vmem:[#allocation7 + $0x7c0] sm:$0xff]
    %v794 = vld [vmem:[#allocation7 + $0x7c8] sm:$0xff]
    %v795 = vld [vmem:[#allocation7 + $0x7d0] sm:$0xff]
    %v796 = vld [vmem:[#allocation7 + $0x7d8] sm:$0xff]
    %v797 = vld [vmem:[#allocation7 + $0x7e0] sm:$0xff]
    %v798 = vld [vmem:[#allocation7 + $0x7e8] sm:$0xff]
    %v799 = vld [vmem:[#allocation7 + $0x7f0] sm:$0xff]
    %v800 = vld [vmem:[#allocation7 + $0x7f8] sm:$0xff]
    %v801 = vld [vmem:[#allocation7 + $0x800] sm:$0xff]
    %v802 = vld [vmem:[#allocation7 + $0x808] sm:$0xff]
    %v803 = vld [vmem:[#allocation7 + $0x810] sm:$0xff]
    %v804 = vld [vmem:[#allocation7 + $0x818] sm:$0xff]
    %v805 = vld [vmem:[#allocation7 + $0x820] sm:$0xff]
    %v806 = vld [vmem:[#allocation7 + $0x828] sm:$0xff]
    %v807 = vld [vmem:[#allocation7 + $0x830] sm:$0xff]
    %v808 = vld [vmem:[#allocation7 + $0x838] sm:$0xff]
    %v809 = vld [vmem:[#allocation7 + $0x840] sm:$0xff]
    %v810 = vld [vmem:[#allocation7 + $0x848] sm:$0xff]
    %v811 = vld [vmem:[#allocation7 + $0x850] sm:$0xff]
    %v812 = vld [vmem:[#allocation7 + $0x858] sm:$0xff]
    %v813 = vld [vmem:[#allocation7 + $0x860] sm:$0xff]
    %v814 = vld [vmem:[#allocation7 + $0x868] sm:$0xff]
    %v815 = vld [vmem:[#allocation7 + $0x870] sm:$0xff]
    %v816 = vld [vmem:[#allocation7 + $0x878] sm:$0xff]
    %v817 = vld [vmem:[#allocation7 + $0x880] sm:$0xff]
    %v818 = vld [vmem:[#allocation7 + $0x888] sm:$0xff]
    %v819 = vld [vmem:[#allocation7 + $0x890] sm:$0xff]
    %v820 = vld [vmem:[#allocation7 + $0x898] sm:$0xff]
    %v821 = vld [vmem:[#allocation7 + $0x8a0] sm:$0xff]
    %v822 = vld [vmem:[#allocation7 + $0x8a8] sm:$0xff]
    %v823 = vld [vmem:[#allocation7 + $0x8b0] sm:$0xff]
    %v824 = vld [vmem:[#allocation7 + $0x8b8] sm:$0xff]
    %v825 = vld [vmem:[#allocation7 + $0x8c0] sm:$0xff]
    %v826 = vld [vmem:[#allocation7 + $0x8c8] sm:$0xff]
    %v827 = vld [vmem:[#allocation7 + $0x8d0] sm:$0xff]
    %v828 = vld [vmem:[#allocation7 + $0x8d8] sm:$0xff]
    %v829 = vld [vmem:[#allocation7 + $0x8e0] sm:$0xff]
    %v830 = vld [vmem:[#allocation7 + $0x8e8] sm:$0xff]
    %v831 = vld [vmem:[#allocation7 + $0x8f0] sm:$0xff]
    %v832 = vld [vmem:[#allocation7 + $0x8f8] sm:$0xff]
    %v833 = vld [vmem:[#allocation8] sm:$0xff]
    %v835 = vlaneseq
    %v836 = vshrl.u32 %v835, 7
    %v837 = vsub.s32 0, %v836
    %v838 = vrot.slane %v833, %v837
    %v839 = vlaneseq
    %v840 = vshrl.u32 %v839, 7
    %v841 = vsub.s32 1, %v840
    %v842 = vrot.slane %v833, %v841
    %v843 = vlaneseq
    %v844 = vshrl.u32 %v843, 7
    %v845 = vsub.s32 2, %v844
    %v846 = vrot.slane %v833, %v845
    %v847 = vlaneseq
    %v848 = vshrl.u32 %v847, 7
    %v849 = vsub.s32 3, %v848
    %v850 = vrot.slane %v833, %v849
    %v851 = vlaneseq
    %v852 = vshrl.u32 %v851, 7
    %v853 = vsub.s32 4, %v852
    %v854 = vrot.slane %v833, %v853
    %v855 = vlaneseq
    %v856 = vshrl.u32 %v855, 7
    %v857 = vsub.s32 5, %v856
    %v858 = vrot.slane %v833, %v857
    %v859 = vlaneseq
    %v860 = vshrl.u32 %v859, 7
    %v861 = vsub.s32 6, %v860
    %v862 = vrot.slane %v833, %v861
    %v863 = vlaneseq
    %v864 = vshrl.u32 %v863, 7
    %v865 = vsub.s32 7, %v864
    %v866 = vrot.slane %v833, %v865
    %v1163 = vunpack.c.l.b16 %v545
    %v1164 = vunpack.c.h.b16 %v545
    %v1165 = vunpack.c.l.b16 %v546
    %v1166 = vunpack.c.h.b16 %v546
    %v1167 = vunpack.c.l.b16 %v547
    %v1168 = vunpack.c.h.b16 %v547
    %v1169 = vunpack.c.l.b16 %v548
    %v1170 = vunpack.c.h.b16 %v548
    %v1171 = vunpack.c.l.b16 %v549
    %v1172 = vunpack.c.h.b16 %v549
    %v1173 = vunpack.c.l.b16 %v550
    %v1174 = vunpack.c.h.b16 %v550
    %v1175 = vunpack.c.l.b16 %v551
    %v1176 = vunpack.c.h.b16 %v551
    %v1177 = vunpack.c.l.b16 %v552
    %v1178 = vunpack.c.h.b16 %v552
    %v1179 = vunpack.c.l.b16 %v553
    %v1180 = vunpack.c.h.b16 %v553
    %v1181 = vunpack.c.l.b16 %v554
    %v1182 = vunpack.c.h.b16 %v554
    %v1183 = vunpack.c.l.b16 %v555
    %v1184 = vunpack.c.h.b16 %v555
    %v1185 = vunpack.c.l.b16 %v556
    %v1186 = vunpack.c.h.b16 %v556
    %v1187 = vunpack.c.l.b16 %v557
    %v1188 = vunpack.c.h.b16 %v557
    %v1189 = vunpack.c.l.b16 %v558
    %v1190 = vunpack.c.h.b16 %v558
    %v1191 = vunpack.c.l.b16 %v559
    %v1192 = vunpack.c.h.b16 %v559
    %v1193 = vunpack.c.l.b16 %v560
    %v1194 = vunpack.c.h.b16 %v560
    %v1195 = vunpack.c.l.b16 %v561
    %v1196 = vunpack.c.h.b16 %v561
    %v1197 = vunpack.c.l.b16 %v562
    %v1198 = vunpack.c.h.b16 %v562
    %v1199 = vunpack.c.l.b16 %v563
    %v1200 = vunpack.c.h.b16 %v563
    %v1201 = vunpack.c.l.b16 %v564
    %v1202 = vunpack.c.h.b16 %v564
    %v1203 = vunpack.c.l.b16 %v565
    %v1204 = vunpack.c.h.b16 %v565
    %v1205 = vunpack.c.l.b16 %v566
    %v1206 = vunpack.c.h.b16 %v566
    %v1207 = vunpack.c.l.b16 %v567
    %v1208 = vunpack.c.h.b16 %v567
    %v1209 = vunpack.c.l.b16 %v568
    %v1210 = vunpack.c.h.b16 %v568
    %v1211 = vunpack.c.l.b16 %v569
    %v1212 = vunpack.c.h.b16 %v569
    %v1213 = vunpack.c.l.b16 %v570
    %v1214 = vunpack.c.h.b16 %v570
    %v1215 = vunpack.c.l.b16 %v571
    %v1216 = vunpack.c.h.b16 %v571
    %v1217 = vunpack.c.l.b16 %v572
    %v1218 = vunpack.c.h.b16 %v572
    %v1219 = vunpack.c.l.b16 %v573
    %v1220 = vunpack.c.h.b16 %v573
    %v1221 = vunpack.c.l.b16 %v574
    %v1222 = vunpack.c.h.b16 %v574
    %v1223 = vunpack.c.l.b16 %v575
    %v1224 = vunpack.c.h.b16 %v575
    %v1225 = vunpack.c.l.b16 %v576
    %v1226 = vunpack.c.h.b16 %v576
    %v1227 = vunpack.c.l.b16 %v577
    %v1228 = vunpack.c.h.b16 %v577
    %v1229 = vunpack.c.l.b16 %v578
    %v1230 = vunpack.c.h.b16 %v578
    %v1231 = vunpack.c.l.b16 %v579
    %v1232 = vunpack.c.h.b16 %v579
    %v1233 = vunpack.c.l.b16 %v580
    %v1234 = vunpack.c.h.b16 %v580
    %v1235 = vunpack.c.l.b16 %v581
    %v1236 = vunpack.c.h.b16 %v581
    %v1237 = vunpack.c.l.b16 %v582
    %v1238 = vunpack.c.h.b16 %v582
    %v1239 = vunpack.c.l.b16 %v583
    %v1240 = vunpack.c.h.b16 %v583
    %v1241 = vunpack.c.l.b16 %v584
    %v1242 = vunpack.c.h.b16 %v584
    %v1243 = vunpack.c.l.b16 %v585
    %v1244 = vunpack.c.h.b16 %v585
    %v1245 = vunpack.c.l.b16 %v586
    %v1246 = vunpack.c.h.b16 %v586
    %v1247 = vunpack.c.l.b16 %v587
    %v1248 = vunpack.c.h.b16 %v587
    %v1249 = vunpack.c.l.b16 %v588
    %v1250 = vunpack.c.h.b16 %v588
    %v1251 = vunpack.c.l.b16 %v589
    %v1252 = vunpack.c.h.b16 %v589
    %v1253 = vunpack.c.l.b16 %v590
    %v1254 = vunpack.c.h.b16 %v590
    %v1255 = vunpack.c.l.b16 %v591
    %v1256 = vunpack.c.h.b16 %v591
    %v1257 = vunpack.c.l.b16 %v592
    %v1258 = vunpack.c.h.b16 %v592
    %v1259 = vunpack.c.l.b16 %v593
    %v1260 = vunpack.c.h.b16 %v593
    %v1261 = vunpack.c.l.b16 %v594
    %v1262 = vunpack.c.h.b16 %v594
    %v1263 = vunpack.c.l.b16 %v595
    %v1264 = vunpack.c.h.b16 %v595
    %v1265 = vunpack.c.l.b16 %v596
    %v1266 = vunpack.c.h.b16 %v596
    %v1267 = vunpack.c.l.b16 %v597
    %v1268 = vunpack.c.h.b16 %v597
    %v1269 = vunpack.c.l.b16 %v598
    %v1270 = vunpack.c.h.b16 %v598
    %v1271 = vunpack.c.l.b16 %v599
    %v1272 = vunpack.c.h.b16 %v599
    %v1273 = vunpack.c.l.b16 %v600
    %v1274 = vunpack.c.h.b16 %v600
    %v1275 = vunpack.c.l.b16 %v601
    %v1276 = vunpack.c.h.b16 %v601
    %v1277 = vunpack.c.l.b16 %v602
    %v1278 = vunpack.c.h.b16 %v602
    %v1279 = vunpack.c.l.b16 %v603
    %v1280 = vunpack.c.h.b16 %v603
    %v1281 = vunpack.c.l.b16 %v604
    %v1282 = vunpack.c.h.b16 %v604
    %v1283 = vunpack.c.l.b16 %v605
    %v1284 = vunpack.c.h.b16 %v605
    %v1285 = vunpack.c.l.b16 %v606
    %v1286 = vunpack.c.h.b16 %v606
    %v1287 = vunpack.c.l.b16 %v607
    %v1288 = vunpack.c.h.b16 %v607
    %v1289 = vunpack.c.l.b16 %v608
    %v1290 = vunpack.c.h.b16 %v608
    %v1291 = vunpack.c.l.b16 %v609
    %v1292 = vunpack.c.h.b16 %v609
    %v1293 = vunpack.c.l.b16 %v610
    %v1294 = vunpack.c.h.b16 %v610
    %v1295 = vunpack.c.l.b16 %v611
    %v1296 = vunpack.c.h.b16 %v611
    %v1297 = vunpack.c.l.b16 %v612
    %v1298 = vunpack.c.h.b16 %v612
    %v1299 = vunpack.c.l.b16 %v613
    %v1300 = vunpack.c.h.b16 %v613
    %v1301 = vunpack.c.l.b16 %v614
    %v1302 = vunpack.c.h.b16 %v614
    %v1303 = vunpack.c.l.b16 %v615
    %v1304 = vunpack.c.h.b16 %v615
    %v1305 = vunpack.c.l.b16 %v616
    %v1306 = vunpack.c.h.b16 %v616
    %v1307 = vunpack.c.l.b16 %v617
    %v1308 = vunpack.c.h.b16 %v617
    %v1309 = vunpack.c.l.b16 %v618
    %v1310 = vunpack.c.h.b16 %v618
    %v1311 = vunpack.c.l.b16 %v619
    %v1312 = vunpack.c.h.b16 %v619
    %v1313 = vunpack.c.l.b16 %v620
    %v1314 = vunpack.c.h.b16 %v620
    %v1315 = vunpack.c.l.b16 %v621
    %v1316 = vunpack.c.h.b16 %v621
    %v1317 = vunpack.c.l.b16 %v622
    %v1318 = vunpack.c.h.b16 %v622
    %v1319 = vunpack.c.l.b16 %v623
    %v1320 = vunpack.c.h.b16 %v623
    %v1321 = vunpack.c.l.b16 %v624
    %v1322 = vunpack.c.h.b16 %v624
    %v1323 = vunpack.c.l.b16 %v625
    %v1324 = vunpack.c.h.b16 %v625
    %v1325 = vunpack.c.l.b16 %v626
    %v1326 = vunpack.c.h.b16 %v626
    %v1327 = vunpack.c.l.b16 %v627
    %v1328 = vunpack.c.h.b16 %v627
    %v1329 = vunpack.c.l.b16 %v628
    %v1330 = vunpack.c.h.b16 %v628
    %v1331 = vunpack.c.l.b16 %v629
    %v1332 = vunpack.c.h.b16 %v629
    %v1333 = vunpack.c.l.b16 %v630
    %v1334 = vunpack.c.h.b16 %v630
    %v1335 = vunpack.c.l.b16 %v631
    %v1336 = vunpack.c.h.b16 %v631
    %v1337 = vunpack.c.l.b16 %v632
    %v1338 = vunpack.c.h.b16 %v632
    %v1339 = vunpack.c.l.b16 %v633
    %v1340 = vunpack.c.h.b16 %v633
    %v1341 = vunpack.c.l.b16 %v634
    %v1342 = vunpack.c.h.b16 %v634
    %v1343 = vunpack.c.l.b16 %v635
    %v1344 = vunpack.c.h.b16 %v635
    %v1345 = vunpack.c.l.b16 %v636
    %v1346 = vunpack.c.h.b16 %v636
    %v1347 = vunpack.c.l.b16 %v637
    %v1348 = vunpack.c.h.b16 %v637
    %v1349 = vunpack.c.l.b16 %v638
    %v1350 = vunpack.c.h.b16 %v638
    %v1351 = vunpack.c.l.b16 %v639
    %v1352 = vunpack.c.h.b16 %v639
    %v1353 = vunpack.c.l.b16 %v640
    %v1354 = vunpack.c.h.b16 %v640
    %v1355 = vunpack.c.l.b16 %v641
    %v1356 = vunpack.c.h.b16 %v641
    %v1357 = vunpack.c.l.b16 %v642
    %v1358 = vunpack.c.h.b16 %v642
    %v1359 = vunpack.c.l.b16 %v643
    %v1360 = vunpack.c.h.b16 %v643
    %v1361 = vunpack.c.l.b16 %v644
    %v1362 = vunpack.c.h.b16 %v644
    %v1363 = vunpack.c.l.b16 %v645
    %v1364 = vunpack.c.h.b16 %v645
    %v1365 = vunpack.c.l.b16 %v646
    %v1366 = vunpack.c.h.b16 %v646
    %v1367 = vunpack.c.l.b16 %v647
    %v1368 = vunpack.c.h.b16 %v647
    %v1369 = vunpack.c.l.b16 %v648
    %v1370 = vunpack.c.h.b16 %v648
    %v1371 = vunpack.c.l.b16 %v649
    %v1372 = vunpack.c.h.b16 %v649
    %v1373 = vunpack.c.l.b16 %v650
    %v1374 = vunpack.c.h.b16 %v650
    %v1375 = vunpack.c.l.b16 %v651
    %v1376 = vunpack.c.h.b16 %v651
    %v1377 = vunpack.c.l.b16 %v652
    %v1378 = vunpack.c.h.b16 %v652
    %v1379 = vunpack.c.l.b16 %v653
    %v1380 = vunpack.c.h.b16 %v653
    %v1381 = vunpack.c.l.b16 %v654
    %v1382 = vunpack.c.h.b16 %v654
    %v1383 = vunpack.c.l.b16 %v655
    %v1384 = vunpack.c.h.b16 %v655
    %v1385 = vunpack.c.l.b16 %v656
    %v1386 = vunpack.c.h.b16 %v656
    %v1387 = vunpack.c.l.b16 %v657
    %v1388 = vunpack.c.h.b16 %v657
    %v1389 = vunpack.c.l.b16 %v658
    %v1390 = vunpack.c.h.b16 %v658
    %v1391 = vunpack.c.l.b16 %v659
    %v1392 = vunpack.c.h.b16 %v659
    %v1393 = vunpack.c.l.b16 %v660
    %v1394 = vunpack.c.h.b16 %v660
    %v1395 = vunpack.c.l.b16 %v661
    %v1396 = vunpack.c.h.b16 %v661
    %v1397 = vunpack.c.l.b16 %v662
    %v1398 = vunpack.c.h.b16 %v662
    %v1399 = vunpack.c.l.b16 %v663
    %v1400 = vunpack.c.h.b16 %v663
    %v1401 = vunpack.c.l.b16 %v664
    %v1402 = vunpack.c.h.b16 %v664
    %v1403 = vunpack.c.l.b16 %v665
    %v1404 = vunpack.c.h.b16 %v665
    %v1405 = vunpack.c.l.b16 %v666
    %v1406 = vunpack.c.h.b16 %v666
    %v1407 = vunpack.c.l.b16 %v667
    %v1408 = vunpack.c.h.b16 %v667
    %v1409 = vunpack.c.l.b16 %v668
    %v1410 = vunpack.c.h.b16 %v668
    %v1411 = vunpack.c.l.b16 %v669
    %v1412 = vunpack.c.h.b16 %v669
    %v1413 = vunpack.c.l.b16 %v670
    %v1414 = vunpack.c.h.b16 %v670
    %v1415 = vunpack.c.l.b16 %v671
    %v1416 = vunpack.c.h.b16 %v671
    %v1417 = vunpack.c.l.b16 %v672
    %v1418 = vunpack.c.h.b16 %v672
    %v1419 = vunpack.c.l.b16 %v673
    %v1420 = vunpack.c.h.b16 %v673
    %v1421 = vunpack.c.l.b16 %v674
    %v1422 = vunpack.c.h.b16 %v674
    %v1423 = vunpack.c.l.b16 %v675
    %v1424 = vunpack.c.h.b16 %v675
    %v1425 = vunpack.c.l.b16 %v676
    %v1426 = vunpack.c.h.b16 %v676
    %v1427 = vunpack.c.l.b16 %v677
    %v1428 = vunpack.c.h.b16 %v677
    %v1429 = vunpack.c.l.b16 %v678
    %v1430 = vunpack.c.h.b16 %v678
    %v1431 = vunpack.c.l.b16 %v679
    %v1432 = vunpack.c.h.b16 %v679
    %v1433 = vunpack.c.l.b16 %v680
    %v1434 = vunpack.c.h.b16 %v680
    %v1435 = vunpack.c.l.b16 %v681
    %v1436 = vunpack.c.h.b16 %v681
    %v1437 = vunpack.c.l.b16 %v682
    %v1438 = vunpack.c.h.b16 %v682
    %v1439 = vunpack.c.l.b16 %v683
    %v1440 = vunpack.c.h.b16 %v683
    %v1441 = vunpack.c.l.b16 %v684
    %v1442 = vunpack.c.h.b16 %v684
    %v1443 = vunpack.c.l.b16 %v685
    %v1444 = vunpack.c.h.b16 %v685
    %v1445 = vunpack.c.l.b16 %v686
    %v1446 = vunpack.c.h.b16 %v686
    %v1447 = vunpack.c.l.b16 %v687
    %v1448 = vunpack.c.h.b16 %v687
    %v1449 = vunpack.c.l.b16 %v688
    %v1450 = vunpack.c.h.b16 %v688
    %v1451 = vunpack.c.l.b16 %v689
    %v1452 = vunpack.c.h.b16 %v689
    %v1453 = vunpack.c.l.b16 %v690
    %v1454 = vunpack.c.h.b16 %v690
    %v1455 = vunpack.c.l.b16 %v691
    %v1456 = vunpack.c.h.b16 %v691
    %v1457 = vunpack.c.l.b16 %v692
    %v1458 = vunpack.c.h.b16 %v692
    %v1459 = vunpack.c.l.b16 %v693
    %v1460 = vunpack.c.h.b16 %v693
    %v1461 = vunpack.c.l.b16 %v694
    %v1462 = vunpack.c.h.b16 %v694
    %v1463 = vunpack.c.l.b16 %v695
    %v1464 = vunpack.c.h.b16 %v695
    %v1465 = vunpack.c.l.b16 %v696
    %v1466 = vunpack.c.h.b16 %v696
    %v1467 = vunpack.c.l.b16 %v697
    %v1468 = vunpack.c.h.b16 %v697
    %v1469 = vunpack.c.l.b16 %v698
    %v1470 = vunpack.c.h.b16 %v698
    %v1471 = vunpack.c.l.b16 %v699
    %v1472 = vunpack.c.h.b16 %v699
    %v1473 = vunpack.c.l.b16 %v700
    %v1474 = vunpack.c.h.b16 %v700
    %v1475 = vunpack.c.l.b16 %v701
    %v1476 = vunpack.c.h.b16 %v701
    %v1477 = vunpack.c.l.b16 %v702
    %v1478 = vunpack.c.h.b16 %v702
    %v1479 = vunpack.c.l.b16 %v703
    %v1480 = vunpack.c.h.b16 %v703
    %v1481 = vunpack.c.l.b16 %v704
    %v1482 = vunpack.c.h.b16 %v704
    %v1483 = vunpack.c.l.b16 %v705
    %v1484 = vunpack.c.h.b16 %v705
    %v1485 = vunpack.c.l.b16 %v706
    %v1486 = vunpack.c.h.b16 %v706
    %v1487 = vunpack.c.l.b16 %v707
    %v1488 = vunpack.c.h.b16 %v707
    %v1489 = vunpack.c.l.b16 %v708
    %v1490 = vunpack.c.h.b16 %v708
    %v1491 = vunpack.c.l.b16 %v709
    %v1492 = vunpack.c.h.b16 %v709
    %v1493 = vunpack.c.l.b16 %v710
    %v1494 = vunpack.c.h.b16 %v710
    %v1495 = vunpack.c.l.b16 %v711
    %v1496 = vunpack.c.h.b16 %v711
    %v1497 = vunpack.c.l.b16 %v712
    %v1498 = vunpack.c.h.b16 %v712
    %v1499 = vunpack.c.l.b16 %v713
    %v1500 = vunpack.c.h.b16 %v713
    %v1501 = vunpack.c.l.b16 %v714
    %v1502 = vunpack.c.h.b16 %v714
    %v1503 = vunpack.c.l.b16 %v715
    %v1504 = vunpack.c.h.b16 %v715
    %v1505 = vunpack.c.l.b16 %v716
    %v1506 = vunpack.c.h.b16 %v716
    %v1507 = vunpack.c.l.b16 %v717
    %v1508 = vunpack.c.h.b16 %v717
    %v1509 = vunpack.c.l.b16 %v718
    %v1510 = vunpack.c.h.b16 %v718
    %v1511 = vunpack.c.l.b16 %v719
    %v1512 = vunpack.c.h.b16 %v719
    %v1513 = vunpack.c.l.b16 %v720
    %v1514 = vunpack.c.h.b16 %v720
    %v1515 = vunpack.c.l.b16 %v721
    %v1516 = vunpack.c.h.b16 %v721
    %v1517 = vunpack.c.l.b16 %v722
    %v1518 = vunpack.c.h.b16 %v722
    %v1519 = vunpack.c.l.b16 %v723
    %v1520 = vunpack.c.h.b16 %v723
    %v1521 = vunpack.c.l.b16 %v724
    %v1522 = vunpack.c.h.b16 %v724
    %v1523 = vunpack.c.l.b16 %v725
    %v1524 = vunpack.c.h.b16 %v725
    %v1525 = vunpack.c.l.b16 %v726
    %v1526 = vunpack.c.h.b16 %v726
    %v1527 = vunpack.c.l.b16 %v727
    %v1528 = vunpack.c.h.b16 %v727
    %v1529 = vunpack.c.l.b16 %v728
    %v1530 = vunpack.c.h.b16 %v728
    %v1531 = vunpack.c.l.b16 %v729
    %v1532 = vunpack.c.h.b16 %v729
    %v1533 = vunpack.c.l.b16 %v730
    %v1534 = vunpack.c.h.b16 %v730
    %v1535 = vunpack.c.l.b16 %v731
    %v1536 = vunpack.c.h.b16 %v731
    %v1537 = vunpack.c.l.b16 %v732
    %v1538 = vunpack.c.h.b16 %v732
    %v1539 = vunpack.c.l.b16 %v733
    %v1540 = vunpack.c.h.b16 %v733
    %v1541 = vunpack.c.l.b16 %v734
    %v1542 = vunpack.c.h.b16 %v734
    %v1543 = vunpack.c.l.b16 %v735
    %v1544 = vunpack.c.h.b16 %v735
    %v1545 = vunpack.c.l.b16 %v736
    %v1546 = vunpack.c.h.b16 %v736
    %v1547 = vunpack.c.l.b16 %v737
    %v1548 = vunpack.c.h.b16 %v737
    %v1549 = vunpack.c.l.b16 %v738
    %v1550 = vunpack.c.h.b16 %v738
    %v1551 = vunpack.c.l.b16 %v739
    %v1552 = vunpack.c.h.b16 %v739
    %v1553 = vunpack.c.l.b16 %v740
    %v1554 = vunpack.c.h.b16 %v740
    %v1555 = vunpack.c.l.b16 %v741
    %v1556 = vunpack.c.h.b16 %v741
    %v1557 = vunpack.c.l.b16 %v742
    %v1558 = vunpack.c.h.b16 %v742
    %v1559 = vunpack.c.l.b16 %v743
    %v1560 = vunpack.c.h.b16 %v743
    %v1561 = vunpack.c.l.b16 %v744
    %v1562 = vunpack.c.h.b16 %v744
    %v1563 = vunpack.c.l.b16 %v745
    %v1564 = vunpack.c.h.b16 %v745
    %v1565 = vunpack.c.l.b16 %v746
    %v1566 = vunpack.c.h.b16 %v746
    %v1567 = vunpack.c.l.b16 %v747
    %v1568 = vunpack.c.h.b16 %v747
    %v1569 = vunpack.c.l.b16 %v748
    %v1570 = vunpack.c.h.b16 %v748
    %v1571 = vunpack.c.l.b16 %v749
    %v1572 = vunpack.c.h.b16 %v749
    %v1573 = vunpack.c.l.b16 %v750
    %v1574 = vunpack.c.h.b16 %v750
    %v1575 = vunpack.c.l.b16 %v751
    %v1576 = vunpack.c.h.b16 %v751
    %v1577 = vunpack.c.l.b16 %v752
    %v1578 = vunpack.c.h.b16 %v752
    %v1579 = vunpack.c.l.b16 %v753
    %v1580 = vunpack.c.h.b16 %v753
    %v1581 = vunpack.c.l.b16 %v754
    %v1582 = vunpack.c.h.b16 %v754
    %v1583 = vunpack.c.l.b16 %v755
    %v1584 = vunpack.c.h.b16 %v755
    %v1585 = vunpack.c.l.b16 %v756
    %v1586 = vunpack.c.h.b16 %v756
    %v1587 = vunpack.c.l.b16 %v757
    %v1588 = vunpack.c.h.b16 %v757
    %v1589 = vunpack.c.l.b16 %v758
    %v1590 = vunpack.c.h.b16 %v758
    %v1591 = vunpack.c.l.b16 %v759
    %v1592 = vunpack.c.h.b16 %v759
    %v1593 = vunpack.c.l.b16 %v760
    %v1594 = vunpack.c.h.b16 %v760
    %v1595 = vunpack.c.l.b16 %v761
    %v1596 = vunpack.c.h.b16 %v761
    %v1597 = vunpack.c.l.b16 %v762
    %v1598 = vunpack.c.h.b16 %v762
    %v1599 = vunpack.c.l.b16 %v763
    %v1600 = vunpack.c.h.b16 %v763
    %v1601 = vunpack.c.l.b16 %v764
    %v1602 = vunpack.c.h.b16 %v764
    %v1603 = vunpack.c.l.b16 %v765
    %v1604 = vunpack.c.h.b16 %v765
    %v1605 = vunpack.c.l.b16 %v766
    %v1606 = vunpack.c.h.b16 %v766
    %v1607 = vunpack.c.l.b16 %v767
    %v1608 = vunpack.c.h.b16 %v767
    %v1609 = vunpack.c.l.b16 %v768
    %v1610 = vunpack.c.h.b16 %v768
    %v1611 = vunpack.c.l.b16 %v769
    %v1612 = vunpack.c.h.b16 %v769
    %v1613 = vunpack.c.l.b16 %v770
    %v1614 = vunpack.c.h.b16 %v770
    %v1615 = vunpack.c.l.b16 %v771
    %v1616 = vunpack.c.h.b16 %v771
    %v1617 = vunpack.c.l.b16 %v772
    %v1618 = vunpack.c.h.b16 %v772
    %v1619 = vunpack.c.l.b16 %v773
    %v1620 = vunpack.c.h.b16 %v773
    %v1621 = vunpack.c.l.b16 %v774
    %v1622 = vunpack.c.h.b16 %v774
    %v1623 = vunpack.c.l.b16 %v775
    %v1624 = vunpack.c.h.b16 %v775
    %v1625 = vunpack.c.l.b16 %v776
    %v1626 = vunpack.c.h.b16 %v776
    %v1627 = vunpack.c.l.b16 %v777
    %v1628 = vunpack.c.h.b16 %v777
    %v1629 = vunpack.c.l.b16 %v778
    %v1630 = vunpack.c.h.b16 %v778
    %v1631 = vunpack.c.l.b16 %v779
    %v1632 = vunpack.c.h.b16 %v779
    %v1633 = vunpack.c.l.b16 %v780
    %v1634 = vunpack.c.h.b16 %v780
    %v1635 = vunpack.c.l.b16 %v781
    %v1636 = vunpack.c.h.b16 %v781
    %v1637 = vunpack.c.l.b16 %v782
    %v1638 = vunpack.c.h.b16 %v782
    %v1639 = vunpack.c.l.b16 %v783
    %v1640 = vunpack.c.h.b16 %v783
    %v1641 = vunpack.c.l.b16 %v784
    %v1642 = vunpack.c.h.b16 %v784
    %v1643 = vunpack.c.l.b16 %v785
    %v1644 = vunpack.c.h.b16 %v785
    %v1645 = vunpack.c.l.b16 %v786
    %v1646 = vunpack.c.h.b16 %v786
    %v1647 = vunpack.c.l.b16 %v787
    %v1648 = vunpack.c.h.b16 %v787
    %v1649 = vunpack.c.l.b16 %v788
    %v1650 = vunpack.c.h.b16 %v788
    %v1651 = vunpack.c.l.b16 %v789
    %v1652 = vunpack.c.h.b16 %v789
    %v1653 = vunpack.c.l.b16 %v790
    %v1654 = vunpack.c.h.b16 %v790
    %v1655 = vunpack.c.l.b16 %v791
    %v1656 = vunpack.c.h.b16 %v791
    %v1657 = vunpack.c.l.b16 %v792
    %v1658 = vunpack.c.h.b16 %v792
    %v1659 = vunpack.c.l.b16 %v793
    %v1660 = vunpack.c.h.b16 %v793
    %v1661 = vunpack.c.l.b16 %v794
    %v1662 = vunpack.c.h.b16 %v794
    %v1663 = vunpack.c.l.b16 %v795
    %v1664 = vunpack.c.h.b16 %v795
    %v1665 = vunpack.c.l.b16 %v796
    %v1666 = vunpack.c.h.b16 %v796
    %v1667 = vunpack.c.l.b16 %v797
    %v1668 = vunpack.c.h.b16 %v797
    %v1669 = vunpack.c.l.b16 %v798
    %v1670 = vunpack.c.h.b16 %v798
    %v1671 = vunpack.c.l.b16 %v799
    %v1672 = vunpack.c.h.b16 %v799
    %v1673 = vunpack.c.l.b16 %v800
    %v1674 = vunpack.c.h.b16 %v800
    %v1675 = vunpack.c.l.b16 %v801
    %v1676 = vunpack.c.h.b16 %v801
    %v1677 = vunpack.c.l.b16 %v802
    %v1678 = vunpack.c.h.b16 %v802
    %v1679 = vunpack.c.l.b16 %v803
    %v1680 = vunpack.c.h.b16 %v803
    %v1681 = vunpack.c.l.b16 %v804
    %v1682 = vunpack.c.h.b16 %v804
    %v1683 = vunpack.c.l.b16 %v805
    %v1684 = vunpack.c.h.b16 %v805
    %v1685 = vunpack.c.l.b16 %v806
    %v1686 = vunpack.c.h.b16 %v806
    %v1687 = vunpack.c.l.b16 %v807
    %v1688 = vunpack.c.h.b16 %v807
    %v1689 = vunpack.c.l.b16 %v808
    %v1690 = vunpack.c.h.b16 %v808
    %v1691 = vunpack.c.l.b16 %v809
    %v1692 = vunpack.c.h.b16 %v809
    %v1693 = vunpack.c.l.b16 %v810
    %v1694 = vunpack.c.h.b16 %v810
    %v1695 = vunpack.c.l.b16 %v811
    %v1696 = vunpack.c.h.b16 %v811
    %v1697 = vunpack.c.l.b16 %v812
    %v1698 = vunpack.c.h.b16 %v812
    %v1699 = vunpack.c.l.b16 %v813
    %v1700 = vunpack.c.h.b16 %v813
    %v1701 = vunpack.c.l.b16 %v814
    %v1702 = vunpack.c.h.b16 %v814
    %v1703 = vunpack.c.l.b16 %v815
    %v1704 = vunpack.c.h.b16 %v815
    %v1705 = vunpack.c.l.b16 %v816
    %v1706 = vunpack.c.h.b16 %v816
    %v1707 = vunpack.c.l.b16 %v817
    %v1708 = vunpack.c.h.b16 %v817
    %v1709 = vunpack.c.l.b16 %v818
    %v1710 = vunpack.c.h.b16 %v818
    %v1711 = vunpack.c.l.b16 %v819
    %v1712 = vunpack.c.h.b16 %v819
    %v1713 = vunpack.c.l.b16 %v820
    %v1714 = vunpack.c.h.b16 %v820
    %v1715 = vunpack.c.l.b16 %v821
    %v1716 = vunpack.c.h.b16 %v821
    %v1717 = vunpack.c.l.b16 %v822
    %v1718 = vunpack.c.h.b16 %v822
    %v1719 = vunpack.c.l.b16 %v823
    %v1720 = vunpack.c.h.b16 %v823
    %v1721 = vunpack.c.l.b16 %v824
    %v1722 = vunpack.c.h.b16 %v824
    %v1723 = vunpack.c.l.b16 %v825
    %v1724 = vunpack.c.h.b16 %v825
    %v1725 = vunpack.c.l.b16 %v826
    %v1726 = vunpack.c.h.b16 %v826
    %v1727 = vunpack.c.l.b16 %v827
    %v1728 = vunpack.c.h.b16 %v827
    %v1729 = vunpack.c.l.b16 %v828
    %v1730 = vunpack.c.h.b16 %v828
    %v1731 = vunpack.c.l.b16 %v829
    %v1732 = vunpack.c.h.b16 %v829
    %v1733 = vunpack.c.l.b16 %v830
    %v1734 = vunpack.c.h.b16 %v830
    %v1735 = vunpack.c.l.b16 %v831
    %v1736 = vunpack.c.h.b16 %v831
    %v1737 = vunpack.c.l.b16 %v832
    %v1738 = vunpack.c.h.b16 %v832
    %v1739 = vpack.c.b16 %v1171, %v1163
    %v1740 = vpack.c.b16 %v1172, %v1164
    %v1741 = vpack.c.b16 %v1173, %v1165
    %v1742 = vpack.c.b16 %v1174, %v1166
    %v1743 = vpack.c.b16 %v1175, %v1167
    %v1744 = vpack.c.b16 %v1176, %v1168
    %v1745 = vpack.c.b16 %v1177, %v1169
    %v1746 = vpack.c.b16 %v1178, %v1170
    %v1747 = vpack.c.b16 %v1187, %v1179
    %v1748 = vpack.c.b16 %v1188, %v1180
    %v1749 = vpack.c.b16 %v1189, %v1181
    %v1750 = vpack.c.b16 %v1190, %v1182
    %v1751 = vpack.c.b16 %v1191, %v1183
    %v1752 = vpack.c.b16 %v1192, %v1184
    %v1753 = vpack.c.b16 %v1193, %v1185
    %v1754 = vpack.c.b16 %v1194, %v1186
    %v1755 = vpack.c.b16 %v1203, %v1195
    %v1756 = vpack.c.b16 %v1204, %v1196
    %v1757 = vpack.c.b16 %v1205, %v1197
    %v1758 = vpack.c.b16 %v1206, %v1198
    %v1759 = vpack.c.b16 %v1207, %v1199
    %v1760 = vpack.c.b16 %v1208, %v1200
    %v1761 = vpack.c.b16 %v1209, %v1201
    %v1762 = vpack.c.b16 %v1210, %v1202
    %v1763 = vpack.c.b16 %v1219, %v1211
    %v1764 = vpack.c.b16 %v1220, %v1212
    %v1765 = vpack.c.b16 %v1221, %v1213
    %v1766 = vpack.c.b16 %v1222, %v1214
    %v1767 = vpack.c.b16 %v1223, %v1215
    %v1768 = vpack.c.b16 %v1224, %v1216
    %v1769 = vpack.c.b16 %v1225, %v1217
    %v1770 = vpack.c.b16 %v1226, %v1218
    %v1771 = vpack.c.b16 %v1235, %v1227
    %v1772 = vpack.c.b16 %v1236, %v1228
    %v1773 = vpack.c.b16 %v1237, %v1229
    %v1774 = vpack.c.b16 %v1238, %v1230
    %v1775 = vpack.c.b16 %v1239, %v1231
    %v1776 = vpack.c.b16 %v1240, %v1232
    %v1777 = vpack.c.b16 %v1241, %v1233
    %v1778 = vpack.c.b16 %v1242, %v1234
    %v1779 = vpack.c.b16 %v1251, %v1243
    %v1780 = vpack.c.b16 %v1252, %v1244
    %v1781 = vpack.c.b16 %v1253, %v1245
    %v1782 = vpack.c.b16 %v1254, %v1246
    %v1783 = vpack.c.b16 %v1255, %v1247
    %v1784 = vpack.c.b16 %v1256, %v1248
    %v1785 = vpack.c.b16 %v1257, %v1249
    %v1786 = vpack.c.b16 %v1258, %v1250
    %v1787 = vpack.c.b16 %v1267, %v1259
    %v1788 = vpack.c.b16 %v1268, %v1260
    %v1789 = vpack.c.b16 %v1269, %v1261
    %v1790 = vpack.c.b16 %v1270, %v1262
    %v1791 = vpack.c.b16 %v1271, %v1263
    %v1792 = vpack.c.b16 %v1272, %v1264
    %v1793 = vpack.c.b16 %v1273, %v1265
    %v1794 = vpack.c.b16 %v1274, %v1266
    %v1795 = vpack.c.b16 %v1283, %v1275
    %v1796 = vpack.c.b16 %v1284, %v1276
    %v1797 = vpack.c.b16 %v1285, %v1277
    %v1798 = vpack.c.b16 %v1286, %v1278
    %v1799 = vpack.c.b16 %v1287, %v1279
    %v1800 = vpack.c.b16 %v1288, %v1280
    %v1801 = vpack.c.b16 %v1289, %v1281
    %v1802 = vpack.c.b16 %v1290, %v1282
    %v1803 = vpack.c.b16 %v1299, %v1291
    %v1804 = vpack.c.b16 %v1300, %v1292
    %v1805 = vpack.c.b16 %v1301, %v1293
    %v1806 = vpack.c.b16 %v1302, %v1294
    %v1807 = vpack.c.b16 %v1303, %v1295
    %v1808 = vpack.c.b16 %v1304, %v1296
    %v1809 = vpack.c.b16 %v1305, %v1297
    %v1810 = vpack.c.b16 %v1306, %v1298
    %v1811 = vpack.c.b16 %v1315, %v1307
    %v1812 = vpack.c.b16 %v1316, %v1308
    %v1813 = vpack.c.b16 %v1317, %v1309
    %v1814 = vpack.c.b16 %v1318, %v1310
    %v1815 = vpack.c.b16 %v1319, %v1311
    %v1816 = vpack.c.b16 %v1320, %v1312
    %v1817 = vpack.c.b16 %v1321, %v1313
    %v1818 = vpack.c.b16 %v1322, %v1314
    %v1819 = vpack.c.b16 %v1331, %v1323
    %v1820 = vpack.c.b16 %v1332, %v1324
    %v1821 = vpack.c.b16 %v1333, %v1325
    %v1822 = vpack.c.b16 %v1334, %v1326
    %v1823 = vpack.c.b16 %v1335, %v1327
    %v1824 = vpack.c.b16 %v1336, %v1328
    %v1825 = vpack.c.b16 %v1337, %v1329
    %v1826 = vpack.c.b16 %v1338, %v1330
    %v1827 = vpack.c.b16 %v1347, %v1339
    %v1828 = vpack.c.b16 %v1348, %v1340
    %v1829 = vpack.c.b16 %v1349, %v1341
    %v1830 = vpack.c.b16 %v1350, %v1342
    %v1831 = vpack.c.b16 %v1351, %v1343
    %v1832 = vpack.c.b16 %v1352, %v1344
    %v1833 = vpack.c.b16 %v1353, %v1345
    %v1834 = vpack.c.b16 %v1354, %v1346
    %v1835 = vpack.c.b16 %v1363, %v1355
    %v1836 = vpack.c.b16 %v1364, %v1356
    %v1837 = vpack.c.b16 %v1365, %v1357
    %v1838 = vpack.c.b16 %v1366, %v1358
    %v1839 = vpack.c.b16 %v1367, %v1359
    %v1840 = vpack.c.b16 %v1368, %v1360
    %v1841 = vpack.c.b16 %v1369, %v1361
    %v1842 = vpack.c.b16 %v1370, %v1362
    %v1843 = vpack.c.b16 %v1379, %v1371
    %v1844 = vpack.c.b16 %v1380, %v1372
    %v1845 = vpack.c.b16 %v1381, %v1373
    %v1846 = vpack.c.b16 %v1382, %v1374
    %v1847 = vpack.c.b16 %v1383, %v1375
    %v1848 = vpack.c.b16 %v1384, %v1376
    %v1849 = vpack.c.b16 %v1385, %v1377
    %v1850 = vpack.c.b16 %v1386, %v1378
    %v1851 = vpack.c.b16 %v1395, %v1387
    %v1852 = vpack.c.b16 %v1396, %v1388
    %v1853 = vpack.c.b16 %v1397, %v1389
    %v1854 = vpack.c.b16 %v1398, %v1390
    %v1855 = vpack.c.b16 %v1399, %v1391
    %v1856 = vpack.c.b16 %v1400, %v1392
    %v1857 = vpack.c.b16 %v1401, %v1393
    %v1858 = vpack.c.b16 %v1402, %v1394
    %v1859 = vpack.c.b16 %v1411, %v1403
    %v1860 = vpack.c.b16 %v1412, %v1404
    %v1861 = vpack.c.b16 %v1413, %v1405
    %v1862 = vpack.c.b16 %v1414, %v1406
    %v1863 = vpack.c.b16 %v1415, %v1407
    %v1864 = vpack.c.b16 %v1416, %v1408
    %v1865 = vpack.c.b16 %v1417, %v1409
    %v1866 = vpack.c.b16 %v1418, %v1410
    %v1867 = vpack.c.b16 %v1427, %v1419
    %v1868 = vpack.c.b16 %v1428, %v1420
    %v1869 = vpack.c.b16 %v1429, %v1421
    %v1870 = vpack.c.b16 %v1430, %v1422
    %v1871 = vpack.c.b16 %v1431, %v1423
    %v1872 = vpack.c.b16 %v1432, %v1424
    %v1873 = vpack.c.b16 %v1433, %v1425
    %v1874 = vpack.c.b16 %v1434, %v1426
    %v1875 = vpack.c.b16 %v1443, %v1435
    %v1876 = vpack.c.b16 %v1444, %v1436
    %v1877 = vpack.c.b16 %v1445, %v1437
    %v1878 = vpack.c.b16 %v1446, %v1438
    %v1879 = vpack.c.b16 %v1447, %v1439
    %v1880 = vpack.c.b16 %v1448, %v1440
    %v1881 = vpack.c.b16 %v1449, %v1441
    %v1882 = vpack.c.b16 %v1450, %v1442
    %v1883 = vpack.c.b16 %v1459, %v1451
    %v1884 = vpack.c.b16 %v1460, %v1452
    %v1885 = vpack.c.b16 %v1461, %v1453
    %v1886 = vpack.c.b16 %v1462, %v1454
    %v1887 = vpack.c.b16 %v1463, %v1455
    %v1888 = vpack.c.b16 %v1464, %v1456
    %v1889 = vpack.c.b16 %v1465, %v1457
    %v1890 = vpack.c.b16 %v1466, %v1458
    %v1891 = vpack.c.b16 %v1475, %v1467
    %v1892 = vpack.c.b16 %v1476, %v1468
    %v1893 = vpack.c.b16 %v1477, %v1469
    %v1894 = vpack.c.b16 %v1478, %v1470
    %v1895 = vpack.c.b16 %v1479, %v1471
    %v1896 = vpack.c.b16 %v1480, %v1472
    %v1897 = vpack.c.b16 %v1481, %v1473
    %v1898 = vpack.c.b16 %v1482, %v1474
    %v1899 = vpack.c.b16 %v1491, %v1483
    %v1900 = vpack.c.b16 %v1492, %v1484
    %v1901 = vpack.c.b16 %v1493, %v1485
    %v1902 = vpack.c.b16 %v1494, %v1486
    %v1903 = vpack.c.b16 %v1495, %v1487
    %v1904 = vpack.c.b16 %v1496, %v1488
    %v1905 = vpack.c.b16 %v1497, %v1489
    %v1906 = vpack.c.b16 %v1498, %v1490
    %v1907 = vpack.c.b16 %v1507, %v1499
    %v1908 = vpack.c.b16 %v1508, %v1500
    %v1909 = vpack.c.b16 %v1509, %v1501
    %v1910 = vpack.c.b16 %v1510, %v1502
    %v1911 = vpack.c.b16 %v1511, %v1503
    %v1912 = vpack.c.b16 %v1512, %v1504
    %v1913 = vpack.c.b16 %v1513, %v1505
    %v1914 = vpack.c.b16 %v1514, %v1506
    %v1915 = vpack.c.b16 %v1523, %v1515
    %v1916 = vpack.c.b16 %v1524, %v1516
    %v1917 = vpack.c.b16 %v1525, %v1517
    %v1918 = vpack.c.b16 %v1526, %v1518
    %v1919 = vpack.c.b16 %v1527, %v1519
    %v1920 = vpack.c.b16 %v1528, %v1520
    %v1921 = vpack.c.b16 %v1529, %v1521
    %v1922 = vpack.c.b16 %v1530, %v1522
    %v1923 = vpack.c.b16 %v1539, %v1531
    %v1924 = vpack.c.b16 %v1540, %v1532
    %v1925 = vpack.c.b16 %v1541, %v1533
    %v1926 = vpack.c.b16 %v1542, %v1534
    %v1927 = vpack.c.b16 %v1543, %v1535
    %v1928 = vpack.c.b16 %v1544, %v1536
    %v1929 = vpack.c.b16 %v1545, %v1537
    %v1930 = vpack.c.b16 %v1546, %v1538
    %v1931 = vpack.c.b16 %v1555, %v1547
    %v1932 = vpack.c.b16 %v1556, %v1548
    %v1933 = vpack.c.b16 %v1557, %v1549
    %v1934 = vpack.c.b16 %v1558, %v1550
    %v1935 = vpack.c.b16 %v1559, %v1551
    %v1936 = vpack.c.b16 %v1560, %v1552
    %v1937 = vpack.c.b16 %v1561, %v1553
    %v1938 = vpack.c.b16 %v1562, %v1554
    %v1939 = vpack.c.b16 %v1571, %v1563
    %v1940 = vpack.c.b16 %v1572, %v1564
    %v1941 = vpack.c.b16 %v1573, %v1565
    %v1942 = vpack.c.b16 %v1574, %v1566
    %v1943 = vpack.c.b16 %v1575, %v1567
    %v1944 = vpack.c.b16 %v1576, %v1568
    %v1945 = vpack.c.b16 %v1577, %v1569
    %v1946 = vpack.c.b16 %v1578, %v1570
    %v1947 = vpack.c.b16 %v1587, %v1579
    %v1948 = vpack.c.b16 %v1588, %v1580
    %v1949 = vpack.c.b16 %v1589, %v1581
    %v1950 = vpack.c.b16 %v1590, %v1582
    %v1951 = vpack.c.b16 %v1591, %v1583
    %v1952 = vpack.c.b16 %v1592, %v1584
    %v1953 = vpack.c.b16 %v1593, %v1585
    %v1954 = vpack.c.b16 %v1594, %v1586
    %v1955 = vpack.c.b16 %v1603, %v1595
    %v1956 = vpack.c.b16 %v1604, %v1596
    %v1957 = vpack.c.b16 %v1605, %v1597
    %v1958 = vpack.c.b16 %v1606, %v1598
    %v1959 = vpack.c.b16 %v1607, %v1599
    %v1960 = vpack.c.b16 %v1608, %v1600
    %v1961 = vpack.c.b16 %v1609, %v1601
    %v1962 = vpack.c.b16 %v1610, %v1602
    %v1963 = vpack.c.b16 %v1619, %v1611
    %v1964 = vpack.c.b16 %v1620, %v1612
    %v1965 = vpack.c.b16 %v1621, %v1613
    %v1966 = vpack.c.b16 %v1622, %v1614
    %v1967 = vpack.c.b16 %v1623, %v1615
    %v1968 = vpack.c.b16 %v1624, %v1616
    %v1969 = vpack.c.b16 %v1625, %v1617
    %v1970 = vpack.c.b16 %v1626, %v1618
    %v1971 = vpack.c.b16 %v1635, %v1627
    %v1972 = vpack.c.b16 %v1636, %v1628
    %v1973 = vpack.c.b16 %v1637, %v1629
    %v1974 = vpack.c.b16 %v1638, %v1630
    %v1975 = vpack.c.b16 %v1639, %v1631
    %v1976 = vpack.c.b16 %v1640, %v1632
    %v1977 = vpack.c.b16 %v1641, %v1633
    %v1978 = vpack.c.b16 %v1642, %v1634
    %v1979 = vpack.c.b16 %v1651, %v1643
    %v1980 = vpack.c.b16 %v1652, %v1644
    %v1981 = vpack.c.b16 %v1653, %v1645
    %v1982 = vpack.c.b16 %v1654, %v1646
    %v1983 = vpack.c.b16 %v1655, %v1647
    %v1984 = vpack.c.b16 %v1656, %v1648
    %v1985 = vpack.c.b16 %v1657, %v1649
    %v1986 = vpack.c.b16 %v1658, %v1650
    %v1987 = vpack.c.b16 %v1667, %v1659
    %v1988 = vpack.c.b16 %v1668, %v1660
    %v1989 = vpack.c.b16 %v1669, %v1661
    %v1990 = vpack.c.b16 %v1670, %v1662
    %v1991 = vpack.c.b16 %v1671, %v1663
    %v1992 = vpack.c.b16 %v1672, %v1664
    %v1993 = vpack.c.b16 %v1673, %v1665
    %v1994 = vpack.c.b16 %v1674, %v1666
    %v1995 = vpack.c.b16 %v1683, %v1675
    %v1996 = vpack.c.b16 %v1684, %v1676
    %v1997 = vpack.c.b16 %v1685, %v1677
    %v1998 = vpack.c.b16 %v1686, %v1678
    %v1999 = vpack.c.b16 %v1687, %v1679
    %v2000 = vpack.c.b16 %v1688, %v1680
    %v2001 = vpack.c.b16 %v1689, %v1681
    %v2002 = vpack.c.b16 %v1690, %v1682
    %v2003 = vpack.c.b16 %v1699, %v1691
    %v2004 = vpack.c.b16 %v1700, %v1692
    %v2005 = vpack.c.b16 %v1701, %v1693
    %v2006 = vpack.c.b16 %v1702, %v1694
    %v2007 = vpack.c.b16 %v1703, %v1695
    %v2008 = vpack.c.b16 %v1704, %v1696
    %v2009 = vpack.c.b16 %v1705, %v1697
    %v2010 = vpack.c.b16 %v1706, %v1698
    %v2011 = vpack.c.b16 %v1715, %v1707
    %v2012 = vpack.c.b16 %v1716, %v1708
    %v2013 = vpack.c.b16 %v1717, %v1709
    %v2014 = vpack.c.b16 %v1718, %v1710
    %v2015 = vpack.c.b16 %v1719, %v1711
    %v2016 = vpack.c.b16 %v1720, %v1712
    %v2017 = vpack.c.b16 %v1721, %v1713
    %v2018 = vpack.c.b16 %v1722, %v1714
    %v2019 = vpack.c.b16 %v1731, %v1723
    %v2020 = vpack.c.b16 %v1732, %v1724
    %v2021 = vpack.c.b16 %v1733, %v1725
    %v2022 = vpack.c.b16 %v1734, %v1726
    %v2023 = vpack.c.b16 %v1735, %v1727
    %v2024 = vpack.c.b16 %v1736, %v1728
    %v2025 = vpack.c.b16 %v1737, %v1729
    %v2026 = vpack.c.b16 %v1738, %v1730
    %vm2315 = vcmask 523264
    %v2317 = vsel %vm2315, %v544, 0
    %2319 = vmatprep.subr.bf16.mxu0 %v1740
    %2320 = vmatpush1.bf16.msra.mxu0 %v1739
    %2321 = vmatprep.subr.bf16.mxu0 %v1748
    %2322 = vmatpush1.bf16.msra.mxu0 %v1747
    %2323 = vmatprep.subr.bf16.mxu0 %v1756
    %2324 = vmatpush1.bf16.msra.mxu0 %v1755
    %2325 = vmatprep.subr.bf16.mxu0 %v1764
    %2326 = vmatpush1.bf16.msra.mxu0 %v1763
    %2327 = vmatprep.subr.bf16.mxu0 %v1772
    %2328 = vmatpush1.bf16.msra.mxu0 %v1771
    %2329 = vmatprep.subr.bf16.mxu0 %v1780
    %2330 = vmatpush1.bf16.msra.mxu0 %v1779
    %2331 = vmatprep.subr.bf16.mxu0 %v1788
    %2332 = vmatpush1.bf16.msra.mxu0 %v1787
    %2333 = vmatprep.subr.bf16.mxu0 %v1796
    %2334 = vmatpush1.bf16.msra.mxu0 %v1795
    %2335 = vmatprep.subr.bf16.mxu0 %v1804
    %2336 = vmatpush1.bf16.msra.mxu0 %v1803
    %2337 = vmatprep.subr.bf16.mxu0 %v1812
    %2338 = vmatpush1.bf16.msra.mxu0 %v1811
    %2339 = vmatprep.subr.bf16.mxu0 %v1820
    %2340 = vmatpush1.bf16.msra.mxu0 %v1819
    %2341 = vmatprep.subr.bf16.mxu0 %v1828
    %2342 = vmatpush1.bf16.msra.mxu0 %v1827
    %2343 = vmatprep.subr.bf16.mxu0 %v1836
    %2344 = vmatpush1.bf16.msra.mxu0 %v1835
    %2345 = vmatprep.subr.bf16.mxu0 %v1844
    %2346 = vmatpush1.bf16.msra.mxu0 %v1843
    %2347 = vmatprep.subr.bf16.mxu0 %v1852
    %2348 = vmatpush1.bf16.msra.mxu0 %v1851
    %2349 = vmatprep.subr.bf16.mxu0 %v1860
    %2350 = vmatpush1.bf16.msra.mxu0 %v1859
    %2351 = vmatprep.mubr.bf16.mxu0 %v541
    %2352 = vmatmul.mubr.bf16.gmra.mrb[0].mxu0 %v540
    %v2353 = vpop.f32.mrb[0].mxu0
    %v2354 = vadd.f32 %v838, %v2353
    %v2355 = vpop.f32.mrb[0].mxu0
    %v2356 = vadd.f32 %v842, %v2355
    %v2357 = vpop.f32.mrb[0].mxu0
    %v2358 = vpop.f32.mrb[0].mxu0
    %2359 = vdwg.mxu0
    %2360 = vmatprep.subr.bf16.mxu0 %v1868
    %2361 = vmatpush1.bf16.msra.mxu0 %v1867
    %2362 = vmatprep.subr.bf16.mxu0 %v1876
    %2363 = vmatpush1.bf16.msra.mxu0 %v1875
    %2364 = vmatprep.subr.bf16.mxu0 %v1884
    %2365 = vmatpush1.bf16.msra.mxu0 %v1883
    %2366 = vmatprep.subr.bf16.mxu0 %v1892
    %2367 = vmatpush1.bf16.msra.mxu0 %v1891
    %2368 = vmatprep.subr.bf16.mxu0 %v1900
    %2369 = vmatpush1.bf16.msra.mxu0 %v1899
    %2370 = vmatprep.subr.bf16.mxu0 %v1908
    %2371 = vmatpush1.bf16.msra.mxu0 %v1907
    %2372 = vmatprep.subr.bf16.mxu0 %v1916
    %2373 = vmatpush1.bf16.msra.mxu0 %v1915
    %2374 = vmatprep.subr.bf16.mxu0 %v1924
    %2375 = vmatpush1.bf16.msra.mxu0 %v1923
    %2376 = vmatprep.subr.bf16.mxu0 %v1932
    %2377 = vmatpush1.bf16.msra.mxu0 %v1931
    %2378 = vmatprep.subr.bf16.mxu0 %v1940
    %2379 = vmatpush1.bf16.msra.mxu0 %v1939
    %2380 = vmatprep.subr.bf16.mxu0 %v1948
    %2381 = vmatpush1.bf16.msra.mxu0 %v1947
    %2382 = vmatprep.subr.bf16.mxu0 %v1956
    %2383 = vmatpush1.bf16.msra.mxu0 %v1955
    %2384 = vmatprep.subr.bf16.mxu0 %v1964
    %2385 = vmatpush1.bf16.msra.mxu0 %v1963
    %2386 = vmatprep.subr.bf16.mxu0 %v1972
    %2387 = vmatpush1.bf16.msra.mxu0 %v1971
    %2388 = vmatprep.subr.bf16.mxu0 %v1980
    %2389 = vmatpush1.bf16.msra.mxu0 %v1979
    %2390 = vmatprep.subr.bf16.mxu0 %v1988
    %2391 = vmatpush1.bf16.msra.mxu0 %v1987
    %2392 = vmatprep.mubr.bf16.mxu0 %v543
    %2393 = vmatmul.mubr.bf16.gmra.mrb[0].mxu0 %v542
    %v2394 = vpop.f32.mrb[0].mxu0
    %v2395 = vadd.f32 %v2354, %v2394
    %v2396 = vpop.f32.mrb[0].mxu0
    %v2397 = vadd.f32 %v2356, %v2396
    %v2398 = vpop.f32.mrb[0].mxu0
    %v2399 = vpop.f32.mrb[0].mxu0
    %2400 = vdwg.mxu0
    %2401 = vmatprep.subr.bf16.mxu0 %v1996
    %2402 = vmatpush1.bf16.msra.mxu0 %v1995
    %2403 = vmatprep.subr.bf16.mxu0 %v2004
    %2404 = vmatpush1.bf16.msra.mxu0 %v2003
    %2405 = vmatprep.subr.bf16.mxu0 %v2012
    %2406 = vmatpush1.bf16.msra.mxu0 %v2011
    %2407 = vmatprep.subr.bf16.mxu0 %v2020
    %2408 = vmatpush1.bf16.msra.mxu0 %v2019
    %2409 = vmatprep.subr.bf16.mxu0 0
    %2410 = vmatpush1.bf16.msra.mxu0 0
    %2411 = vmatprep.subr.bf16.mxu0 0
    %2412 = vmatpush1.bf16.msra.mxu0 0
    %2413 = vmatprep.subr.bf16.mxu0 0
    %2414 = vmatpush1.bf16.msra.mxu0 0
    %2415 = vmatprep.subr.bf16.mxu0 0
    %2416 = vmatpush1.bf16.msra.mxu0 0
    %2417 = vmatprep.subr.bf16.mxu0 0
    %2418 = vmatpush1.bf16.msra.mxu0 0
    %2419 = vmatprep.subr.bf16.mxu0 0
    %2420 = vmatpush1.bf16.msra.mxu0 0
    %2421 = vmatprep.subr.bf16.mxu0 0
    %2422 = vmatpush1.bf16.msra.mxu0 0
    %2423 = vmatprep.subr.bf16.mxu0 0
    %2424 = vmatpush1.bf16.msra.mxu0 0
    %2425 = vmatprep.subr.bf16.mxu0 0
    %2426 = vmatpush1.bf16.msra.mxu0 0
    %2427 = vmatprep.subr.bf16.mxu0 0
    %2428 = vmatpush1.bf16.msra.mxu0 0
    %2429 = vmatprep.subr.bf16.mxu0 0
    %2430 = vmatpush1.bf16.msra.mxu0 0
    %2431 = vmatprep.subr.bf16.mxu0 0
    %2432 = vmatpush1.bf16.msra.mxu0 0
    %2433 = vmatprep.mubr.bf16.mxu0 0
    %2434 = vmatmul.mubr.bf16.gmra.mrb[0].mxu0 %v2317
    %v2435 = vpop.f32.mrb[0].mxu0
    %v2436 = vadd.f32 %v2395, %v2435
    %v2437 = vpop.f32.mrb[0].mxu0
    %v2438 = vadd.f32 %v2397, %v2437
    %v2439 = vpop.f32.mrb[0].mxu0
    %v2440 = vpop.f32.mrb[0].mxu0
    %2441 = vdwg.mxu0
    %2442 = vmatprep.subr.bf16.mxu0 %v1742
    %2443 = vmatpush1.bf16.msra.mxu0 %v1741
    %2444 = vmatprep.subr.bf16.mxu0 %v1750
    %2445 = vmatpush1.bf16.msra.mxu0 %v1749
    %2446 = vmatprep.subr.bf16.mxu0 %v1758
    %2447 = vmatpush1.bf16.msra.mxu0 %v1757
    %2448 = vmatprep.subr.bf16.mxu0 %v1766
    %2449 = vmatpush1.bf16.msra.mxu0 %v1765
    %2450 = vmatprep.subr.bf16.mxu0 %v1774
    %2451 = vmatpush1.bf16.msra.mxu0 %v1773
    %2452 = vmatprep.subr.bf16.mxu0 %v1782
    %2453 = vmatpush1.bf16.msra.mxu0 %v1781
    %2454 = vmatprep.subr.bf16.mxu0 %v1790
    %2455 = vmatpush1.bf16.msra.mxu0 %v1789
    %2456 = vmatprep.subr.bf16.mxu0 %v1798
    %2457 = vmatpush1.bf16.msra.mxu0 %v1797
    %2458 = vmatprep.subr.bf16.mxu0 %v1806
    %2459 = vmatpush1.bf16.msra.mxu0 %v1805
    %2460 = vmatprep.subr.bf16.mxu0 %v1814
    %2461 = vmatpush1.bf16.msra.mxu0 %v1813
    %2462 = vmatprep.subr.bf16.mxu0 %v1822
    %2463 = vmatpush1.bf16.msra.mxu0 %v1821
    %2464 = vmatprep.subr.bf16.mxu0 %v1830
    %2465 = vmatpush1.bf16.msra.mxu0 %v1829
    %2466 = vmatprep.subr.bf16.mxu0 %v1838
    %2467 = vmatpush1.bf16.msra.mxu0 %v1837
    %2468 = vmatprep.subr.bf16.mxu0 %v1846
    %2469 = vmatpush1.bf16.msra.mxu0 %v1845
    %2470 = vmatprep.subr.bf16.mxu0 %v1854
    %2471 = vmatpush1.bf16.msra.mxu0 %v1853
    %2472 = vmatprep.subr.bf16.mxu0 %v1862
    %2473 = vmatpush1.bf16.msra.mxu0 %v1861
    %2474 = vmatprep.mubr.bf16.mxu0 %v541
    %2475 = vmatmul.mubr.bf16.gmra.mrb[0].mxu0 %v540
    %v2476 = vpop.f32.mrb[0].mxu0
    %v2477 = vadd.f32 %v846, %v2476
    %v2478 = vpop.f32.mrb[0].mxu0
    %v2479 = vadd.f32 %v850, %v2478
    %v2480 = vpop.f32.mrb[0].mxu0
    %v2481 = vpop.f32.mrb[0].mxu0
    %2482 = vdwg.mxu0
    %2483 = vmatprep.subr.bf16.mxu0 %v1870
    %2484 = vmatpush1.bf16.msra.mxu0 %v1869
    %2485 = vmatprep.subr.bf16.mxu0 %v1878
    %2486 = vmatpush1.bf16.msra.mxu0 %v1877
    %2487 = vmatprep.subr.bf16.mxu0 %v1886
    %2488 = vmatpush1.bf16.msra.mxu0 %v1885
    %2489 = vmatprep.subr.bf16.mxu0 %v1894
    %2490 = vmatpush1.bf16.msra.mxu0 %v1893
    %2491 = vmatprep.subr.bf16.mxu0 %v1902
    %2492 = vmatpush1.bf16.msra.mxu0 %v1901
    %2493 = vmatprep.subr.bf16.mxu0 %v1910
    %2494 = vmatpush1.bf16.msra.mxu0 %v1909
    %2495 = vmatprep.subr.bf16.mxu0 %v1918
    %2496 = vmatpush1.bf16.msra.mxu0 %v1917
    %2497 = vmatprep.subr.bf16.mxu0 %v1926
    %2498 = vmatpush1.bf16.msra.mxu0 %v1925
    %2499 = vmatprep.subr.bf16.mxu0 %v1934
    %2500 = vmatpush1.bf16.msra.mxu0 %v1933
    %2501 = vmatprep.subr.bf16.mxu0 %v1942
    %2502 = vmatpush1.bf16.msra.mxu0 %v1941
    %2503 = vmatprep.subr.bf16.mxu0 %v1950
    %2504 = vmatpush1.bf16.msra.mxu0 %v1949
    %2505 = vmatprep.subr.bf16.mxu0 %v1958
    %2506 = vmatpush1.bf16.msra.mxu0 %v1957
    %2507 = vmatprep.subr.bf16.mxu0 %v1966
    %2508 = vmatpush1.bf16.msra.mxu0 %v1965
    %2509 = vmatprep.subr.bf16.mxu0 %v1974
    %2510 = vmatpush1.bf16.msra.mxu0 %v1973
    %2511 = vmatprep.subr.bf16.mxu0 %v1982
    %2512 = vmatpush1.bf16.msra.mxu0 %v1981
    %2513 = vmatprep.subr.bf16.mxu0 %v1990
    %2514 = vmatpush1.bf16.msra.mxu0 %v1989
    %2515 = vmatprep.mubr.bf16.mxu0 %v543
    %2516 = vmatmul.mubr.bf16.gmra.mrb[0].mxu0 %v542
    %v2517 = vpop.f32.mrb[0].mxu0
    %v2518 = vadd.f32 %v2477, %v2517
    %v2519 = vpop.f32.mrb[0].mxu0
    %v2520 = vadd.f32 %v2479, %v2519
    %v2521 = vpop.f32.mrb[0].mxu0
    %v2522 = vpop.f32.mrb[0].mxu0
    %2523 = vdwg.mxu0
    %2524 = vmatprep.subr.bf16.mxu0 %v1998
    %2525 = vmatpush1.bf16.msra.mxu0 %v1997
    %2526 = vmatprep.subr.bf16.mxu0 %v2006
    %2527 = vmatpush1.bf16.msra.mxu0 %v2005
    %2528 = vmatprep.subr.bf16.mxu0 %v2014
    %2529 = vmatpush1.bf16.msra.mxu0 %v2013
    %2530 = vmatprep.subr.bf16.mxu0 %v2022
    %2531 = vmatpush1.bf16.msra.mxu0 %v2021
    %2532 = vmatprep.subr.bf16.mxu0 0
    %2533 = vmatpush1.bf16.msra.mxu0 0
    %2534 = vmatprep.subr.bf16.mxu0 0
    %2535 = vmatpush1.bf16.msra.mxu0 0
    %2536 = vmatprep.subr.bf16.mxu0 0
    %2537 = vmatpush1.bf16.msra.mxu0 0
    %2538 = vmatprep.subr.bf16.mxu0 0
    %2539 = vmatpush1.bf16.msra.mxu0 0
    %2540 = vmatprep.subr.bf16.mxu0 0
    %2541 = vmatpush1.bf16.msra.mxu0 0
    %2542 = vmatprep.subr.bf16.mxu0 0
    %2543 = vmatpush1.bf16.msra.mxu0 0
    %2544 = vmatprep.subr.bf16.mxu0 0
    %2545 = vmatpush1.bf16.msra.mxu0 0
    %2546 = vmatprep.subr.bf16.mxu0 0
    %2547 = vmatpush1.bf16.msra.mxu0 0
    %2548 = vmatprep.subr.bf16.mxu0 0
    %2549 = vmatpush1.bf16.msra.mxu0 0
    %2550 = vmatprep.subr.bf16.mxu0 0
    %2551 = vmatpush1.bf16.msra.mxu0 0
    %2552 = vmatprep.subr.bf16.mxu0 0
    %2553 = vmatpush1.bf16.msra.mxu0 0
    %2554 = vmatprep.subr.bf16.mxu0 0
    %2555 = vmatpush1.bf16.msra.mxu0 0
    %2556 = vmatprep.mubr.bf16.mxu0 0
    %2557 = vmatmul.mubr.bf16.gmra.mrb[0].mxu0 %v2317
    %v2558 = vpop.f32.mrb[0].mxu0
    %v2559 = vadd.f32 %v2518, %v2558
    %v2560 = vpop.f32.mrb[0].mxu0
    %v2561 = vadd.f32 %v2520, %v2560
    %v2562 = vpop.f32.mrb[0].mxu0
    %v2563 = vpop.f32.mrb[0].mxu0
    %2564 = vdwg.mxu0
    %2565 = vmatprep.subr.bf16.mxu0 %v1744
    %2566 = vmatpush1.bf16.msra.mxu0 %v1743
    %2567 = vmatprep.subr.bf16.mxu0 %v1752
    %2568 = vmatpush1.bf16.msra.mxu0 %v1751
    %2569 = vmatprep.subr.bf16.mxu0 %v1760
    %2570 = vmatpush1.bf16.msra.mxu0 %v1759
    %2571 = vmatprep.subr.bf16.mxu0 %v1768
    %2572 = vmatpush1.bf16.msra.mxu0 %v1767
    %2573 = vmatprep.subr.bf16.mxu0 %v1776
    %2574 = vmatpush1.bf16.msra.mxu0 %v1775
    %2575 = vmatprep.subr.bf16.mxu0 %v1784
    %2576 = vmatpush1.bf16.msra.mxu0 %v1783
    %2577 = vmatprep.subr.bf16.mxu0 %v1792
    %2578 = vmatpush1.bf16.msra.mxu0 %v1791
    %2579 = vmatprep.subr.bf16.mxu0 %v1800
    %2580 = vmatpush1.bf16.msra.mxu0 %v1799
    %2581 = vmatprep.subr.bf16.mxu0 %v1808
    %2582 = vmatpush1.bf16.msra.mxu0 %v1807
    %2583 = vmatprep.subr.bf16.mxu0 %v1816
    %2584 = vmatpush1.bf16.msra.mxu0 %v1815
    %2585 = vmatprep.subr.bf16.mxu0 %v1824
    %2586 = vmatpush1.bf16.msra.mxu0 %v1823
    %2587 = vmatprep.subr.bf16.mxu0 %v1832
    %2588 = vmatpush1.bf16.msra.mxu0 %v1831
    %2589 = vmatprep.subr.bf16.mxu0 %v1840
    %2590 = vmatpush1.bf16.msra.mxu0 %v1839
    %2591 = vmatprep.subr.bf16.mxu0 %v1848
    %2592 = vmatpush1.bf16.msra.mxu0 %v1847
    %2593 = vmatprep.subr.bf16.mxu0 %v1856
    %2594 = vmatpush1.bf16.msra.mxu0 %v1855
    %2595 = vmatprep.subr.bf16.mxu0 %v1864
    %2596 = vmatpush1.bf16.msra.mxu0 %v1863
    %2597 = vmatprep.mubr.bf16.mxu0 %v541
    %2598 = vmatmul.mubr.bf16.gmra.mrb[0].mxu0 %v540
    %v2599 = vpop.f32.mrb[0].mxu0
    %v2600 = vadd.f32 %v854, %v2599
    %v2601 = vpop.f32.mrb[0].mxu0
    %v2602 = vadd.f32 %v858, %v2601
    %v2603 = vpop.f32.mrb[0].mxu0
    %v2604 = vpop.f32.mrb[0].mxu0
    %2605 = vdwg.mxu0
    %2606 = vmatprep.subr.bf16.mxu0 %v1872
    %2607 = vmatpush1.bf16.msra.mxu0 %v1871
    %2608 = vmatprep.subr.bf16.mxu0 %v1880
    %2609 = vmatpush1.bf16.msra.mxu0 %v1879
    %2610 = vmatprep.subr.bf16.mxu0 %v1888
    %2611 = vmatpush1.bf16.msra.mxu0 %v1887
    %2612 = vmatprep.subr.bf16.mxu0 %v1896
    %2613 = vmatpush1.bf16.msra.mxu0 %v1895
    %2614 = vmatprep.subr.bf16.mxu0 %v1904
    %2615 = vmatpush1.bf16.msra.mxu0 %v1903
    %2616 = vmatprep.subr.bf16.mxu0 %v1912
    %2617 = vmatpush1.bf16.msra.mxu0 %v1911
    %2618 = vmatprep.subr.bf16.mxu0 %v1920
    %2619 = vmatpush1.bf16.msra.mxu0 %v1919
    %2620 = vmatprep.subr.bf16.mxu0 %v1928
    %2621 = vmatpush1.bf16.msra.mxu0 %v1927
    %2622 = vmatprep.subr.bf16.mxu0 %v1936
    %2623 = vmatpush1.bf16.msra.mxu0 %v1935
    %2624 = vmatprep.subr.bf16.mxu0 %v1944
    %2625 = vmatpush1.bf16.msra.mxu0 %v1943
    %2626 = vmatprep.subr.bf16.mxu0 %v1952
    %2627 = vmatpush1.bf16.msra.mxu0 %v1951
    %2628 = vmatprep.subr.bf16.mxu0 %v1960
    %2629 = vmatpush1.bf16.msra.mxu0 %v1959
    %2630 = vmatprep.subr.bf16.mxu0 %v1968
    %2631 = vmatpush1.bf16.msra.mxu0 %v1967
    %2632 = vmatprep.subr.bf16.mxu0 %v1976
    %2633 = vmatpush1.bf16.msra.mxu0 %v1975
    %2634 = vmatprep.subr.bf16.mxu0 %v1984
    %2635 = vmatpush1.bf16.msra.mxu0 %v1983
    %2636 = vmatprep.subr.bf16.mxu0 %v1992
    %2637 = vmatpush1.bf16.msra.mxu0 %v1991
    %2638 = vmatprep.mubr.bf16.mxu0 %v543
    %2639 = vmatmul.mubr.bf16.gmra.mrb[0].mxu0 %v542
    %v2640 = vpop.f32.mrb[0].mxu0
    %v2641 = vadd.f32 %v2600, %v2640
    %v2642 = vpop.f32.mrb[0].mxu0
    %v2643 = vadd.f32 %v2602, %v2642
    %v2644 = vpop.f32.mrb[0].mxu0
    %v2645 = vpop.f32.mrb[0].mxu0
    %2646 = vdwg.mxu0
    %2647 = vmatprep.subr.bf16.mxu0 %v2000
    %2648 = vmatpush1.bf16.msra.mxu0 %v1999
    %2649 = vmatprep.subr.bf16.mxu0 %v2008
    %2650 = vmatpush1.bf16.msra.mxu0 %v2007
    %2651 = vmatprep.subr.bf16.mxu0 %v2016
    %2652 = vmatpush1.bf16.msra.mxu0 %v2015
    %2653 = vmatprep.subr.bf16.mxu0 %v2024
    %2654 = vmatpush1.bf16.msra.mxu0 %v2023
    %2655 = vmatprep.subr.bf16.mxu0 0
    %2656 = vmatpush1.bf16.msra.mxu0 0
    %2657 = vmatprep.subr.bf16.mxu0 0
    %2658 = vmatpush1.bf16.msra.mxu0 0
    %2659 = vmatprep.subr.bf16.mxu0 0
    %2660 = vmatpush1.bf16.msra.mxu0 0
    %2661 = vmatprep.subr.bf16.mxu0 0
    %2662 = vmatpush1.bf16.msra.mxu0 0
    %2663 = vmatprep.subr.bf16.mxu0 0
    %2664 = vmatpush1.bf16.msra.mxu0 0
    %2665 = vmatprep.subr.bf16.mxu0 0
    %2666 = vmatpush1.bf16.msra.mxu0 0
    %2667 = vmatprep.subr.bf16.mxu0 0
    %2668 = vmatpush1.bf16.msra.mxu0 0
    %2669 = vmatprep.subr.bf16.mxu0 0
    %2670 = vmatpush1.bf16.msra.mxu0 0
    %2671 = vmatprep.subr.bf16.mxu0 0
    %2672 = vmatpush1.bf16.msra.mxu0 0
    %2673 = vmatprep.subr.bf16.mxu0 0
    %2674 = vmatpush1.bf16.msra.mxu0 0
    %2675 = vmatprep.subr.bf16.mxu0 0
    %2676 = vmatpush1.bf16.msra.mxu0 0
    %2677 = vmatprep.subr.bf16.mxu0 0
    %2678 = vmatpush1.bf16.msra.mxu0 0
    %2679 = vmatprep.mubr.bf16.mxu0 0
    %2680 = vmatmul.mubr.bf16.gmra.mrb[0].mxu0 %v2317
    %v2681 = vpop.f32.mrb[0].mxu0
    %v2682 = vadd.f32 %v2641, %v2681
    %v2683 = vpop.f32.mrb[0].mxu0
    %v2684 = vadd.f32 %v2643, %v2683
    %v2685 = vpop.f32.mrb[0].mxu0
    %v2686 = vpop.f32.mrb[0].mxu0
    %2687 = vdwg.mxu0
    %2688 = vmatprep.subr.bf16.mxu0 %v1746
    %2689 = vmatpush1.bf16.msra.mxu0 %v1745
    %2690 = vmatprep.subr.bf16.mxu0 %v1754
    %2691 = vmatpush1.bf16.msra.mxu0 %v1753
    %2692 = vmatprep.subr.bf16.mxu0 %v1762
    %2693 = vmatpush1.bf16.msra.mxu0 %v1761
    %2694 = vmatprep.subr.bf16.mxu0 %v1770
    %2695 = vmatpush1.bf16.msra.mxu0 %v1769
    %2696 = vmatprep.subr.bf16.mxu0 %v1778
    %2697 = vmatpush1.bf16.msra.mxu0 %v1777
    %2698 = vmatprep.subr.bf16.mxu0 %v1786
    %2699 = vmatpush1.bf16.msra.mxu0 %v1785
    %2700 = vmatprep.subr.bf16.mxu0 %v1794
    %2701 = vmatpush1.bf16.msra.mxu0 %v1793
    %2702 = vmatprep.subr.bf16.mxu0 %v1802
    %2703 = vmatpush1.bf16.msra.mxu0 %v1801
    %2704 = vmatprep.subr.bf16.mxu0 %v1810
    %2705 = vmatpush1.bf16.msra.mxu0 %v1809
    %2706 = vmatprep.subr.bf16.mxu0 %v1818
    %2707 = vmatpush1.bf16.msra.mxu0 %v1817
    %2708 = vmatprep.subr.bf16.mxu0 %v1826
    %2709 = vmatpush1.bf16.msra.mxu0 %v1825
    %2710 = vmatprep.subr.bf16.mxu0 %v1834
    %2711 = vmatpush1.bf16.msra.mxu0 %v1833
    %2712 = vmatprep.subr.bf16.mxu0 %v1842
    %2713 = vmatpush1.bf16.msra.mxu0 %v1841
    %2714 = vmatprep.subr.bf16.mxu0 %v1850
    %2715 = vmatpush1.bf16.msra.mxu0 %v1849
    %2716 = vmatprep.subr.bf16.mxu0 %v1858
    %2717 = vmatpush1.bf16.msra.mxu0 %v1857
    %2718 = vmatprep.subr.bf16.mxu0 %v1866
    %2719 = vmatpush1.bf16.msra.mxu0 %v1865
    %2720 = vmatprep.mubr.bf16.mxu0 %v541
    %2721 = vmatmul.mubr.bf16.gmra.mrb[0].mxu0 %v540
    %v2722 = vpop.f32.mrb[0].mxu0
    %v2723 = vadd.f32 %v862, %v2722
    %v2724 = vpop.f32.mrb[0].mxu0
    %v2725 = vadd.f32 %v866, %v2724
    %v2726 = vpop.f32.mrb[0].mxu0
    %v2727 = vpop.f32.mrb[0].mxu0
    %2728 = vdwg.mxu0
    %2729 = vmatprep.subr.bf16.mxu0 %v1874
    %2730 = vmatpush1.bf16.msra.mxu0 %v1873
    %2731 = vmatprep.subr.bf16.mxu0 %v1882
    %2732 = vmatpush1.bf16.msra.mxu0 %v1881
    %2733 = vmatprep.subr.bf16.mxu0 %v1890
    %2734 = vmatpush1.bf16.msra.mxu0 %v1889
    %2735 = vmatprep.subr.bf16.mxu0 %v1898
    %2736 = vmatpush1.bf16.msra.mxu0 %v1897
    %2737 = vmatprep.subr.bf16.mxu0 %v1906
    %2738 = vmatpush1.bf16.msra.mxu0 %v1905
    %2739 = vmatprep.subr.bf16.mxu0 %v1914
    %2740 = vmatpush1.bf16.msra.mxu0 %v1913
    %2741 = vmatprep.subr.bf16.mxu0 %v1922
    %2742 = vmatpush1.bf16.msra.mxu0 %v1921
    %2743 = vmatprep.subr.bf16.mxu0 %v1930
    %2744 = vmatpush1.bf16.msra.mxu0 %v1929
    %2745 = vmatprep.subr.bf16.mxu0 %v1938
    %2746 = vmatpush1.bf16.msra.mxu0 %v1937
    %2747 = vmatprep.subr.bf16.mxu0 %v1946
    %2748 = vmatpush1.bf16.msra.mxu0 %v1945
    %2749 = vmatprep.subr.bf16.mxu0 %v1954
    %2750 = vmatpush1.bf16.msra.mxu0 %v1953
    %2751 = vmatprep.subr.bf16.mxu0 %v1962
    %2752 = vmatpush1.bf16.msra.mxu0 %v1961
    %2753 = vmatprep.subr.bf16.mxu0 %v1970
    %2754 = vmatpush1.bf16.msra.mxu0 %v1969
    %2755 = vmatprep.subr.bf16.mxu0 %v1978
    %2756 = vmatpush1.bf16.msra.mxu0 %v1977
    %2757 = vmatprep.subr.bf16.mxu0 %v1986
    %2758 = vmatpush1.bf16.msra.mxu0 %v1985
    %2759 = vmatprep.subr.bf16.mxu0 %v1994
    %2760 = vmatpush1.bf16.msra.mxu0 %v1993
    %2761 = vmatprep.mubr.bf16.mxu0 %v543
    %2762 = vmatmul.mubr.bf16.gmra.mrb[0].mxu0 %v542
    %v2763 = vpop.f32.mrb[0].mxu0
    %v2764 = vadd.f32 %v2723, %v2763
    %v2765 = vpop.f32.mrb[0].mxu0
    %v2766 = vadd.f32 %v2725, %v2765
    %v2767 = vpop.f32.mrb[0].mxu0
    %v2768 = vpop.f32.mrb[0].mxu0
    %2769 = vdwg.mxu0
    %2770 = vmatprep.subr.bf16.mxu0 %v2002
    %2771 = vmatpush1.bf16.msra.mxu0 %v2001
    %2772 = vmatprep.subr.bf16.mxu0 %v2010
    %2773 = vmatpush1.bf16.msra.mxu0 %v2009
    %2774 = vmatprep.subr.bf16.mxu0 %v2018
    %2775 = vmatpush1.bf16.msra.mxu0 %v2017
    %2776 = vmatprep.subr.bf16.mxu0 %v2026
    %2777 = vmatpush1.bf16.msra.mxu0 %v2025
    %2778 = vmatprep.subr.bf16.mxu0 0
    %2779 = vmatpush1.bf16.msra.mxu0 0
    %2780 = vmatprep.subr.bf16.mxu0 0
    %2781 = vmatpush1.bf16.msra.mxu0 0
    %2782 = vmatprep.subr.bf16.mxu0 0
    %2783 = vmatpush1.bf16.msra.mxu0 0
    %2784 = vmatprep.subr.bf16.mxu0 0
    %2785 = vmatpush1.bf16.msra.mxu0 0
    %2786 = vmatprep.subr.bf16.mxu0 0
    %2787 = vmatpush1.bf16.msra.mxu0 0
    %2788 = vmatprep.subr.bf16.mxu0 0
    %2789 = vmatpush1.bf16.msra.mxu0 0
    %2790 = vmatprep.subr.bf16.mxu0 0
    %2791 = vmatpush1.bf16.msra.mxu0 0
    %2792 = vmatprep.subr.bf16.mxu0 0
    %2793 = vmatpush1.bf16.msra.mxu0 0
    %2794 = vmatprep.subr.bf16.mxu0 0
    %2795 = vmatpush1.bf16.msra.mxu0 0
    %2796 = vmatprep.subr.bf16.mxu0 0
    %2797 = vmatpush1.bf16.msra.mxu0 0
    %2798 = vmatprep.subr.bf16.mxu0 0
    %2799 = vmatpush1.bf16.msra.mxu0 0
    %2800 = vmatprep.subr.bf16.mxu0 0
    %2801 = vmatpush1.bf16.msra.mxu0 0
    %2802 = vmatprep.mubr.bf16.mxu0 0
    %2803 = vmatmul.mubr.bf16.gmra.mrb[0].mxu0 %v2317
    %v2804 = vpop.f32.mrb[0].mxu0
    %v2805 = vadd.f32 %v2764, %v2804
    %v2806 = vpop.f32.mrb[0].mxu0
    %v2807 = vadd.f32 %v2766, %v2806
    %v2808 = vpop.f32.mrb[0].mxu0
    %v2809 = vpop.f32.mrb[0].mxu0
    %2810 = vdwg.mxu0
    %v2811 = vmax.f32 %v2436, 0.0
    %v2812 = vmax.f32 %v2438, 0.0
    %v2813 = vmax.f32 %v2559, 0.0
    %v2814 = vmax.f32 %v2561, 0.0
    %v2815 = vmax.f32 %v2682, 0.0
    %v2816 = vmax.f32 %v2684, 0.0
    %v2817 = vmax.f32 %v2805, 0.0
    %v2818 = vmax.f32 %v2807, 0.0
    %v2819 = vpack.c.bf16 %v2811, %v2811
    %v2820 = vpack.c.bf16 %v2812, %v2812
    %v2821 = vpack.c.bf16 %v2813, %v2813
    %v2822 = vpack.c.bf16 %v2814, %v2814
    %v2823 = vpack.c.bf16 %v2815, %v2815
    %v2824 = vpack.c.bf16 %v2816, %v2816
    %v2825 = vpack.c.bf16 %v2817, %v2817
    %v2826 = vpack.c.bf16 %v2818, %v2818
    %v2827 = vld [vmem:[#allocation10] sm:$0xff]
    %v2828 = vld [vmem:[#allocation10 + $0x8] sm:$0xff]
    %v2829 = vld [vmem:[#allocation10 + $0x10] sm:$0xff]
    %v2830 = vld [vmem:[#allocation10 + $0x18] sm:$0xff]
    %v2831 = vld [vmem:[#allocation10 + $0x20] sm:$0xff]
    %v2832 = vld [vmem:[#allocation10 + $0x28] sm:$0xff]
    %v2833 = vld [vmem:[#allocation10 + $0x30] sm:$0xff]
    %v2834 = vld [vmem:[#allocation10 + $0x38] sm:$0xff]
    %v2835 = vld [vmem:[#allocation10 + $0x40] sm:$0xff]
    %v2836 = vld [vmem:[#allocation10 + $0x48] sm:$0xff]
    %v2837 = vld [vmem:[#allocation10 + $0x50] sm:$0xff]
    %v2838 = vld [vmem:[#allocation10 + $0x58] sm:$0xff]
    %v2839 = vld [vmem:[#allocation10 + $0x60] sm:$0xff]
    %v2840 = vld [vmem:[#allocation10 + $0x68] sm:$0xff]
    %v2841 = vld [vmem:[#allocation10 + $0x70] sm:$0xff]
    %v2842 = vld [vmem:[#allocation10 + $0x78] sm:$0xff]
    %v2843 = vld [vmem:[#allocation10 + $0x80] sm:$0xff]
    %v2844 = vld [vmem:[#allocation10 + $0x88] sm:$0xff]
    %v2845 = vld [vmem:[#allocation10 + $0x90] sm:$0xff]
    %v2846 = vld [vmem:[#allocation10 + $0x98] sm:$0xff]
    %v2847 = vld [vmem:[#allocation10 + $0xa0] sm:$0xff]
    %v2848 = vld [vmem:[#allocation10 + $0xa8] sm:$0xff]
    %v2849 = vld [vmem:[#allocation10 + $0xb0] sm:$0xff]
    %v2850 = vld [vmem:[#allocation10 + $0xb8] sm:$0xff]
    %v2851 = vld [vmem:[#allocation10 + $0xc0] sm:$0xff]
    %v2852 = vld [vmem:[#allocation10 + $0xc8] sm:$0xff]
    %v2853 = vld [vmem:[#allocation10 + $0xd0] sm:$0xff]
    %v2854 = vld [vmem:[#allocation10 + $0xd8] sm:$0xff]
    %v2855 = vld [vmem:[#allocation10 + $0xe0] sm:$0xff]
    %v2856 = vld [vmem:[#allocation10 + $0xe8] sm:$0xff]
    %v2857 = vld [vmem:[#allocation10 + $0xf0] sm:$0xff]
    %v2858 = vld [vmem:[#allocation10 + $0xf8] sm:$0xff]
    %v2859 = vld [vmem:[#allocation10 + $0x100] sm:$0xff]
    %v2860 = vld [vmem:[#allocation10 + $0x108] sm:$0xff]
    %v2861 = vld [vmem:[#allocation10 + $0x110] sm:$0xff]
    %v2862 = vld [vmem:[#allocation10 + $0x118] sm:$0xff]
    %v2863 = vld [vmem:[#allocation10 + $0x120] sm:$0xff]
    %v2864 = vld [vmem:[#allocation10 + $0x128] sm:$0xff]
    %v2865 = vld [vmem:[#allocation10 + $0x130] sm:$0xff]
    %v2866 = vld [vmem:[#allocation10 + $0x138] sm:$0xff]
    %v2867 = vld [vmem:[#allocation10 + $0x140] sm:$0xff]
    %v2868 = vld [vmem:[#allocation10 + $0x148] sm:$0xff]
    %v2869 = vld [vmem:[#allocation10 + $0x150] sm:$0xff]
    %v2870 = vld [vmem:[#allocation10 + $0x158] sm:$0xff]
    %v2871 = vld [vmem:[#allocation10 + $0x160] sm:$0xff]
    %v2872 = vld [vmem:[#allocation10 + $0x168] sm:$0xff]
    %v2873 = vld [vmem:[#allocation10 + $0x170] sm:$0xff]
    %v2874 = vld [vmem:[#allocation10 + $0x178] sm:$0xff]
    %v2875 = vld [vmem:[#allocation10 + $0x180] sm:$0xff]
    %v2876 = vld [vmem:[#allocation10 + $0x188] sm:$0xff]
    %v2877 = vld [vmem:[#allocation10 + $0x190] sm:$0xff]
    %v2878 = vld [vmem:[#allocation10 + $0x198] sm:$0xff]
    %v2879 = vld [vmem:[#allocation10 + $0x1a0] sm:$0xff]
    %v2880 = vld [vmem:[#allocation10 + $0x1a8] sm:$0xff]
    %v2881 = vld [vmem:[#allocation10 + $0x1b0] sm:$0xff]
    %v2882 = vld [vmem:[#allocation10 + $0x1b8] sm:$0xff]
    %v2883 = vld [vmem:[#allocation10 + $0x1c0] sm:$0xff]
    %v2884 = vld [vmem:[#allocation10 + $0x1c8] sm:$0xff]
    %v2885 = vld [vmem:[#allocation10 + $0x1d0] sm:$0xff]
    %v2886 = vld [vmem:[#allocation10 + $0x1d8] sm:$0xff]
    %v2887 = vld [vmem:[#allocation10 + $0x1e0] sm:$0xff]
    %v2888 = vld [vmem:[#allocation10 + $0x1e8] sm:$0xff]
    %v2889 = vld [vmem:[#allocation10 + $0x1f0] sm:$0xff]
    %v2890 = vld [vmem:[#allocation10 + $0x1f8] sm:$0xff]
    %v2891 = vld [vmem:[#allocation10 + $0x200] sm:$0xff]
    %v2892 = vld [vmem:[#allocation10 + $0x208] sm:$0xff]
    %v2893 = vld [vmem:[#allocation10 + $0x210] sm:$0xff]
    %v2894 = vld [vmem:[#allocation10 + $0x218] sm:$0xff]
    %v2895 = vld [vmem:[#allocation10 + $0x220] sm:$0xff]
    %v2896 = vld [vmem:[#allocation10 + $0x228] sm:$0xff]
    %v2897 = vld [vmem:[#allocation10 + $0x230] sm:$0xff]
    %v2898 = vld [vmem:[#allocation10 + $0x238] sm:$0xff]
    %v2899 = vld [vmem:[#allocation10 + $0x240] sm:$0xff]
    %v2900 = vld [vmem:[#allocation10 + $0x248] sm:$0xff]
    %v2901 = vld [vmem:[#allocation10 + $0x250] sm:$0xff]
    %v2902 = vld [vmem:[#allocation10 + $0x258] sm:$0xff]
    %v2903 = vld [vmem:[#allocation10 + $0x260] sm:$0xff]
    %v2904 = vld [vmem:[#allocation10 + $0x268] sm:$0xff]
    %v2905 = vld [vmem:[#allocation10 + $0x270] sm:$0xff]
    %v2906 = vld [vmem:[#allocation10 + $0x278] sm:$0xff]
    %v2907 = vld [vmem:[#allocation10 + $0x280] sm:$0xff]
    %v2908 = vld [vmem:[#allocation10 + $0x288] sm:$0xff]
    %v2909 = vld [vmem:[#allocation10 + $0x290] sm:$0xff]
    %v2910 = vld [vmem:[#allocation10 + $0x298] sm:$0xff]
    %v2911 = vld [vmem:[#allocation10 + $0x2a0] sm:$0xff]
    %v2912 = vld [vmem:[#allocation10 + $0x2a8] sm:$0xff]
    %v2913 = vld [vmem:[#allocation10 + $0x2b0] sm:$0xff]
    %v2914 = vld [vmem:[#allocation10 + $0x2b8] sm:$0xff]
    %v2915 = vld [vmem:[#allocation10 + $0x2c0] sm:$0xff]
    %v2916 = vld [vmem:[#allocation10 + $0x2c8] sm:$0xff]
    %v2917 = vld [vmem:[#allocation10 + $0x2d0] sm:$0xff]
    %v2918 = vld [vmem:[#allocation10 + $0x2d8] sm:$0xff]
    %v2919 = vld [vmem:[#allocation10 + $0x2e0] sm:$0xff]
    %v2920 = vld [vmem:[#allocation10 + $0x2e8] sm:$0xff]
    %v2921 = vld [vmem:[#allocation10 + $0x2f0] sm:$0xff]
    %v2922 = vld [vmem:[#allocation10 + $0x2f8] sm:$0xff]
    %v2923 = vld [vmem:[#allocation10 + $0x300] sm:$0xff]
    %v2924 = vld [vmem:[#allocation10 + $0x308] sm:$0xff]
    %v2925 = vld [vmem:[#allocation10 + $0x310] sm:$0xff]
    %v2926 = vld [vmem:[#allocation10 + $0x318] sm:$0xff]
    %v2927 = vld [vmem:[#allocation10 + $0x320] sm:$0xff]
    %v2928 = vld [vmem:[#allocation10 + $0x328] sm:$0xff]
    %v2929 = vld [vmem:[#allocation10 + $0x330] sm:$0xff]
    %v2930 = vld [vmem:[#allocation10 + $0x338] sm:$0xff]
    %v2931 = vld [vmem:[#allocation10 + $0x340] sm:$0xff]
    %v2932 = vld [vmem:[#allocation10 + $0x348] sm:$0xff]
    %v2933 = vld [vmem:[#allocation10 + $0x350] sm:$0xff]
    %v2934 = vld [vmem:[#allocation10 + $0x358] sm:$0xff]
    %v2935 = vld [vmem:[#allocation10 + $0x360] sm:$0xff]
    %v2936 = vld [vmem:[#allocation10 + $0x368] sm:$0xff]
    %v2937 = vld [vmem:[#allocation10 + $0x370] sm:$0xff]
    %v2938 = vld [vmem:[#allocation10 + $0x378] sm:$0xff]
    %v2939 = vld [vmem:[#allocation10 + $0x380] sm:$0xff]
    %v2940 = vld [vmem:[#allocation10 + $0x388] sm:$0xff]
    %v2941 = vld [vmem:[#allocation10 + $0x390] sm:$0xff]
    %v2942 = vld [vmem:[#allocation10 + $0x398] sm:$0xff]
    %v2943 = vld [vmem:[#allocation10 + $0x3a0] sm:$0xff]
    %v2944 = vld [vmem:[#allocation10 + $0x3a8] sm:$0xff]
    %v2945 = vld [vmem:[#allocation10 + $0x3b0] sm:$0xff]
    %v2946 = vld [vmem:[#allocation10 + $0x3b8] sm:$0xff]
    %v2947 = vld [vmem:[#allocation10 + $0x3c0] sm:$0xff]
    %v2948 = vld [vmem:[#allocation10 + $0x3c8] sm:$0xff]
    %v2949 = vld [vmem:[#allocation10 + $0x3d0] sm:$0xff]
    %v2950 = vld [vmem:[#allocation10 + $0x3d8] sm:$0xff]
    %v2951 = vld [vmem:[#allocation10 + $0x3e0] sm:$0xff]
    %v2952 = vld [vmem:[#allocation10 + $0x3e8] sm:$0xff]
    %v2953 = vld [vmem:[#allocation10 + $0x3f0] sm:$0xff]
    %v2954 = vld [vmem:[#allocation10 + $0x3f8] sm:$0xff]
    %v2955 = vld [vmem:[#allocation10 + $0x400] sm:$0xff]
    %v2956 = vld [vmem:[#allocation10 + $0x408] sm:$0xff]
    %v2957 = vld [vmem:[#allocation10 + $0x410] sm:$0xff]
    %v2958 = vld [vmem:[#allocation10 + $0x418] sm:$0xff]
    %v2959 = vld [vmem:[#allocation10 + $0x420] sm:$0xff]
    %v2960 = vld [vmem:[#allocation10 + $0x428] sm:$0xff]
    %v2961 = vld [vmem:[#allocation10 + $0x430] sm:$0xff]
    %v2962 = vld [vmem:[#allocation10 + $0x438] sm:$0xff]
    %v2963 = vld [vmem:[#allocation10 + $0x440] sm:$0xff]
    %v2964 = vld [vmem:[#allocation10 + $0x448] sm:$0xff]
    %v2965 = vld [vmem:[#allocation10 + $0x450] sm:$0xff]
    %v2966 = vld [vmem:[#allocation10 + $0x458] sm:$0xff]
    %v2967 = vld [vmem:[#allocation10 + $0x460] sm:$0xff]
    %v2968 = vld [vmem:[#allocation10 + $0x468] sm:$0xff]
    %v2969 = vld [vmem:[#allocation10 + $0x470] sm:$0xff]
    %v2970 = vld [vmem:[#allocation10 + $0x478] sm:$0xff]
    %v2971 = vld [vmem:[#allocation10 + $0x480] sm:$0xff]
    %v2972 = vld [vmem:[#allocation10 + $0x488] sm:$0xff]
    %v2973 = vld [vmem:[#allocation10 + $0x490] sm:$0xff]
    %v2974 = vld [vmem:[#allocation10 + $0x498] sm:$0xff]
    %v2975 = vld [vmem:[#allocation10 + $0x4a0] sm:$0xff]
    %v2976 = vld [vmem:[#allocation10 + $0x4a8] sm:$0xff]
    %v2977 = vld [vmem:[#allocation10 + $0x4b0] sm:$0xff]
    %v2978 = vld [vmem:[#allocation10 + $0x4b8] sm:$0xff]
    %v2979 = vld [vmem:[#allocation10 + $0x4c0] sm:$0xff]
    %v2980 = vld [vmem:[#allocation10 + $0x4c8] sm:$0xff]
    %v2981 = vld [vmem:[#allocation10 + $0x4d0] sm:$0xff]
    %v2982 = vld [vmem:[#allocation10 + $0x4d8] sm:$0xff]
    %v2983 = vld [vmem:[#allocation10 + $0x4e0] sm:$0xff]
    %v2984 = vld [vmem:[#allocation10 + $0x4e8] sm:$0xff]
    %v2985 = vld [vmem:[#allocation10 + $0x4f0] sm:$0xff]
    %v2986 = vld [vmem:[#allocation10 + $0x4f8] sm:$0xff]
    %v2987 = vld [vmem:[#allocation10 + $0x500] sm:$0xff]
    %v2988 = vld [vmem:[#allocation10 + $0x508] sm:$0xff]
    %v2989 = vld [vmem:[#allocation10 + $0x510] sm:$0xff]
    %v2990 = vld [vmem:[#allocation10 + $0x518] sm:$0xff]
    %v2991 = vld [vmem:[#allocation10 + $0x520] sm:$0xff]
    %v2992 = vld [vmem:[#allocation10 + $0x528] sm:$0xff]
    %v2993 = vld [vmem:[#allocation10 + $0x530] sm:$0xff]
    %v2994 = vld [vmem:[#allocation10 + $0x538] sm:$0xff]
    %v2995 = vld [vmem:[#allocation10 + $0x540] sm:$0xff]
    %v2996 = vld [vmem:[#allocation10 + $0x548] sm:$0xff]
    %v2997 = vld [vmem:[#allocation10 + $0x550] sm:$0xff]
    %v2998 = vld [vmem:[#allocation10 + $0x558] sm:$0xff]
    %v2999 = vld [vmem:[#allocation10 + $0x560] sm:$0xff]
    %v3000 = vld [vmem:[#allocation10 + $0x568] sm:$0xff]
    %v3001 = vld [vmem:[#allocation10 + $0x570] sm:$0xff]
    %v3002 = vld [vmem:[#allocation10 + $0x578] sm:$0xff]
    %v3003 = vld [vmem:[#allocation10 + $0x580] sm:$0xff]
    %v3004 = vld [vmem:[#allocation10 + $0x588] sm:$0xff]
    %v3005 = vld [vmem:[#allocation10 + $0x590] sm:$0xff]
    %v3006 = vld [vmem:[#allocation10 + $0x598] sm:$0xff]
    %v3007 = vld [vmem:[#allocation10 + $0x5a0] sm:$0xff]
    %v3008 = vld [vmem:[#allocation10 + $0x5a8] sm:$0xff]
    %v3009 = vld [vmem:[#allocation10 + $0x5b0] sm:$0xff]
    %v3010 = vld [vmem:[#allocation10 + $0x5b8] sm:$0xff]
    %v3011 = vld [vmem:[#allocation10 + $0x5c0] sm:$0xff]
    %v3012 = vld [vmem:[#allocation10 + $0x5c8] sm:$0xff]
    %v3013 = vld [vmem:[#allocation10 + $0x5d0] sm:$0xff]
    %v3014 = vld [vmem:[#allocation10 + $0x5d8] sm:$0xff]
    %v3015 = vld [vmem:[#allocation10 + $0x5e0] sm:$0xff]
    %v3016 = vld [vmem:[#allocation10 + $0x5e8] sm:$0xff]
    %v3017 = vld [vmem:[#allocation10 + $0x5f0] sm:$0xff]
    %v3018 = vld [vmem:[#allocation10 + $0x5f8] sm:$0xff]
    %v3019 = vld [vmem:[#allocation10 + $0x600] sm:$0xff]
    %v3020 = vld [vmem:[#allocation10 + $0x608] sm:$0xff]
    %v3021 = vld [vmem:[#allocation10 + $0x610] sm:$0xff]
    %v3022 = vld [vmem:[#allocation10 + $0x618] sm:$0xff]
    %v3023 = vld [vmem:[#allocation10 + $0x620] sm:$0xff]
    %v3024 = vld [vmem:[#allocation10 + $0x628] sm:$0xff]
    %v3025 = vld [vmem:[#allocation10 + $0x630] sm:$0xff]
    %v3026 = vld [vmem:[#allocation10 + $0x638] sm:$0xff]
    %v3027 = vld [vmem:[#allocation10 + $0x640] sm:$0xff]
    %v3028 = vld [vmem:[#allocation10 + $0x648] sm:$0xff]
    %v3029 = vld [vmem:[#allocation10 + $0x650] sm:$0xff]
    %v3030 = vld [vmem:[#allocation10 + $0x658] sm:$0xff]
    %v3031 = vld [vmem:[#allocation10 + $0x660] sm:$0xff]
    %v3032 = vld [vmem:[#allocation10 + $0x668] sm:$0xff]
    %v3033 = vld [vmem:[#allocation10 + $0x670] sm:$0xff]
    %v3034 = vld [vmem:[#allocation10 + $0x678] sm:$0xff]
    %v3035 = vld [vmem:[#allocation10 + $0x680] sm:$0xff]
    %v3036 = vld [vmem:[#allocation10 + $0x688] sm:$0xff]
    %v3037 = vld [vmem:[#allocation10 + $0x690] sm:$0xff]
    %v3038 = vld [vmem:[#allocation10 + $0x698] sm:$0xff]
    %v3039 = vld [vmem:[#allocation10 + $0x6a0] sm:$0xff]
    %v3040 = vld [vmem:[#allocation10 + $0x6a8] sm:$0xff]
    %v3041 = vld [vmem:[#allocation10 + $0x6b0] sm:$0xff]
    %v3042 = vld [vmem:[#allocation10 + $0x6b8] sm:$0xff]
    %v3043 = vld [vmem:[#allocation10 + $0x6c0] sm:$0xff]
    %v3044 = vld [vmem:[#allocation10 + $0x6c8] sm:$0xff]
    %v3045 = vld [vmem:[#allocation10 + $0x6d0] sm:$0xff]
    %v3046 = vld [vmem:[#allocation10 + $0x6d8] sm:$0xff]
    %v3047 = vld [vmem:[#allocation10 + $0x6e0] sm:$0xff]
    %v3048 = vld [vmem:[#allocation10 + $0x6e8] sm:$0xff]
    %v3049 = vld [vmem:[#allocation10 + $0x6f0] sm:$0xff]
    %v3050 = vld [vmem:[#allocation10 + $0x6f8] sm:$0xff]
    %v3051 = vld [vmem:[#allocation10 + $0x700] sm:$0xff]
    %v3052 = vld [vmem:[#allocation10 + $0x708] sm:$0xff]
    %v3053 = vld [vmem:[#allocation10 + $0x710] sm:$0xff]
    %v3054 = vld [vmem:[#allocation10 + $0x718] sm:$0xff]
    %v3055 = vld [vmem:[#allocation10 + $0x720] sm:$0xff]
    %v3056 = vld [vmem:[#allocation10 + $0x728] sm:$0xff]
    %v3057 = vld [vmem:[#allocation10 + $0x730] sm:$0xff]
    %v3058 = vld [vmem:[#allocation10 + $0x738] sm:$0xff]
    %v3059 = vld [vmem:[#allocation10 + $0x740] sm:$0xff]
    %v3060 = vld [vmem:[#allocation10 + $0x748] sm:$0xff]
    %v3061 = vld [vmem:[#allocation10 + $0x750] sm:$0xff]
    %v3062 = vld [vmem:[#allocation10 + $0x758] sm:$0xff]
    %v3063 = vld [vmem:[#allocation10 + $0x760] sm:$0xff]
    %v3064 = vld [vmem:[#allocation10 + $0x768] sm:$0xff]
    %v3065 = vld [vmem:[#allocation10 + $0x770] sm:$0xff]
    %v3066 = vld [vmem:[#allocation10 + $0x778] sm:$0xff]
    %v3067 = vld [vmem:[#allocation10 + $0x780] sm:$0xff]
    %v3068 = vld [vmem:[#allocation10 + $0x788] sm:$0xff]
    %v3069 = vld [vmem:[#allocation10 + $0x790] sm:$0xff]
    %v3070 = vld [vmem:[#allocation10 + $0x798] sm:$0xff]
    %v3071 = vld [vmem:[#allocation10 + $0x7a0] sm:$0xff]
    %v3072 = vld [vmem:[#allocation10 + $0x7a8] sm:$0xff]
    %v3073 = vld [vmem:[#allocation10 + $0x7b0] sm:$0xff]
    %v3074 = vld [vmem:[#allocation10 + $0x7b8] sm:$0xff]
    %v3075 = vld [vmem:[#allocation10 + $0x7c0] sm:$0xff]
    %v3076 = vld [vmem:[#allocation10 + $0x7c8] sm:$0xff]
    %v3077 = vld [vmem:[#allocation10 + $0x7d0] sm:$0xff]
    %v3078 = vld [vmem:[#allocation10 + $0x7d8] sm:$0xff]
    %v3079 = vld [vmem:[#allocation10 + $0x7e0] sm:$0xff]
    %v3080 = vld [vmem:[#allocation10 + $0x7e8] sm:$0xff]
    %v3081 = vld [vmem:[#allocation10 + $0x7f0] sm:$0xff]
    %v3082 = vld [vmem:[#allocation10 + $0x7f8] sm:$0xff]
    %v3083 = vld [vmem:[#allocation11] sm:$0xf]
    %v3085 = vlaneseq
    %v3086 = vshrl.u32 %v3085, 7
    %v3087 = vsub.s32 0, %v3086
    %v3088 = vrot.slane %v3083, %v3087
    %v3089 = vlaneseq
    %v3090 = vshrl.u32 %v3089, 7
    %v3091 = vsub.s32 1, %v3090
    %v3092 = vrot.slane %v3083, %v3091
    %v3093 = vlaneseq
    %v3094 = vshrl.u32 %v3093, 7
    %v3095 = vsub.s32 2, %v3094
    %v3096 = vrot.slane %v3083, %v3095
    %v3097 = vlaneseq
    %v3098 = vshrl.u32 %v3097, 7
    %v3099 = vsub.s32 3, %v3098
    %v3100 = vrot.slane %v3083, %v3099
    %v3361 = vunpack.c.l.b16 %v2827
    %v3362 = vunpack.c.h.b16 %v2827
    %v3363 = vunpack.c.l.b16 %v2828
    %v3364 = vunpack.c.h.b16 %v2828
    %v3365 = vunpack.c.l.b16 %v2829
    %v3366 = vunpack.c.h.b16 %v2829
    %v3367 = vunpack.c.l.b16 %v2830
    %v3368 = vunpack.c.h.b16 %v2830
    %v3369 = vunpack.c.l.b16 %v2831
    %v3370 = vunpack.c.h.b16 %v2831
    %v3371 = vunpack.c.l.b16 %v2832
    %v3372 = vunpack.c.h.b16 %v2832
    %v3373 = vunpack.c.l.b16 %v2833
    %v3374 = vunpack.c.h.b16 %v2833
    %v3375 = vunpack.c.l.b16 %v2834
    %v3376 = vunpack.c.h.b16 %v2834
    %v3377 = vunpack.c.l.b16 %v2835
    %v3378 = vunpack.c.h.b16 %v2835
    %v3379 = vunpack.c.l.b16 %v2836
    %v3380 = vunpack.c.h.b16 %v2836
    %v3381 = vunpack.c.l.b16 %v2837
    %v3382 = vunpack.c.h.b16 %v2837
    %v3383 = vunpack.c.l.b16 %v2838
    %v3384 = vunpack.c.h.b16 %v2838
    %v3385 = vunpack.c.l.b16 %v2839
    %v3386 = vunpack.c.h.b16 %v2839
    %v3387 = vunpack.c.l.b16 %v2840
    %v3388 = vunpack.c.h.b16 %v2840
    %v3389 = vunpack.c.l.b16 %v2841
    %v3390 = vunpack.c.h.b16 %v2841
    %v3391 = vunpack.c.l.b16 %v2842
    %v3392 = vunpack.c.h.b16 %v2842
    %v3393 = vunpack.c.l.b16 %v2843
    %v3394 = vunpack.c.h.b16 %v2843
    %v3395 = vunpack.c.l.b16 %v2844
    %v3396 = vunpack.c.h.b16 %v2844
    %v3397 = vunpack.c.l.b16 %v2845
    %v3398 = vunpack.c.h.b16 %v2845
    %v3399 = vunpack.c.l.b16 %v2846
    %v3400 = vunpack.c.h.b16 %v2846
    %v3401 = vunpack.c.l.b16 %v2847
    %v3402 = vunpack.c.h.b16 %v2847
    %v3403 = vunpack.c.l.b16 %v2848
    %v3404 = vunpack.c.h.b16 %v2848
    %v3405 = vunpack.c.l.b16 %v2849
    %v3406 = vunpack.c.h.b16 %v2849
    %v3407 = vunpack.c.l.b16 %v2850
    %v3408 = vunpack.c.h.b16 %v2850
    %v3409 = vunpack.c.l.b16 %v2851
    %v3410 = vunpack.c.h.b16 %v2851
    %v3411 = vunpack.c.l.b16 %v2852
    %v3412 = vunpack.c.h.b16 %v2852
    %v3413 = vunpack.c.l.b16 %v2853
    %v3414 = vunpack.c.h.b16 %v2853
    %v3415 = vunpack.c.l.b16 %v2854
    %v3416 = vunpack.c.h.b16 %v2854
    %v3417 = vunpack.c.l.b16 %v2855
    %v3418 = vunpack.c.h.b16 %v2855
    %v3419 = vunpack.c.l.b16 %v2856
    %v3420 = vunpack.c.h.b16 %v2856
    %v3421 = vunpack.c.l.b16 %v2857
    %v3422 = vunpack.c.h.b16 %v2857
    %v3423 = vunpack.c.l.b16 %v2858
    %v3424 = vunpack.c.h.b16 %v2858
    %v3425 = vunpack.c.l.b16 %v2859
    %v3426 = vunpack.c.h.b16 %v2859
    %v3427 = vunpack.c.l.b16 %v2860
    %v3428 = vunpack.c.h.b16 %v2860
    %v3429 = vunpack.c.l.b16 %v2861
    %v3430 = vunpack.c.h.b16 %v2861
    %v3431 = vunpack.c.l.b16 %v2862
    %v3432 = vunpack.c.h.b16 %v2862
    %v3433 = vunpack.c.l.b16 %v2863
    %v3434 = vunpack.c.h.b16 %v2863
    %v3435 = vunpack.c.l.b16 %v2864
    %v3436 = vunpack.c.h.b16 %v2864
    %v3437 = vunpack.c.l.b16 %v2865
    %v3438 = vunpack.c.h.b16 %v2865
    %v3439 = vunpack.c.l.b16 %v2866
    %v3440 = vunpack.c.h.b16 %v2866
    %v3441 = vunpack.c.l.b16 %v2867
    %v3442 = vunpack.c.h.b16 %v2867
    %v3443 = vunpack.c.l.b16 %v2868
    %v3444 = vunpack.c.h.b16 %v2868
    %v3445 = vunpack.c.l.b16 %v2869
    %v3446 = vunpack.c.h.b16 %v2869
    %v3447 = vunpack.c.l.b16 %v2870
    %v3448 = vunpack.c.h.b16 %v2870
    %v3449 = vunpack.c.l.b16 %v2871
    %v3450 = vunpack.c.h.b16 %v2871
    %v3451 = vunpack.c.l.b16 %v2872
    %v3452 = vunpack.c.h.b16 %v2872
    %v3453 = vunpack.c.l.b16 %v2873
    %v3454 = vunpack.c.h.b16 %v2873
    %v3455 = vunpack.c.l.b16 %v2874
    %v3456 = vunpack.c.h.b16 %v2874
    %v3457 = vunpack.c.l.b16 %v2875
    %v3458 = vunpack.c.h.b16 %v2875
    %v3459 = vunpack.c.l.b16 %v2876
    %v3460 = vunpack.c.h.b16 %v2876
    %v3461 = vunpack.c.l.b16 %v2877
    %v3462 = vunpack.c.h.b16 %v2877
    %v3463 = vunpack.c.l.b16 %v2878
    %v3464 = vunpack.c.h.b16 %v2878
    %v3465 = vunpack.c.l.b16 %v2879
    %v3466 = vunpack.c.h.b16 %v2879
    %v3467 = vunpack.c.l.b16 %v2880
    %v3468 = vunpack.c.h.b16 %v2880
    %v3469 = vunpack.c.l.b16 %v2881
    %v3470 = vunpack.c.h.b16 %v2881
    %v3471 = vunpack.c.l.b16 %v2882
    %v3472 = vunpack.c.h.b16 %v2882
    %v3473 = vunpack.c.l.b16 %v2883
    %v3474 = vunpack.c.h.b16 %v2883
    %v3475 = vunpack.c.l.b16 %v2884
    %v3476 = vunpack.c.h.b16 %v2884
    %v3477 = vunpack.c.l.b16 %v2885
    %v3478 = vunpack.c.h.b16 %v2885
    %v3479 = vunpack.c.l.b16 %v2886
    %v3480 = vunpack.c.h.b16 %v2886
    %v3481 = vunpack.c.l.b16 %v2887
    %v3482 = vunpack.c.h.b16 %v2887
    %v3483 = vunpack.c.l.b16 %v2888
    %v3484 = vunpack.c.h.b16 %v2888
    %v3485 = vunpack.c.l.b16 %v2889
    %v3486 = vunpack.c.h.b16 %v2889
    %v3487 = vunpack.c.l.b16 %v2890
    %v3488 = vunpack.c.h.b16 %v2890
    %v3489 = vunpack.c.l.b16 %v2891
    %v3490 = vunpack.c.h.b16 %v2891
    %v3491 = vunpack.c.l.b16 %v2892
    %v3492 = vunpack.c.h.b16 %v2892
    %v3493 = vunpack.c.l.b16 %v2893
    %v3494 = vunpack.c.h.b16 %v2893
    %v3495 = vunpack.c.l.b16 %v2894
    %v3496 = vunpack.c.h.b16 %v2894
    %v3497 = vunpack.c.l.b16 %v2895
    %v3498 = vunpack.c.h.b16 %v2895
    %v3499 = vunpack.c.l.b16 %v2896
    %v3500 = vunpack.c.h.b16 %v2896
    %v3501 = vunpack.c.l.b16 %v2897
    %v3502 = vunpack.c.h.b16 %v2897
    %v3503 = vunpack.c.l.b16 %v2898
    %v3504 = vunpack.c.h.b16 %v2898
    %v3505 = vunpack.c.l.b16 %v2899
    %v3506 = vunpack.c.h.b16 %v2899
    %v3507 = vunpack.c.l.b16 %v2900
    %v3508 = vunpack.c.h.b16 %v2900
    %v3509 = vunpack.c.l.b16 %v2901
    %v3510 = vunpack.c.h.b16 %v2901
    %v3511 = vunpack.c.l.b16 %v2902
    %v3512 = vunpack.c.h.b16 %v2902
    %v3513 = vunpack.c.l.b16 %v2903
    %v3514 = vunpack.c.h.b16 %v2903
    %v3515 = vunpack.c.l.b16 %v2904
    %v3516 = vunpack.c.h.b16 %v2904
    %v3517 = vunpack.c.l.b16 %v2905
    %v3518 = vunpack.c.h.b16 %v2905
    %v3519 = vunpack.c.l.b16 %v2906
    %v3520 = vunpack.c.h.b16 %v2906
    %v3521 = vunpack.c.l.b16 %v2907
    %v3522 = vunpack.c.h.b16 %v2907
    %v3523 = vunpack.c.l.b16 %v2908
    %v3524 = vunpack.c.h.b16 %v2908
    %v3525 = vunpack.c.l.b16 %v2909
    %v3526 = vunpack.c.h.b16 %v2909
    %v3527 = vunpack.c.l.b16 %v2910
    %v3528 = vunpack.c.h.b16 %v2910
    %v3529 = vunpack.c.l.b16 %v2911
    %v3530 = vunpack.c.h.b16 %v2911
    %v3531 = vunpack.c.l.b16 %v2912
    %v3532 = vunpack.c.h.b16 %v2912
    %v3533 = vunpack.c.l.b16 %v2913
    %v3534 = vunpack.c.h.b16 %v2913
    %v3535 = vunpack.c.l.b16 %v2914
    %v3536 = vunpack.c.h.b16 %v2914
    %v3537 = vunpack.c.l.b16 %v2915
    %v3538 = vunpack.c.h.b16 %v2915
    %v3539 = vunpack.c.l.b16 %v2916
    %v3540 = vunpack.c.h.b16 %v2916
    %v3541 = vunpack.c.l.b16 %v2917
    %v3542 = vunpack.c.h.b16 %v2917
    %v3543 = vunpack.c.l.b16 %v2918
    %v3544 = vunpack.c.h.b16 %v2918
    %v3545 = vunpack.c.l.b16 %v2919
    %v3546 = vunpack.c.h.b16 %v2919
    %v3547 = vunpack.c.l.b16 %v2920
    %v3548 = vunpack.c.h.b16 %v2920
    %v3549 = vunpack.c.l.b16 %v2921
    %v3550 = vunpack.c.h.b16 %v2921
    %v3551 = vunpack.c.l.b16 %v2922
    %v3552 = vunpack.c.h.b16 %v2922
    %v3553 = vunpack.c.l.b16 %v2923
    %v3554 = vunpack.c.h.b16 %v2923
    %v3555 = vunpack.c.l.b16 %v2924
    %v3556 = vunpack.c.h.b16 %v2924
    %v3557 = vunpack.c.l.b16 %v2925
    %v3558 = vunpack.c.h.b16 %v2925
    %v3559 = vunpack.c.l.b16 %v2926
    %v3560 = vunpack.c.h.b16 %v2926
    %v3561 = vunpack.c.l.b16 %v2927
    %v3562 = vunpack.c.h.b16 %v2927
    %v3563 = vunpack.c.l.b16 %v2928
    %v3564 = vunpack.c.h.b16 %v2928
    %v3565 = vunpack.c.l.b16 %v2929
    %v3566 = vunpack.c.h.b16 %v2929
    %v3567 = vunpack.c.l.b16 %v2930
    %v3568 = vunpack.c.h.b16 %v2930
    %v3569 = vunpack.c.l.b16 %v2931
    %v3570 = vunpack.c.h.b16 %v2931
    %v3571 = vunpack.c.l.b16 %v2932
    %v3572 = vunpack.c.h.b16 %v2932
    %v3573 = vunpack.c.l.b16 %v2933
    %v3574 = vunpack.c.h.b16 %v2933
    %v3575 = vunpack.c.l.b16 %v2934
    %v3576 = vunpack.c.h.b16 %v2934
    %v3577 = vunpack.c.l.b16 %v2935
    %v3578 = vunpack.c.h.b16 %v2935
    %v3579 = vunpack.c.l.b16 %v2936
    %v3580 = vunpack.c.h.b16 %v2936
    %v3581 = vunpack.c.l.b16 %v2937
    %v3582 = vunpack.c.h.b16 %v2937
    %v3583 = vunpack.c.l.b16 %v2938
    %v3584 = vunpack.c.h.b16 %v2938
    %v3585 = vunpack.c.l.b16 %v2939
    %v3586 = vunpack.c.h.b16 %v2939
    %v3587 = vunpack.c.l.b16 %v2940
    %v3588 = vunpack.c.h.b16 %v2940
    %v3589 = vunpack.c.l.b16 %v2941
    %v3590 = vunpack.c.h.b16 %v2941
    %v3591 = vunpack.c.l.b16 %v2942
    %v3592 = vunpack.c.h.b16 %v2942
    %v3593 = vunpack.c.l.b16 %v2943
    %v3594 = vunpack.c.h.b16 %v2943
    %v3595 = vunpack.c.l.b16 %v2944
    %v3596 = vunpack.c.h.b16 %v2944
    %v3597 = vunpack.c.l.b16 %v2945
    %v3598 = vunpack.c.h.b16 %v2945
    %v3599 = vunpack.c.l.b16 %v2946
    %v3600 = vunpack.c.h.b16 %v2946
    %v3601 = vunpack.c.l.b16 %v2947
    %v3602 = vunpack.c.h.b16 %v2947
    %v3603 = vunpack.c.l.b16 %v2948
    %v3604 = vunpack.c.h.b16 %v2948
    %v3605 = vunpack.c.l.b16 %v2949
    %v3606 = vunpack.c.h.b16 %v2949
    %v3607 = vunpack.c.l.b16 %v2950
    %v3608 = vunpack.c.h.b16 %v2950
    %v3609 = vunpack.c.l.b16 %v2951
    %v3610 = vunpack.c.h.b16 %v2951
    %v3611 = vunpack.c.l.b16 %v2952
    %v3612 = vunpack.c.h.b16 %v2952
    %v3613 = vunpack.c.l.b16 %v2953
    %v3614 = vunpack.c.h.b16 %v2953
    %v3615 = vunpack.c.l.b16 %v2954
    %v3616 = vunpack.c.h.b16 %v2954
    %v3617 = vunpack.c.l.b16 %v2955
    %v3618 = vunpack.c.h.b16 %v2955
    %v3619 = vunpack.c.l.b16 %v2956
    %v3620 = vunpack.c.h.b16 %v2956
    %v3621 = vunpack.c.l.b16 %v2957
    %v3622 = vunpack.c.h.b16 %v2957
    %v3623 = vunpack.c.l.b16 %v2958
    %v3624 = vunpack.c.h.b16 %v2958
    %v3625 = vunpack.c.l.b16 %v2959
    %v3626 = vunpack.c.h.b16 %v2959
    %v3627 = vunpack.c.l.b16 %v2960
    %v3628 = vunpack.c.h.b16 %v2960
    %v3629 = vunpack.c.l.b16 %v2961
    %v3630 = vunpack.c.h.b16 %v2961
    %v3631 = vunpack.c.l.b16 %v2962
    %v3632 = vunpack.c.h.b16 %v2962
    %v3633 = vunpack.c.l.b16 %v2963
    %v3634 = vunpack.c.h.b16 %v2963
    %v3635 = vunpack.c.l.b16 %v2964
    %v3636 = vunpack.c.h.b16 %v2964
    %v3637 = vunpack.c.l.b16 %v2965
    %v3638 = vunpack.c.h.b16 %v2965
    %v3639 = vunpack.c.l.b16 %v2966
    %v3640 = vunpack.c.h.b16 %v2966
    %v3641 = vunpack.c.l.b16 %v2967
    %v3642 = vunpack.c.h.b16 %v2967
    %v3643 = vunpack.c.l.b16 %v2968
    %v3644 = vunpack.c.h.b16 %v2968
    %v3645 = vunpack.c.l.b16 %v2969
    %v3646 = vunpack.c.h.b16 %v2969
    %v3647 = vunpack.c.l.b16 %v2970
    %v3648 = vunpack.c.h.b16 %v2970
    %v3649 = vunpack.c.l.b16 %v2971
    %v3650 = vunpack.c.h.b16 %v2971
    %v3651 = vunpack.c.l.b16 %v2972
    %v3652 = vunpack.c.h.b16 %v2972
    %v3653 = vunpack.c.l.b16 %v2973
    %v3654 = vunpack.c.h.b16 %v2973
    %v3655 = vunpack.c.l.b16 %v2974
    %v3656 = vunpack.c.h.b16 %v2974
    %v3657 = vunpack.c.l.b16 %v2975
    %v3658 = vunpack.c.h.b16 %v2975
    %v3659 = vunpack.c.l.b16 %v2976
    %v3660 = vunpack.c.h.b16 %v2976
    %v3661 = vunpack.c.l.b16 %v2977
    %v3662 = vunpack.c.h.b16 %v2977
    %v3663 = vunpack.c.l.b16 %v2978
    %v3664 = vunpack.c.h.b16 %v2978
    %v3665 = vunpack.c.l.b16 %v2979
    %v3666 = vunpack.c.h.b16 %v2979
    %v3667 = vunpack.c.l.b16 %v2980
    %v3668 = vunpack.c.h.b16 %v2980
    %v3669 = vunpack.c.l.b16 %v2981
    %v3670 = vunpack.c.h.b16 %v2981
    %v3671 = vunpack.c.l.b16 %v2982
    %v3672 = vunpack.c.h.b16 %v2982
    %v3673 = vunpack.c.l.b16 %v2983
    %v3674 = vunpack.c.h.b16 %v2983
    %v3675 = vunpack.c.l.b16 %v2984
    %v3676 = vunpack.c.h.b16 %v2984
    %v3677 = vunpack.c.l.b16 %v2985
    %v3678 = vunpack.c.h.b16 %v2985
    %v3679 = vunpack.c.l.b16 %v2986
    %v3680 = vunpack.c.h.b16 %v2986
    %v3681 = vunpack.c.l.b16 %v2987
    %v3682 = vunpack.c.h.b16 %v2987
    %v3683 = vunpack.c.l.b16 %v2988
    %v3684 = vunpack.c.h.b16 %v2988
    %v3685 = vunpack.c.l.b16 %v2989
    %v3686 = vunpack.c.h.b16 %v2989
    %v3687 = vunpack.c.l.b16 %v2990
    %v3688 = vunpack.c.h.b16 %v2990
    %v3689 = vunpack.c.l.b16 %v2991
    %v3690 = vunpack.c.h.b16 %v2991
    %v3691 = vunpack.c.l.b16 %v2992
    %v3692 = vunpack.c.h.b16 %v2992
    %v3693 = vunpack.c.l.b16 %v2993
    %v3694 = vunpack.c.h.b16 %v2993
    %v3695 = vunpack.c.l.b16 %v2994
    %v3696 = vunpack.c.h.b16 %v2994
    %v3697 = vunpack.c.l.b16 %v2995
    %v3698 = vunpack.c.h.b16 %v2995
    %v3699 = vunpack.c.l.b16 %v2996
    %v3700 = vunpack.c.h.b16 %v2996
    %v3701 = vunpack.c.l.b16 %v2997
    %v3702 = vunpack.c.h.b16 %v2997
    %v3703 = vunpack.c.l.b16 %v2998
    %v3704 = vunpack.c.h.b16 %v2998
    %v3705 = vunpack.c.l.b16 %v2999
    %v3706 = vunpack.c.h.b16 %v2999
    %v3707 = vunpack.c.l.b16 %v3000
    %v3708 = vunpack.c.h.b16 %v3000
    %v3709 = vunpack.c.l.b16 %v3001
    %v3710 = vunpack.c.h.b16 %v3001
    %v3711 = vunpack.c.l.b16 %v3002
    %v3712 = vunpack.c.h.b16 %v3002
    %v3713 = vunpack.c.l.b16 %v3003
    %v3714 = vunpack.c.h.b16 %v3003
    %v3715 = vunpack.c.l.b16 %v3004
    %v3716 = vunpack.c.h.b16 %v3004
    %v3717 = vunpack.c.l.b16 %v3005
    %v3718 = vunpack.c.h.b16 %v3005
    %v3719 = vunpack.c.l.b16 %v3006
    %v3720 = vunpack.c.h.b16 %v3006
    %v3721 = vunpack.c.l.b16 %v3007
    %v3722 = vunpack.c.h.b16 %v3007
    %v3723 = vunpack.c.l.b16 %v3008
    %v3724 = vunpack.c.h.b16 %v3008
    %v3725 = vunpack.c.l.b16 %v3009
    %v3726 = vunpack.c.h.b16 %v3009
    %v3727 = vunpack.c.l.b16 %v3010
    %v3728 = vunpack.c.h.b16 %v3010
    %v3729 = vunpack.c.l.b16 %v3011
    %v3730 = vunpack.c.h.b16 %v3011
    %v3731 = vunpack.c.l.b16 %v3012
    %v3732 = vunpack.c.h.b16 %v3012
    %v3733 = vunpack.c.l.b16 %v3013
    %v3734 = vunpack.c.h.b16 %v3013
    %v3735 = vunpack.c.l.b16 %v3014
    %v3736 = vunpack.c.h.b16 %v3014
    %v3737 = vunpack.c.l.b16 %v3015
    %v3738 = vunpack.c.h.b16 %v3015
    %v3739 = vunpack.c.l.b16 %v3016
    %v3740 = vunpack.c.h.b16 %v3016
    %v3741 = vunpack.c.l.b16 %v3017
    %v3742 = vunpack.c.h.b16 %v3017
    %v3743 = vunpack.c.l.b16 %v3018
    %v3744 = vunpack.c.h.b16 %v3018
    %v3745 = vunpack.c.l.b16 %v3019
    %v3746 = vunpack.c.h.b16 %v3019
    %v3747 = vunpack.c.l.b16 %v3020
    %v3748 = vunpack.c.h.b16 %v3020
    %v3749 = vunpack.c.l.b16 %v3021
    %v3750 = vunpack.c.h.b16 %v3021
    %v3751 = vunpack.c.l.b16 %v3022
    %v3752 = vunpack.c.h.b16 %v3022
    %v3753 = vunpack.c.l.b16 %v3023
    %v3754 = vunpack.c.h.b16 %v3023
    %v3755 = vunpack.c.l.b16 %v3024
    %v3756 = vunpack.c.h.b16 %v3024
    %v3757 = vunpack.c.l.b16 %v3025
    %v3758 = vunpack.c.h.b16 %v3025
    %v3759 = vunpack.c.l.b16 %v3026
    %v3760 = vunpack.c.h.b16 %v3026
    %v3761 = vunpack.c.l.b16 %v3027
    %v3762 = vunpack.c.h.b16 %v3027
    %v3763 = vunpack.c.l.b16 %v3028
    %v3764 = vunpack.c.h.b16 %v3028
    %v3765 = vunpack.c.l.b16 %v3029
    %v3766 = vunpack.c.h.b16 %v3029
    %v3767 = vunpack.c.l.b16 %v3030
    %v3768 = vunpack.c.h.b16 %v3030
    %v3769 = vunpack.c.l.b16 %v3031
    %v3770 = vunpack.c.h.b16 %v3031
    %v3771 = vunpack.c.l.b16 %v3032
    %v3772 = vunpack.c.h.b16 %v3032
    %v3773 = vunpack.c.l.b16 %v3033
    %v3774 = vunpack.c.h.b16 %v3033
    %v3775 = vunpack.c.l.b16 %v3034
    %v3776 = vunpack.c.h.b16 %v3034
    %v3777 = vunpack.c.l.b16 %v3035
    %v3778 = vunpack.c.h.b16 %v3035
    %v3779 = vunpack.c.l.b16 %v3036
    %v3780 = vunpack.c.h.b16 %v3036
    %v3781 = vunpack.c.l.b16 %v3037
    %v3782 = vunpack.c.h.b16 %v3037
    %v3783 = vunpack.c.l.b16 %v3038
    %v3784 = vunpack.c.h.b16 %v3038
    %v3785 = vunpack.c.l.b16 %v3039
    %v3786 = vunpack.c.h.b16 %v3039
    %v3787 = vunpack.c.l.b16 %v3040
    %v3788 = vunpack.c.h.b16 %v3040
    %v3789 = vunpack.c.l.b16 %v3041
    %v3790 = vunpack.c.h.b16 %v3041
    %v3791 = vunpack.c.l.b16 %v3042
    %v3792 = vunpack.c.h.b16 %v3042
    %v3793 = vunpack.c.l.b16 %v3043
    %v3794 = vunpack.c.h.b16 %v3043
    %v3795 = vunpack.c.l.b16 %v3044
    %v3796 = vunpack.c.h.b16 %v3044
    %v3797 = vunpack.c.l.b16 %v3045
    %v3798 = vunpack.c.h.b16 %v3045
    %v3799 = vunpack.c.l.b16 %v3046
    %v3800 = vunpack.c.h.b16 %v3046
    %v3801 = vunpack.c.l.b16 %v3047
    %v3802 = vunpack.c.h.b16 %v3047
    %v3803 = vunpack.c.l.b16 %v3048
    %v3804 = vunpack.c.h.b16 %v3048
    %v3805 = vunpack.c.l.b16 %v3049
    %v3806 = vunpack.c.h.b16 %v3049
    %v3807 = vunpack.c.l.b16 %v3050
    %v3808 = vunpack.c.h.b16 %v3050
    %v3809 = vunpack.c.l.b16 %v3051
    %v3810 = vunpack.c.h.b16 %v3051
    %v3811 = vunpack.c.l.b16 %v3052
    %v3812 = vunpack.c.h.b16 %v3052
    %v3813 = vunpack.c.l.b16 %v3053
    %v3814 = vunpack.c.h.b16 %v3053
    %v3815 = vunpack.c.l.b16 %v3054
    %v3816 = vunpack.c.h.b16 %v3054
    %v3817 = vunpack.c.l.b16 %v3055
    %v3818 = vunpack.c.h.b16 %v3055
    %v3819 = vunpack.c.l.b16 %v3056
    %v3820 = vunpack.c.h.b16 %v3056
    %v3821 = vunpack.c.l.b16 %v3057
    %v3822 = vunpack.c.h.b16 %v3057
    %v3823 = vunpack.c.l.b16 %v3058
    %v3824 = vunpack.c.h.b16 %v3058
    %v3825 = vunpack.c.l.b16 %v3059
    %v3826 = vunpack.c.h.b16 %v3059
    %v3827 = vunpack.c.l.b16 %v3060
    %v3828 = vunpack.c.h.b16 %v3060
    %v3829 = vunpack.c.l.b16 %v3061
    %v3830 = vunpack.c.h.b16 %v3061
    %v3831 = vunpack.c.l.b16 %v3062
    %v3832 = vunpack.c.h.b16 %v3062
    %v3833 = vunpack.c.l.b16 %v3063
    %v3834 = vunpack.c.h.b16 %v3063
    %v3835 = vunpack.c.l.b16 %v3064
    %v3836 = vunpack.c.h.b16 %v3064
    %v3837 = vunpack.c.l.b16 %v3065
    %v3838 = vunpack.c.h.b16 %v3065
    %v3839 = vunpack.c.l.b16 %v3066
    %v3840 = vunpack.c.h.b16 %v3066
    %v3841 = vunpack.c.l.b16 %v3067
    %v3842 = vunpack.c.h.b16 %v3067
    %v3843 = vunpack.c.l.b16 %v3068
    %v3844 = vunpack.c.h.b16 %v3068
    %v3845 = vunpack.c.l.b16 %v3069
    %v3846 = vunpack.c.h.b16 %v3069
    %v3847 = vunpack.c.l.b16 %v3070
    %v3848 = vunpack.c.h.b16 %v3070
    %v3849 = vunpack.c.l.b16 %v3071
    %v3850 = vunpack.c.h.b16 %v3071
    %v3851 = vunpack.c.l.b16 %v3072
    %v3852 = vunpack.c.h.b16 %v3072
    %v3853 = vunpack.c.l.b16 %v3073
    %v3854 = vunpack.c.h.b16 %v3073
    %v3855 = vunpack.c.l.b16 %v3074
    %v3856 = vunpack.c.h.b16 %v3074
    %v3857 = vunpack.c.l.b16 %v3075
    %v3858 = vunpack.c.h.b16 %v3075
    %v3859 = vunpack.c.l.b16 %v3076
    %v3860 = vunpack.c.h.b16 %v3076
    %v3861 = vunpack.c.l.b16 %v3077
    %v3862 = vunpack.c.h.b16 %v3077
    %v3863 = vunpack.c.l.b16 %v3078
    %v3864 = vunpack.c.h.b16 %v3078
    %v3865 = vunpack.c.l.b16 %v3079
    %v3866 = vunpack.c.h.b16 %v3079
    %v3867 = vunpack.c.l.b16 %v3080
    %v3868 = vunpack.c.h.b16 %v3080
    %v3869 = vunpack.c.l.b16 %v3081
    %v3870 = vunpack.c.h.b16 %v3081
    %v3871 = vunpack.c.l.b16 %v3082
    %v3872 = vunpack.c.h.b16 %v3082
    %v3873 = vpack.c.b16 %v3365, %v3361
    %v3874 = vpack.c.b16 %v3366, %v3362
    %v3875 = vpack.c.b16 %v3367, %v3363
    %v3876 = vpack.c.b16 %v3368, %v3364
    %v3877 = vpack.c.b16 %v3373, %v3369
    %v3878 = vpack.c.b16 %v3374, %v3370
    %v3879 = vpack.c.b16 %v3375, %v3371
    %v3880 = vpack.c.b16 %v3376, %v3372
    %v3881 = vpack.c.b16 %v3381, %v3377
    %v3882 = vpack.c.b16 %v3382, %v3378
    %v3883 = vpack.c.b16 %v3383, %v3379
    %v3884 = vpack.c.b16 %v3384, %v3380
    %v3885 = vpack.c.b16 %v3389, %v3385
    %v3886 = vpack.c.b16 %v3390, %v3386
    %v3887 = vpack.c.b16 %v3391, %v3387
    %v3888 = vpack.c.b16 %v3392, %v3388
    %v3889 = vpack.c.b16 %v3397, %v3393
    %v3890 = vpack.c.b16 %v3398, %v3394
    %v3891 = vpack.c.b16 %v3399, %v3395
    %v3892 = vpack.c.b16 %v3400, %v3396
    %v3893 = vpack.c.b16 %v3405, %v3401
    %v3894 = vpack.c.b16 %v3406, %v3402
    %v3895 = vpack.c.b16 %v3407, %v3403
    %v3896 = vpack.c.b16 %v3408, %v3404
    %v3897 = vpack.c.b16 %v3413, %v3409
    %v3898 = vpack.c.b16 %v3414, %v3410
    %v3899 = vpack.c.b16 %v3415, %v3411
    %v3900 = vpack.c.b16 %v3416, %v3412
    %v3901 = vpack.c.b16 %v3421, %v3417
    %v3902 = vpack.c.b16 %v3422, %v3418
    %v3903 = vpack.c.b16 %v3423, %v3419
    %v3904 = vpack.c.b16 %v3424, %v3420
    %v3905 = vpack.c.b16 %v3429, %v3425
    %v3906 = vpack.c.b16 %v3430, %v3426
    %v3907 = vpack.c.b16 %v3431, %v3427
    %v3908 = vpack.c.b16 %v3432, %v3428
    %v3909 = vpack.c.b16 %v3437, %v3433
    %v3910 = vpack.c.b16 %v3438, %v3434
    %v3911 = vpack.c.b16 %v3439, %v3435
    %v3912 = vpack.c.b16 %v3440, %v3436
    %v3913 = vpack.c.b16 %v3445, %v3441
    %v3914 = vpack.c.b16 %v3446, %v3442
    %v3915 = vpack.c.b16 %v3447, %v3443
    %v3916 = vpack.c.b16 %v3448, %v3444
    %v3917 = vpack.c.b16 %v3453, %v3449
    %v3918 = vpack.c.b16 %v3454, %v3450
    %v3919 = vpack.c.b16 %v3455, %v3451
    %v3920 = vpack.c.b16 %v3456, %v3452
    %v3921 = vpack.c.b16 %v3461, %v3457
    %v3922 = vpack.c.b16 %v3462, %v3458
    %v3923 = vpack.c.b16 %v3463, %v3459
    %v3924 = vpack.c.b16 %v3464, %v3460
    %v3925 = vpack.c.b16 %v3469, %v3465
    %v3926 = vpack.c.b16 %v3470, %v3466
    %v3927 = vpack.c.b16 %v3471, %v3467
    %v3928 = vpack.c.b16 %v3472, %v3468
    %v3929 = vpack.c.b16 %v3477, %v3473
    %v3930 = vpack.c.b16 %v3478, %v3474
    %v3931 = vpack.c.b16 %v3479, %v3475
    %v3932 = vpack.c.b16 %v3480, %v3476
    %v3933 = vpack.c.b16 %v3485, %v3481
    %v3934 = vpack.c.b16 %v3486, %v3482
    %v3935 = vpack.c.b16 %v3487, %v3483
    %v3936 = vpack.c.b16 %v3488, %v3484
    %v3937 = vpack.c.b16 %v3493, %v3489
    %v3938 = vpack.c.b16 %v3494, %v3490
    %v3939 = vpack.c.b16 %v3495, %v3491
    %v3940 = vpack.c.b16 %v3496, %v3492
    %v3941 = vpack.c.b16 %v3501, %v3497
    %v3942 = vpack.c.b16 %v3502, %v3498
    %v3943 = vpack.c.b16 %v3503, %v3499
    %v3944 = vpack.c.b16 %v3504, %v3500
    %v3945 = vpack.c.b16 %v3509, %v3505
    %v3946 = vpack.c.b16 %v3510, %v3506
    %v3947 = vpack.c.b16 %v3511, %v3507
    %v3948 = vpack.c.b16 %v3512, %v3508
    %v3949 = vpack.c.b16 %v3517, %v3513
    %v3950 = vpack.c.b16 %v3518, %v3514
    %v3951 = vpack.c.b16 %v3519, %v3515
    %v3952 = vpack.c.b16 %v3520, %v3516
    %v3953 = vpack.c.b16 %v3525, %v3521
    %v3954 = vpack.c.b16 %v3526, %v3522
    %v3955 = vpack.c.b16 %v3527, %v3523
    %v3956 = vpack.c.b16 %v3528, %v3524
    %v3957 = vpack.c.b16 %v3533, %v3529
    %v3958 = vpack.c.b16 %v3534, %v3530
    %v3959 = vpack.c.b16 %v3535, %v3531
    %v3960 = vpack.c.b16 %v3536, %v3532
    %v3961 = vpack.c.b16 %v3541, %v3537
    %v3962 = vpack.c.b16 %v3542, %v3538
    %v3963 = vpack.c.b16 %v3543, %v3539
    %v3964 = vpack.c.b16 %v3544, %v3540
    %v3965 = vpack.c.b16 %v3549, %v3545
    %v3966 = vpack.c.b16 %v3550, %v3546
    %v3967 = vpack.c.b16 %v3551, %v3547
    %v3968 = vpack.c.b16 %v3552, %v3548
    %v3969 = vpack.c.b16 %v3557, %v3553
    %v3970 = vpack.c.b16 %v3558, %v3554
    %v3971 = vpack.c.b16 %v3559, %v3555
    %v3972 = vpack.c.b16 %v3560, %v3556
    %v3973 = vpack.c.b16 %v3565, %v3561
    %v3974 = vpack.c.b16 %v3566, %v3562
    %v3975 = vpack.c.b16 %v3567, %v3563
    %v3976 = vpack.c.b16 %v3568, %v3564
    %v3977 = vpack.c.b16 %v3573, %v3569
    %v3978 = vpack.c.b16 %v3574, %v3570
    %v3979 = vpack.c.b16 %v3575, %v3571
    %v3980 = vpack.c.b16 %v3576, %v3572
    %v3981 = vpack.c.b16 %v3581, %v3577
    %v3982 = vpack.c.b16 %v3582, %v3578
    %v3983 = vpack.c.b16 %v3583, %v3579
    %v3984 = vpack.c.b16 %v3584, %v3580
    %v3985 = vpack.c.b16 %v3589, %v3585
    %v3986 = vpack.c.b16 %v3590, %v3586
    %v3987 = vpack.c.b16 %v3591, %v3587
    %v3988 = vpack.c.b16 %v3592, %v3588
    %v3989 = vpack.c.b16 %v3597, %v3593
    %v3990 = vpack.c.b16 %v3598, %v3594
    %v3991 = vpack.c.b16 %v3599, %v3595
    %v3992 = vpack.c.b16 %v3600, %v3596
    %v3993 = vpack.c.b16 %v3605, %v3601
    %v3994 = vpack.c.b16 %v3606, %v3602
    %v3995 = vpack.c.b16 %v3607, %v3603
    %v3996 = vpack.c.b16 %v3608, %v3604
    %v3997 = vpack.c.b16 %v3613, %v3609
    %v3998 = vpack.c.b16 %v3614, %v3610
    %v3999 = vpack.c.b16 %v3615, %v3611
    %v4000 = vpack.c.b16 %v3616, %v3612
    %v4001 = vpack.c.b16 %v3621, %v3617
    %v4002 = vpack.c.b16 %v3622, %v3618
    %v4003 = vpack.c.b16 %v3623, %v3619
    %v4004 = vpack.c.b16 %v3624, %v3620
    %v4005 = vpack.c.b16 %v3629, %v3625
    %v4006 = vpack.c.b16 %v3630, %v3626
    %v4007 = vpack.c.b16 %v3631, %v3627
    %v4008 = vpack.c.b16 %v3632, %v3628
    %v4009 = vpack.c.b16 %v3637, %v3633
    %v4010 = vpack.c.b16 %v3638, %v3634
    %v4011 = vpack.c.b16 %v3639, %v3635
    %v4012 = vpack.c.b16 %v3640, %v3636
    %v4013 = vpack.c.b16 %v3645, %v3641
    %v4014 = vpack.c.b16 %v3646, %v3642
    %v4015 = vpack.c.b16 %v3647, %v3643
    %v4016 = vpack.c.b16 %v3648, %v3644
    %v4017 = vpack.c.b16 %v3653, %v3649
    %v4018 = vpack.c.b16 %v3654, %v3650
    %v4019 = vpack.c.b16 %v3655, %v3651
    %v4020 = vpack.c.b16 %v3656, %v3652
    %v4021 = vpack.c.b16 %v3661, %v3657
    %v4022 = vpack.c.b16 %v3662, %v3658
    %v4023 = vpack.c.b16 %v3663, %v3659
    %v4024 = vpack.c.b16 %v3664, %v3660
    %v4025 = vpack.c.b16 %v3669, %v3665
    %v4026 = vpack.c.b16 %v3670, %v3666
    %v4027 = vpack.c.b16 %v3671, %v3667
    %v4028 = vpack.c.b16 %v3672, %v3668
    %v4029 = vpack.c.b16 %v3677, %v3673
    %v4030 = vpack.c.b16 %v3678, %v3674
    %v4031 = vpack.c.b16 %v3679, %v3675
    %v4032 = vpack.c.b16 %v3680, %v3676
    %v4033 = vpack.c.b16 %v3685, %v3681
    %v4034 = vpack.c.b16 %v3686, %v3682
    %v4035 = vpack.c.b16 %v3687, %v3683
    %v4036 = vpack.c.b16 %v3688, %v3684
    %v4037 = vpack.c.b16 %v3693, %v3689
    %v4038 = vpack.c.b16 %v3694, %v3690
    %v4039 = vpack.c.b16 %v3695, %v3691
    %v4040 = vpack.c.b16 %v3696, %v3692
    %v4041 = vpack.c.b16 %v3701, %v3697
    %v4042 = vpack.c.b16 %v3702, %v3698
    %v4043 = vpack.c.b16 %v3703, %v3699
    %v4044 = vpack.c.b16 %v3704, %v3700
    %v4045 = vpack.c.b16 %v3709, %v3705
    %v4046 = vpack.c.b16 %v3710, %v3706
    %v4047 = vpack.c.b16 %v3711, %v3707
    %v4048 = vpack.c.b16 %v3712, %v3708
    %v4049 = vpack.c.b16 %v3717, %v3713
    %v4050 = vpack.c.b16 %v3718, %v3714
    %v4051 = vpack.c.b16 %v3719, %v3715
    %v4052 = vpack.c.b16 %v3720, %v3716
    %v4053 = vpack.c.b16 %v3725, %v3721
    %v4054 = vpack.c.b16 %v3726, %v3722
    %v4055 = vpack.c.b16 %v3727, %v3723
    %v4056 = vpack.c.b16 %v3728, %v3724
    %v4057 = vpack.c.b16 %v3733, %v3729
    %v4058 = vpack.c.b16 %v3734, %v3730
    %v4059 = vpack.c.b16 %v3735, %v3731
    %v4060 = vpack.c.b16 %v3736, %v3732
    %v4061 = vpack.c.b16 %v3741, %v3737
    %v4062 = vpack.c.b16 %v3742, %v3738
    %v4063 = vpack.c.b16 %v3743, %v3739
    %v4064 = vpack.c.b16 %v3744, %v3740
    %v4065 = vpack.c.b16 %v3749, %v3745
    %v4066 = vpack.c.b16 %v3750, %v3746
    %v4067 = vpack.c.b16 %v3751, %v3747
    %v4068 = vpack.c.b16 %v3752, %v3748
    %v4069 = vpack.c.b16 %v3757, %v3753
    %v4070 = vpack.c.b16 %v3758, %v3754
    %v4071 = vpack.c.b16 %v3759, %v3755
    %v4072 = vpack.c.b16 %v3760, %v3756
    %v4073 = vpack.c.b16 %v3765, %v3761
    %v4074 = vpack.c.b16 %v3766, %v3762
    %v4075 = vpack.c.b16 %v3767, %v3763
    %v4076 = vpack.c.b16 %v3768, %v3764
    %v4077 = vpack.c.b16 %v3773, %v3769
    %v4078 = vpack.c.b16 %v3774, %v3770
    %v4079 = vpack.c.b16 %v3775, %v3771
    %v4080 = vpack.c.b16 %v3776, %v3772
    %v4081 = vpack.c.b16 %v3781, %v3777
    %v4082 = vpack.c.b16 %v3782, %v3778
    %v4083 = vpack.c.b16 %v3783, %v3779
    %v4084 = vpack.c.b16 %v3784, %v3780
    %v4085 = vpack.c.b16 %v3789, %v3785
    %v4086 = vpack.c.b16 %v3790, %v3786
    %v4087 = vpack.c.b16 %v3791, %v3787
    %v4088 = vpack.c.b16 %v3792, %v3788
    %v4089 = vpack.c.b16 %v3797, %v3793
    %v4090 = vpack.c.b16 %v3798, %v3794
    %v4091 = vpack.c.b16 %v3799, %v3795
    %v4092 = vpack.c.b16 %v3800, %v3796
    %v4093 = vpack.c.b16 %v3805, %v3801
    %v4094 = vpack.c.b16 %v3806, %v3802
    %v4095 = vpack.c.b16 %v3807, %v3803
    %v4096 = vpack.c.b16 %v3808, %v3804
    %v4097 = vpack.c.b16 %v3813, %v3809
    %v4098 = vpack.c.b16 %v3814, %v3810
    %v4099 = vpack.c.b16 %v3815, %v3811
    %v4100 = vpack.c.b16 %v3816, %v3812
    %v4101 = vpack.c.b16 %v3821, %v3817
    %v4102 = vpack.c.b16 %v3822, %v3818
    %v4103 = vpack.c.b16 %v3823, %v3819
    %v4104 = vpack.c.b16 %v3824, %v3820
    %v4105 = vpack.c.b16 %v3829, %v3825
    %v4106 = vpack.c.b16 %v3830, %v3826
    %v4107 = vpack.c.b16 %v3831, %v3827
    %v4108 = vpack.c.b16 %v3832, %v3828
    %v4109 = vpack.c.b16 %v3837, %v3833
    %v4110 = vpack.c.b16 %v3838, %v3834
    %v4111 = vpack.c.b16 %v3839, %v3835
    %v4112 = vpack.c.b16 %v3840, %v3836
    %v4113 = vpack.c.b16 %v3845, %v3841
    %v4114 = vpack.c.b16 %v3846, %v3842
    %v4115 = vpack.c.b16 %v3847, %v3843
    %v4116 = vpack.c.b16 %v3848, %v3844
    %v4117 = vpack.c.b16 %v3853, %v3849
    %v4118 = vpack.c.b16 %v3854, %v3850
    %v4119 = vpack.c.b16 %v3855, %v3851
    %v4120 = vpack.c.b16 %v3856, %v3852
    %v4121 = vpack.c.b16 %v3861, %v3857
    %v4122 = vpack.c.b16 %v3862, %v3858
    %v4123 = vpack.c.b16 %v3863, %v3859
    %v4124 = vpack.c.b16 %v3864, %v3860
    %v4125 = vpack.c.b16 %v3869, %v3865
    %v4126 = vpack.c.b16 %v3870, %v3866
    %v4127 = vpack.c.b16 %v3871, %v3867
    %v4128 = vpack.c.b16 %v3872, %v3868
    %4385 = vmatprep.subr.bf16.mxu0 %v3874
    %4386 = vmatpush1.bf16.msra.mxu0 %v3873
    %4387 = vmatprep.subr.bf16.mxu0 %v3878
    %4388 = vmatpush1.bf16.msra.mxu0 %v3877
    %4389 = vmatprep.subr.bf16.mxu0 %v3882
    %4390 = vmatpush1.bf16.msra.mxu0 %v3881
    %4391 = vmatprep.subr.bf16.mxu0 %v3886
    %4392 = vmatpush1.bf16.msra.mxu0 %v3885
    %4393 = vmatprep.subr.bf16.mxu0 %v3890
    %4394 = vmatpush1.bf16.msra.mxu0 %v3889
    %4395 = vmatprep.subr.bf16.mxu0 %v3894
    %4396 = vmatpush1.bf16.msra.mxu0 %v3893
    %4397 = vmatprep.subr.bf16.mxu0 %v3898
    %4398 = vmatpush1.bf16.msra.mxu0 %v3897
    %4399 = vmatprep.subr.bf16.mxu0 %v3902
    %4400 = vmatpush1.bf16.msra.mxu0 %v3901
    %4401 = vmatprep.subr.bf16.mxu0 %v3906
    %4402 = vmatpush1.bf16.msra.mxu0 %v3905
    %4403 = vmatprep.subr.bf16.mxu0 %v3910
    %4404 = vmatpush1.bf16.msra.mxu0 %v3909
    %4405 = vmatprep.subr.bf16.mxu0 %v3914
    %4406 = vmatpush1.bf16.msra.mxu0 %v3913
    %4407 = vmatprep.subr.bf16.mxu0 %v3918
    %4408 = vmatpush1.bf16.msra.mxu0 %v3917
    %4409 = vmatprep.subr.bf16.mxu0 %v3922
    %4410 = vmatpush1.bf16.msra.mxu0 %v3921
    %4411 = vmatprep.subr.bf16.mxu0 %v3926
    %4412 = vmatpush1.bf16.msra.mxu0 %v3925
    %4413 = vmatprep.subr.bf16.mxu0 %v3930
    %4414 = vmatpush1.bf16.msra.mxu0 %v3929
    %4415 = vmatprep.subr.bf16.mxu0 %v3934
    %4416 = vmatpush1.bf16.msra.mxu0 %v3933
    %4417 = vmatprep.mubr.bf16.mxu0 %v2820
    %4418 = vmatmul.mubr.bf16.gmra.mrb[0].mxu0 %v2819
    %v4419 = vpop.f32.mrb[0].mxu0
    %v4420 = vadd.f32 %v3088, %v4419
    %v4421 = vpop.f32.mrb[0].mxu0
    %v4422 = vadd.f32 %v3092, %v4421
    %v4423 = vpop.f32.mrb[0].mxu0
    %v4424 = vpop.f32.mrb[0].mxu0
    %4425 = vdwg.mxu0
    %4426 = vmatprep.subr.bf16.mxu0 %v3938
    %4427 = vmatpush1.bf16.msra.mxu0 %v3937
    %4428 = vmatprep.subr.bf16.mxu0 %v3942
    %4429 = vmatpush1.bf16.msra.mxu0 %v3941
    %4430 = vmatprep.subr.bf16.mxu0 %v3946
    %4431 = vmatpush1.bf16.msra.mxu0 %v3945
    %4432 = vmatprep.subr.bf16.mxu0 %v3950
    %4433 = vmatpush1.bf16.msra.mxu0 %v3949
    %4434 = vmatprep.subr.bf16.mxu0 %v3954
    %4435 = vmatpush1.bf16.msra.mxu0 %v3953
    %4436 = vmatprep.subr.bf16.mxu0 %v3958
    %4437 = vmatpush1.bf16.msra.mxu0 %v3957
    %4438 = vmatprep.subr.bf16.mxu0 %v3962
    %4439 = vmatpush1.bf16.msra.mxu0 %v3961
    %4440 = vmatprep.subr.bf16.mxu0 %v3966
    %4441 = vmatpush1.bf16.msra.mxu0 %v3965
    %4442 = vmatprep.subr.bf16.mxu0 %v3970
    %4443 = vmatpush1.bf16.msra.mxu0 %v3969
    %4444 = vmatprep.subr.bf16.mxu0 %v3974
    %4445 = vmatpush1.bf16.msra.mxu0 %v3973
    %4446 = vmatprep.subr.bf16.mxu0 %v3978
    %4447 = vmatpush1.bf16.msra.mxu0 %v3977
    %4448 = vmatprep.subr.bf16.mxu0 %v3982
    %4449 = vmatpush1.bf16.msra.mxu0 %v3981
    %4450 = vmatprep.subr.bf16.mxu0 %v3986
    %4451 = vmatpush1.bf16.msra.mxu0 %v3985
    %4452 = vmatprep.subr.bf16.mxu0 %v3990
    %4453 = vmatpush1.bf16.msra.mxu0 %v3989
    %4454 = vmatprep.subr.bf16.mxu0 %v3994
    %4455 = vmatpush1.bf16.msra.mxu0 %v3993
    %4456 = vmatprep.subr.bf16.mxu0 %v3998
    %4457 = vmatpush1.bf16.msra.mxu0 %v3997
    %4458 = vmatprep.mubr.bf16.mxu0 %v2822
    %4459 = vmatmul.mubr.bf16.gmra.mrb[0].mxu0 %v2821
    %v4460 = vpop.f32.mrb[0].mxu0
    %v4461 = vadd.f32 %v4420, %v4460
    %v4462 = vpop.f32.mrb[0].mxu0
    %v4463 = vadd.f32 %v4422, %v4462
    %v4464 = vpop.f32.mrb[0].mxu0
    %v4465 = vpop.f32.mrb[0].mxu0
    %4466 = vdwg.mxu0
    %4467 = vmatprep.subr.bf16.mxu0 %v4002
    %4468 = vmatpush1.bf16.msra.mxu0 %v4001
    %4469 = vmatprep.subr.bf16.mxu0 %v4006
    %4470 = vmatpush1.bf16.msra.mxu0 %v4005
    %4471 = vmatprep.subr.bf16.mxu0 %v4010
    %4472 = vmatpush1.bf16.msra.mxu0 %v4009
    %4473 = vmatprep.subr.bf16.mxu0 %v4014
    %4474 = vmatpush1.bf16.msra.mxu0 %v4013
    %4475 = vmatprep.subr.bf16.mxu0 %v4018
    %4476 = vmatpush1.bf16.msra.mxu0 %v4017
    %4477 = vmatprep.subr.bf16.mxu0 %v4022
    %4478 = vmatpush1.bf16.msra.mxu0 %v4021
    %4479 = vmatprep.subr.bf16.mxu0 %v4026
    %4480 = vmatpush1.bf16.msra.mxu0 %v4025
    %4481 = vmatprep.subr.bf16.mxu0 %v4030
    %4482 = vmatpush1.bf16.msra.mxu0 %v4029
    %4483 = vmatprep.subr.bf16.mxu0 %v4034
    %4484 = vmatpush1.bf16.msra.mxu0 %v4033
    %4485 = vmatprep.subr.bf16.mxu0 %v4038
    %4486 = vmatpush1.bf16.msra.mxu0 %v4037
    %4487 = vmatprep.subr.bf16.mxu0 %v4042
    %4488 = vmatpush1.bf16.msra.mxu0 %v4041
    %4489 = vmatprep.subr.bf16.mxu0 %v4046
    %4490 = vmatpush1.bf16.msra.mxu0 %v4045
    %4491 = vmatprep.subr.bf16.mxu0 %v4050
    %4492 = vmatpush1.bf16.msra.mxu0 %v4049
    %4493 = vmatprep.subr.bf16.mxu0 %v4054
    %4494 = vmatpush1.bf16.msra.mxu0 %v4053
    %4495 = vmatprep.subr.bf16.mxu0 %v4058
    %4496 = vmatpush1.bf16.msra.mxu0 %v4057
    %4497 = vmatprep.subr.bf16.mxu0 %v4062
    %4498 = vmatpush1.bf16.msra.mxu0 %v4061
    %4499 = vmatprep.mubr.bf16.mxu0 %v2824
    %4500 = vmatmul.mubr.bf16.gmra.mrb[0].mxu0 %v2823
    %v4501 = vpop.f32.mrb[0].mxu0
    %v4502 = vadd.f32 %v4461, %v4501
    %v4503 = vpop.f32.mrb[0].mxu0
    %v4504 = vadd.f32 %v4463, %v4503
    %v4505 = vpop.f32.mrb[0].mxu0
    %v4506 = vpop.f32.mrb[0].mxu0
    %4507 = vdwg.mxu0
    %4508 = vmatprep.subr.bf16.mxu0 %v4066
    %4509 = vmatpush1.bf16.msra.mxu0 %v4065
    %4510 = vmatprep.subr.bf16.mxu0 %v4070
    %4511 = vmatpush1.bf16.msra.mxu0 %v4069
    %4512 = vmatprep.subr.bf16.mxu0 %v4074
    %4513 = vmatpush1.bf16.msra.mxu0 %v4073
    %4514 = vmatprep.subr.bf16.mxu0 %v4078
    %4515 = vmatpush1.bf16.msra.mxu0 %v4077
    %4516 = vmatprep.subr.bf16.mxu0 %v4082
    %4517 = vmatpush1.bf16.msra.mxu0 %v4081
    %4518 = vmatprep.subr.bf16.mxu0 %v4086
    %4519 = vmatpush1.bf16.msra.mxu0 %v4085
    %4520 = vmatprep.subr.bf16.mxu0 %v4090
    %4521 = vmatpush1.bf16.msra.mxu0 %v4089
    %4522 = vmatprep.subr.bf16.mxu0 %v4094
    %4523 = vmatpush1.bf16.msra.mxu0 %v4093
    %4524 = vmatprep.subr.bf16.mxu0 %v4098
    %4525 = vmatpush1.bf16.msra.mxu0 %v4097
    %4526 = vmatprep.subr.bf16.mxu0 %v4102
    %4527 = vmatpush1.bf16.msra.mxu0 %v4101
    %4528 = vmatprep.subr.bf16.mxu0 %v4106
    %4529 = vmatpush1.bf16.msra.mxu0 %v4105
    %4530 = vmatprep.subr.bf16.mxu0 %v4110
    %4531 = vmatpush1.bf16.msra.mxu0 %v4109
    %4532 = vmatprep.subr.bf16.mxu0 %v4114
    %4533 = vmatpush1.bf16.msra.mxu0 %v4113
    %4534 = vmatprep.subr.bf16.mxu0 %v4118
    %4535 = vmatpush1.bf16.msra.mxu0 %v4117
    %4536 = vmatprep.subr.bf16.mxu0 %v4122
    %4537 = vmatpush1.bf16.msra.mxu0 %v4121
    %4538 = vmatprep.subr.bf16.mxu0 %v4126
    %4539 = vmatpush1.bf16.msra.mxu0 %v4125
    %4540 = vmatprep.mubr.bf16.mxu0 %v2826
    %4541 = vmatmul.mubr.bf16.gmra.mrb[0].mxu0 %v2825
    %v4542 = vpop.f32.mrb[0].mxu0
    %v4543 = vadd.f32 %v4502, %v4542
    %v4544 = vpop.f32.mrb[0].mxu0
    %v4545 = vadd.f32 %v4504, %v4544
    %v4546 = vpop.f32.mrb[0].mxu0
    %v4547 = vpop.f32.mrb[0].mxu0
    %4548 = vdwg.mxu0
    %4549 = vmatprep.subr.bf16.mxu0 %v3876
    %4550 = vmatpush1.bf16.msra.mxu0 %v3875
    %4551 = vmatprep.subr.bf16.mxu0 %v3880
    %4552 = vmatpush1.bf16.msra.mxu0 %v3879
    %4553 = vmatprep.subr.bf16.mxu0 %v3884
    %4554 = vmatpush1.bf16.msra.mxu0 %v3883
    %4555 = vmatprep.subr.bf16.mxu0 %v3888
    %4556 = vmatpush1.bf16.msra.mxu0 %v3887
    %4557 = vmatprep.subr.bf16.mxu0 %v3892
    %4558 = vmatpush1.bf16.msra.mxu0 %v3891
    %4559 = vmatprep.subr.bf16.mxu0 %v3896
    %4560 = vmatpush1.bf16.msra.mxu0 %v3895
    %4561 = vmatprep.subr.bf16.mxu0 %v3900
    %4562 = vmatpush1.bf16.msra.mxu0 %v3899
    %4563 = vmatprep.subr.bf16.mxu0 %v3904
    %4564 = vmatpush1.bf16.msra.mxu0 %v3903
    %4565 = vmatprep.subr.bf16.mxu0 %v3908
    %4566 = vmatpush1.bf16.msra.mxu0 %v3907
    %4567 = vmatprep.subr.bf16.mxu0 %v3912
    %4568 = vmatpush1.bf16.msra.mxu0 %v3911
    %4569 = vmatprep.subr.bf16.mxu0 %v3916
    %4570 = vmatpush1.bf16.msra.mxu0 %v3915
    %4571 = vmatprep.subr.bf16.mxu0 %v3920
    %4572 = vmatpush1.bf16.msra.mxu0 %v3919
    %4573 = vmatprep.subr.bf16.mxu0 %v3924
    %4574 = vmatpush1.bf16.msra.mxu0 %v3923
    %4575 = vmatprep.subr.bf16.mxu0 %v3928
    %4576 = vmatpush1.bf16.msra.mxu0 %v3927
    %4577 = vmatprep.subr.bf16.mxu0 %v3932
    %4578 = vmatpush1.bf16.msra.mxu0 %v3931
    %4579 = vmatprep.subr.bf16.mxu0 %v3936
    %4580 = vmatpush1.bf16.msra.mxu0 %v3935
    %4581 = vmatprep.mubr.bf16.mxu0 %v2820
    %4582 = vmatmul.mubr.bf16.gmra.mrb[0].mxu0 %v2819
    %v4583 = vpop.f32.mrb[0].mxu0
    %v4584 = vadd.f32 %v3096, %v4583
    %v4585 = vpop.f32.mrb[0].mxu0
    %v4586 = vadd.f32 %v3100, %v4585
    %v4587 = vpop.f32.mrb[0].mxu0
    %v4588 = vpop.f32.mrb[0].mxu0
    %4589 = vdwg.mxu0
    %4590 = vmatprep.subr.bf16.mxu0 %v3940
    %4591 = vmatpush1.bf16.msra.mxu0 %v3939
    %4592 = vmatprep.subr.bf16.mxu0 %v3944
    %4593 = vmatpush1.bf16.msra.mxu0 %v3943
    %4594 = vmatprep.subr.bf16.mxu0 %v3948
    %4595 = vmatpush1.bf16.msra.mxu0 %v3947
    %4596 = vmatprep.subr.bf16.mxu0 %v3952
    %4597 = vmatpush1.bf16.msra.mxu0 %v3951
    %4598 = vmatprep.subr.bf16.mxu0 %v3956
    %4599 = vmatpush1.bf16.msra.mxu0 %v3955
    %4600 = vmatprep.subr.bf16.mxu0 %v3960
    %4601 = vmatpush1.bf16.msra.mxu0 %v3959
    %4602 = vmatprep.subr.bf16.mxu0 %v3964
    %4603 = vmatpush1.bf16.msra.mxu0 %v3963
    %4604 = vmatprep.subr.bf16.mxu0 %v3968
    %4605 = vmatpush1.bf16.msra.mxu0 %v3967
    %4606 = vmatprep.subr.bf16.mxu0 %v3972
    %4607 = vmatpush1.bf16.msra.mxu0 %v3971
    %4608 = vmatprep.subr.bf16.mxu0 %v3976
    %4609 = vmatpush1.bf16.msra.mxu0 %v3975
    %4610 = vmatprep.subr.bf16.mxu0 %v3980
    %4611 = vmatpush1.bf16.msra.mxu0 %v3979
    %4612 = vmatprep.subr.bf16.mxu0 %v3984
    %4613 = vmatpush1.bf16.msra.mxu0 %v3983
    %4614 = vmatprep.subr.bf16.mxu0 %v3988
    %4615 = vmatpush1.bf16.msra.mxu0 %v3987
    %4616 = vmatprep.subr.bf16.mxu0 %v3992
    %4617 = vmatpush1.bf16.msra.mxu0 %v3991
    %4618 = vmatprep.subr.bf16.mxu0 %v3996
    %4619 = vmatpush1.bf16.msra.mxu0 %v3995
    %4620 = vmatprep.subr.bf16.mxu0 %v4000
    %4621 = vmatpush1.bf16.msra.mxu0 %v3999
    %4622 = vmatprep.mubr.bf16.mxu0 %v2822
    %4623 = vmatmul.mubr.bf16.gmra.mrb[0].mxu0 %v2821
    %v4624 = vpop.f32.mrb[0].mxu0
    %v4625 = vadd.f32 %v4584, %v4624
    %v4626 = vpop.f32.mrb[0].mxu0
    %v4627 = vadd.f32 %v4586, %v4626
    %v4628 = vpop.f32.mrb[0].mxu0
    %v4629 = vpop.f32.mrb[0].mxu0
    %4630 = vdwg.mxu0
    %4631 = vmatprep.subr.bf16.mxu0 %v4004
    %4632 = vmatpush1.bf16.msra.mxu0 %v4003
    %4633 = vmatprep.subr.bf16.mxu0 %v4008
    %4634 = vmatpush1.bf16.msra.mxu0 %v4007
    %4635 = vmatprep.subr.bf16.mxu0 %v4012
    %4636 = vmatpush1.bf16.msra.mxu0 %v4011
    %4637 = vmatprep.subr.bf16.mxu0 %v4016
    %4638 = vmatpush1.bf16.msra.mxu0 %v4015
    %4639 = vmatprep.subr.bf16.mxu0 %v4020
    %4640 = vmatpush1.bf16.msra.mxu0 %v4019
    %4641 = vmatprep.subr.bf16.mxu0 %v4024
    %4642 = vmatpush1.bf16.msra.mxu0 %v4023
    %4643 = vmatprep.subr.bf16.mxu0 %v4028
    %4644 = vmatpush1.bf16.msra.mxu0 %v4027
    %4645 = vmatprep.subr.bf16.mxu0 %v4032
    %4646 = vmatpush1.bf16.msra.mxu0 %v4031
    %4647 = vmatprep.subr.bf16.mxu0 %v4036
    %4648 = vmatpush1.bf16.msra.mxu0 %v4035
    %4649 = vmatprep.subr.bf16.mxu0 %v4040
    %4650 = vmatpush1.bf16.msra.mxu0 %v4039
    %4651 = vmatprep.subr.bf16.mxu0 %v4044
    %4652 = vmatpush1.bf16.msra.mxu0 %v4043
    %4653 = vmatprep.subr.bf16.mxu0 %v4048
    %4654 = vmatpush1.bf16.msra.mxu0 %v4047
    %4655 = vmatprep.subr.bf16.mxu0 %v4052
    %4656 = vmatpush1.bf16.msra.mxu0 %v4051
    %4657 = vmatprep.subr.bf16.mxu0 %v4056
    %4658 = vmatpush1.bf16.msra.mxu0 %v4055
    %4659 = vmatprep.subr.bf16.mxu0 %v4060
    %4660 = vmatpush1.bf16.msra.mxu0 %v4059
    %4661 = vmatprep.subr.bf16.mxu0 %v4064
    %4662 = vmatpush1.bf16.msra.mxu0 %v4063
    %4663 = vmatprep.mubr.bf16.mxu0 %v2824
    %4664 = vmatmul.mubr.bf16.gmra.mrb[0].mxu0 %v2823
    %v4665 = vpop.f32.mrb[0].mxu0
    %v4666 = vadd.f32 %v4625, %v4665
    %v4667 = vpop.f32.mrb[0].mxu0
    %v4668 = vadd.f32 %v4627, %v4667
    %v4669 = vpop.f32.mrb[0].mxu0
    %v4670 = vpop.f32.mrb[0].mxu0
    %4671 = vdwg.mxu0
    %4672 = vmatprep.subr.bf16.mxu0 %v4068
    %4673 = vmatpush1.bf16.msra.mxu0 %v4067
    %4674 = vmatprep.subr.bf16.mxu0 %v4072
    %4675 = vmatpush1.bf16.msra.mxu0 %v4071
    %4676 = vmatprep.subr.bf16.mxu0 %v4076
    %4677 = vmatpush1.bf16.msra.mxu0 %v4075
    %4678 = vmatprep.subr.bf16.mxu0 %v4080
    %4679 = vmatpush1.bf16.msra.mxu0 %v4079
    %4680 = vmatprep.subr.bf16.mxu0 %v4084
    %4681 = vmatpush1.bf16.msra.mxu0 %v4083
    %4682 = vmatprep.subr.bf16.mxu0 %v4088
    %4683 = vmatpush1.bf16.msra.mxu0 %v4087
    %4684 = vmatprep.subr.bf16.mxu0 %v4092
    %4685 = vmatpush1.bf16.msra.mxu0 %v4091
    %4686 = vmatprep.subr.bf16.mxu0 %v4096
    %4687 = vmatpush1.bf16.msra.mxu0 %v4095
    %4688 = vmatprep.subr.bf16.mxu0 %v4100
    %4689 = vmatpush1.bf16.msra.mxu0 %v4099
    %4690 = vmatprep.subr.bf16.mxu0 %v4104
    %4691 = vmatpush1.bf16.msra.mxu0 %v4103
    %4692 = vmatprep.subr.bf16.mxu0 %v4108
    %4693 = vmatpush1.bf16.msra.mxu0 %v4107
    %4694 = vmatprep.subr.bf16.mxu0 %v4112
    %4695 = vmatpush1.bf16.msra.mxu0 %v4111
    %4696 = vmatprep.subr.bf16.mxu0 %v4116
    %4697 = vmatpush1.bf16.msra.mxu0 %v4115
    %4698 = vmatprep.subr.bf16.mxu0 %v4120
    %4699 = vmatpush1.bf16.msra.mxu0 %v4119
    %4700 = vmatprep.subr.bf16.mxu0 %v4124
    %4701 = vmatpush1.bf16.msra.mxu0 %v4123
    %4702 = vmatprep.subr.bf16.mxu0 %v4128
    %4703 = vmatpush1.bf16.msra.mxu0 %v4127
    %4704 = vmatprep.mubr.bf16.mxu0 %v2826
    %4705 = vmatmul.mubr.bf16.gmra.mrb[0].mxu0 %v2825
    %v4706 = vpop.f32.mrb[0].mxu0
    %v4707 = vadd.f32 %v4666, %v4706
    %v4708 = vpop.f32.mrb[0].mxu0
    %v4709 = vadd.f32 %v4668, %v4708
    %v4710 = vpop.f32.mrb[0].mxu0
    %v4711 = vpop.f32.mrb[0].mxu0
    %4712 = vdwg.mxu0
    %v4713 = vmax.f32 %v4543, 0.0
    %v4714 = vmax.f32 %v4545, 0.0
    %v4715 = vmax.f32 %v4707, 0.0
    %v4716 = vmax.f32 %v4709, 0.0
    %v4717 = vpack.c.bf16 %v4713, %v4713
    %v4718 = vpack.c.bf16 %v4714, %v4714
    %v4719 = vpack.c.bf16 %v4715, %v4715
    %v4720 = vpack.c.bf16 %v4716, %v4716
    %v4721 = vld [vmem:[#allocation13] sm:$0xff]
    %v4722 = vld [vmem:[#allocation13 + $0x8] sm:$0xff]
    %v4723 = vld [vmem:[#allocation13 + $0x10] sm:$0xff]
    %v4724 = vld [vmem:[#allocation13 + $0x18] sm:$0xff]
    %v4725 = vld [vmem:[#allocation13 + $0x20] sm:$0xff]
    %v4726 = vld [vmem:[#allocation13 + $0x28] sm:$0xff]
    %v4727 = vld [vmem:[#allocation13 + $0x30] sm:$0xff]
    %v4728 = vld [vmem:[#allocation13 + $0x38] sm:$0xff]
    %v4729 = vld [vmem:[#allocation13 + $0x40] sm:$0xff]
    %v4730 = vld [vmem:[#allocation13 + $0x48] sm:$0xff]
    %v4731 = vld [vmem:[#allocation13 + $0x50] sm:$0xff]
    %v4732 = vld [vmem:[#allocation13 + $0x58] sm:$0xff]
    %v4733 = vld [vmem:[#allocation13 + $0x60] sm:$0xff]
    %v4734 = vld [vmem:[#allocation13 + $0x68] sm:$0xff]
    %v4735 = vld [vmem:[#allocation13 + $0x70] sm:$0xff]
    %v4736 = vld [vmem:[#allocation13 + $0x78] sm:$0xff]
    %v4737 = vld [vmem:[#allocation13 + $0x80] sm:$0xff]
    %v4738 = vld [vmem:[#allocation13 + $0x88] sm:$0xff]
    %v4739 = vld [vmem:[#allocation13 + $0x90] sm:$0xff]
    %v4740 = vld [vmem:[#allocation13 + $0x98] sm:$0xff]
    %v4741 = vld [vmem:[#allocation13 + $0xa0] sm:$0xff]
    %v4742 = vld [vmem:[#allocation13 + $0xa8] sm:$0xff]
    %v4743 = vld [vmem:[#allocation13 + $0xb0] sm:$0xff]
    %v4744 = vld [vmem:[#allocation13 + $0xb8] sm:$0xff]
    %v4745 = vld [vmem:[#allocation13 + $0xc0] sm:$0xff]
    %v4746 = vld [vmem:[#allocation13 + $0xc8] sm:$0xff]
    %v4747 = vld [vmem:[#allocation13 + $0xd0] sm:$0xff]
    %v4748 = vld [vmem:[#allocation13 + $0xd8] sm:$0xff]
    %v4749 = vld [vmem:[#allocation13 + $0xe0] sm:$0xff]
    %v4750 = vld [vmem:[#allocation13 + $0xe8] sm:$0xff]
    %v4751 = vld [vmem:[#allocation13 + $0xf0] sm:$0xff]
    %v4752 = vld [vmem:[#allocation13 + $0xf8] sm:$0xff]
    %v4753 = vld [vmem:[#allocation13 + $0x100] sm:$0xff]
    %v4754 = vld [vmem:[#allocation13 + $0x108] sm:$0xff]
    %v4755 = vld [vmem:[#allocation13 + $0x110] sm:$0xff]
    %v4756 = vld [vmem:[#allocation13 + $0x118] sm:$0xff]
    %v4757 = vld [vmem:[#allocation13 + $0x120] sm:$0xff]
    %v4758 = vld [vmem:[#allocation13 + $0x128] sm:$0xff]
    %v4759 = vld [vmem:[#allocation13 + $0x130] sm:$0xff]
    %v4760 = vld [vmem:[#allocation13 + $0x138] sm:$0xff]
    %v4761 = vld [vmem:[#allocation13 + $0x140] sm:$0xff]
    %v4762 = vld [vmem:[#allocation13 + $0x148] sm:$0xff]
    %v4763 = vld [vmem:[#allocation13 + $0x150] sm:$0xff]
    %v4764 = vld [vmem:[#allocation13 + $0x158] sm:$0xff]
    %v4765 = vld [vmem:[#allocation13 + $0x160] sm:$0xff]
    %v4766 = vld [vmem:[#allocation13 + $0x168] sm:$0xff]
    %v4767 = vld [vmem:[#allocation13 + $0x170] sm:$0xff]
    %v4768 = vld [vmem:[#allocation13 + $0x178] sm:$0xff]
    %v4769 = vld [vmem:[#allocation13 + $0x180] sm:$0xff]
    %v4770 = vld [vmem:[#allocation13 + $0x188] sm:$0xff]
    %v4771 = vld [vmem:[#allocation13 + $0x190] sm:$0xff]
    %v4772 = vld [vmem:[#allocation13 + $0x198] sm:$0xff]
    %v4773 = vld [vmem:[#allocation13 + $0x1a0] sm:$0xff]
    %v4774 = vld [vmem:[#allocation13 + $0x1a8] sm:$0xff]
    %v4775 = vld [vmem:[#allocation13 + $0x1b0] sm:$0xff]
    %v4776 = vld [vmem:[#allocation13 + $0x1b8] sm:$0xff]
    %v4777 = vld [vmem:[#allocation13 + $0x1c0] sm:$0xff]
    %v4778 = vld [vmem:[#allocation13 + $0x1c8] sm:$0xff]
    %v4779 = vld [vmem:[#allocation13 + $0x1d0] sm:$0xff]
    %v4780 = vld [vmem:[#allocation13 + $0x1d8] sm:$0xff]
    %v4781 = vld [vmem:[#allocation13 + $0x1e0] sm:$0xff]
    %v4782 = vld [vmem:[#allocation13 + $0x1e8] sm:$0xff]
    %v4783 = vld [vmem:[#allocation13 + $0x1f0] sm:$0xff]
    %v4784 = vld [vmem:[#allocation13 + $0x1f8] sm:$0xff]
    %v4785 = vld [vmem:[#allocation14] sm:$0x3]
    %v4787 = vlaneseq
    %v4788 = vshrl.u32 %v4787, 7
    %v4789 = vsub.s32 0, %v4788
    %v4790 = vrot.slane %v4785, %v4789
    %v4791 = vlaneseq
    %v4792 = vshrl.u32 %v4791, 7
    %v4793 = vsub.s32 1, %v4792
    %v4794 = vrot.slane %v4785, %v4793
    %v4861 = vunpack.c.l.b16 %v4721
    %v4862 = vunpack.c.h.b16 %v4721
    %v4863 = vunpack.c.l.b16 %v4722
    %v4864 = vunpack.c.h.b16 %v4722
    %v4865 = vunpack.c.l.b16 %v4723
    %v4866 = vunpack.c.h.b16 %v4723
    %v4867 = vunpack.c.l.b16 %v4724
    %v4868 = vunpack.c.h.b16 %v4724
    %v4869 = vunpack.c.l.b16 %v4725
    %v4870 = vunpack.c.h.b16 %v4725
    %v4871 = vunpack.c.l.b16 %v4726
    %v4872 = vunpack.c.h.b16 %v4726
    %v4873 = vunpack.c.l.b16 %v4727
    %v4874 = vunpack.c.h.b16 %v4727
    %v4875 = vunpack.c.l.b16 %v4728
    %v4876 = vunpack.c.h.b16 %v4728
    %v4877 = vunpack.c.l.b16 %v4729
    %v4878 = vunpack.c.h.b16 %v4729
    %v4879 = vunpack.c.l.b16 %v4730
    %v4880 = vunpack.c.h.b16 %v4730
    %v4881 = vunpack.c.l.b16 %v4731
    %v4882 = vunpack.c.h.b16 %v4731
    %v4883 = vunpack.c.l.b16 %v4732
    %v4884 = vunpack.c.h.b16 %v4732
    %v4885 = vunpack.c.l.b16 %v4733
    %v4886 = vunpack.c.h.b16 %v4733
    %v4887 = vunpack.c.l.b16 %v4734
    %v4888 = vunpack.c.h.b16 %v4734
    %v4889 = vunpack.c.l.b16 %v4735
    %v4890 = vunpack.c.h.b16 %v4735
    %v4891 = vunpack.c.l.b16 %v4736
    %v4892 = vunpack.c.h.b16 %v4736
    %v4893 = vunpack.c.l.b16 %v4737
    %v4894 = vunpack.c.h.b16 %v4737
    %v4895 = vunpack.c.l.b16 %v4738
    %v4896 = vunpack.c.h.b16 %v4738
    %v4897 = vunpack.c.l.b16 %v4739
    %v4898 = vunpack.c.h.b16 %v4739
    %v4899 = vunpack.c.l.b16 %v4740
    %v4900 = vunpack.c.h.b16 %v4740
    %v4901 = vunpack.c.l.b16 %v4741
    %v4902 = vunpack.c.h.b16 %v4741
    %v4903 = vunpack.c.l.b16 %v4742
    %v4904 = vunpack.c.h.b16 %v4742
    %v4905 = vunpack.c.l.b16 %v4743
    %v4906 = vunpack.c.h.b16 %v4743
    %v4907 = vunpack.c.l.b16 %v4744
    %v4908 = vunpack.c.h.b16 %v4744
    %v4909 = vunpack.c.l.b16 %v4745
    %v4910 = vunpack.c.h.b16 %v4745
    %v4911 = vunpack.c.l.b16 %v4746
    %v4912 = vunpack.c.h.b16 %v4746
    %v4913 = vunpack.c.l.b16 %v4747
    %v4914 = vunpack.c.h.b16 %v4747
    %v4915 = vunpack.c.l.b16 %v4748
    %v4916 = vunpack.c.h.b16 %v4748
    %v4917 = vunpack.c.l.b16 %v4749
    %v4918 = vunpack.c.h.b16 %v4749
    %v4919 = vunpack.c.l.b16 %v4750
    %v4920 = vunpack.c.h.b16 %v4750
    %v4921 = vunpack.c.l.b16 %v4751
    %v4922 = vunpack.c.h.b16 %v4751
    %v4923 = vunpack.c.l.b16 %v4752
    %v4924 = vunpack.c.h.b16 %v4752
    %v4925 = vunpack.c.l.b16 %v4753
    %v4926 = vunpack.c.h.b16 %v4753
    %v4927 = vunpack.c.l.b16 %v4754
    %v4928 = vunpack.c.h.b16 %v4754
    %v4929 = vunpack.c.l.b16 %v4755
    %v4930 = vunpack.c.h.b16 %v4755
    %v4931 = vunpack.c.l.b16 %v4756
    %v4932 = vunpack.c.h.b16 %v4756
    %v4933 = vunpack.c.l.b16 %v4757
    %v4934 = vunpack.c.h.b16 %v4757
    %v4935 = vunpack.c.l.b16 %v4758
    %v4936 = vunpack.c.h.b16 %v4758
    %v4937 = vunpack.c.l.b16 %v4759
    %v4938 = vunpack.c.h.b16 %v4759
    %v4939 = vunpack.c.l.b16 %v4760
    %v4940 = vunpack.c.h.b16 %v4760
    %v4941 = vunpack.c.l.b16 %v4761
    %v4942 = vunpack.c.h.b16 %v4761
    %v4943 = vunpack.c.l.b16 %v4762
    %v4944 = vunpack.c.h.b16 %v4762
    %v4945 = vunpack.c.l.b16 %v4763
    %v4946 = vunpack.c.h.b16 %v4763
    %v4947 = vunpack.c.l.b16 %v4764
    %v4948 = vunpack.c.h.b16 %v4764
    %v4949 = vunpack.c.l.b16 %v4765
    %v4950 = vunpack.c.h.b16 %v4765
    %v4951 = vunpack.c.l.b16 %v4766
    %v4952 = vunpack.c.h.b16 %v4766
    %v4953 = vunpack.c.l.b16 %v4767
    %v4954 = vunpack.c.h.b16 %v4767
    %v4955 = vunpack.c.l.b16 %v4768
    %v4956 = vunpack.c.h.b16 %v4768
    %v4957 = vunpack.c.l.b16 %v4769
    %v4958 = vunpack.c.h.b16 %v4769
    %v4959 = vunpack.c.l.b16 %v4770
    %v4960 = vunpack.c.h.b16 %v4770
    %v4961 = vunpack.c.l.b16 %v4771
    %v4962 = vunpack.c.h.b16 %v4771
    %v4963 = vunpack.c.l.b16 %v4772
    %v4964 = vunpack.c.h.b16 %v4772
    %v4965 = vunpack.c.l.b16 %v4773
    %v4966 = vunpack.c.h.b16 %v4773
    %v4967 = vunpack.c.l.b16 %v4774
    %v4968 = vunpack.c.h.b16 %v4774
    %v4969 = vunpack.c.l.b16 %v4775
    %v4970 = vunpack.c.h.b16 %v4775
    %v4971 = vunpack.c.l.b16 %v4776
    %v4972 = vunpack.c.h.b16 %v4776
    %v4973 = vunpack.c.l.b16 %v4777
    %v4974 = vunpack.c.h.b16 %v4777
    %v4975 = vunpack.c.l.b16 %v4778
    %v4976 = vunpack.c.h.b16 %v4778
    %v4977 = vunpack.c.l.b16 %v4779
    %v4978 = vunpack.c.h.b16 %v4779
    %v4979 = vunpack.c.l.b16 %v4780
    %v4980 = vunpack.c.h.b16 %v4780
    %v4981 = vunpack.c.l.b16 %v4781
    %v4982 = vunpack.c.h.b16 %v4781
    %v4983 = vunpack.c.l.b16 %v4782
    %v4984 = vunpack.c.h.b16 %v4782
    %v4985 = vunpack.c.l.b16 %v4783
    %v4986 = vunpack.c.h.b16 %v4783
    %v4987 = vunpack.c.l.b16 %v4784
    %v4988 = vunpack.c.h.b16 %v4784
    %v4989 = vpack.c.b16 %v4863, %v4861
    %v4990 = vpack.c.b16 %v4864, %v4862
    %v4991 = vpack.c.b16 %v4867, %v4865
    %v4992 = vpack.c.b16 %v4868, %v4866
    %v4993 = vpack.c.b16 %v4871, %v4869
    %v4994 = vpack.c.b16 %v4872, %v4870
    %v4995 = vpack.c.b16 %v4875, %v4873
    %v4996 = vpack.c.b16 %v4876, %v4874
    %v4997 = vpack.c.b16 %v4879, %v4877
    %v4998 = vpack.c.b16 %v4880, %v4878
    %v4999 = vpack.c.b16 %v4883, %v4881
    %v5000 = vpack.c.b16 %v4884, %v4882
    %v5001 = vpack.c.b16 %v4887, %v4885
    %v5002 = vpack.c.b16 %v4888, %v4886
    %v5003 = vpack.c.b16 %v4891, %v4889
    %v5004 = vpack.c.b16 %v4892, %v4890
    %v5005 = vpack.c.b16 %v4895, %v4893
    %v5006 = vpack.c.b16 %v4896, %v4894
    %v5007 = vpack.c.b16 %v4899, %v4897
    %v5008 = vpack.c.b16 %v4900, %v4898
    %v5009 = vpack.c.b16 %v4903, %v4901
    %v5010 = vpack.c.b16 %v4904, %v4902
    %v5011 = vpack.c.b16 %v4907, %v4905
    %v5012 = vpack.c.b16 %v4908, %v4906
    %v5013 = vpack.c.b16 %v4911, %v4909
    %v5014 = vpack.c.b16 %v4912, %v4910
    %v5015 = vpack.c.b16 %v4915, %v4913
    %v5016 = vpack.c.b16 %v4916, %v4914
    %v5017 = vpack.c.b16 %v4919, %v4917
    %v5018 = vpack.c.b16 %v4920, %v4918
    %v5019 = vpack.c.b16 %v4923, %v4921
    %v5020 = vpack.c.b16 %v4924, %v4922
    %v5021 = vpack.c.b16 %v4927, %v4925
    %v5022 = vpack.c.b16 %v4928, %v4926
    %v5023 = vpack.c.b16 %v4931, %v4929
    %v5024 = vpack.c.b16 %v4932, %v4930
    %v5025 = vpack.c.b16 %v4935, %v4933
    %v5026 = vpack.c.b16 %v4936, %v4934
    %v5027 = vpack.c.b16 %v4939, %v4937
    %v5028 = vpack.c.b16 %v4940, %v4938
    %v5029 = vpack.c.b16 %v4943, %v4941
    %v5030 = vpack.c.b16 %v4944, %v4942
    %v5031 = vpack.c.b16 %v4947, %v4945
    %v5032 = vpack.c.b16 %v4948, %v4946
    %v5033 = vpack.c.b16 %v4951, %v4949
    %v5034 = vpack.c.b16 %v4952, %v4950
    %v5035 = vpack.c.b16 %v4955, %v4953
    %v5036 = vpack.c.b16 %v4956, %v4954
    %v5037 = vpack.c.b16 %v4959, %v4957
    %v5038 = vpack.c.b16 %v4960, %v4958
    %v5039 = vpack.c.b16 %v4963, %v4961
    %v5040 = vpack.c.b16 %v4964, %v4962
    %v5041 = vpack.c.b16 %v4967, %v4965
    %v5042 = vpack.c.b16 %v4968, %v4966
    %v5043 = vpack.c.b16 %v4971, %v4969
    %v5044 = vpack.c.b16 %v4972, %v4970
    %v5045 = vpack.c.b16 %v4975, %v4973
    %v5046 = vpack.c.b16 %v4976, %v4974
    %v5047 = vpack.c.b16 %v4979, %v4977
    %v5048 = vpack.c.b16 %v4980, %v4978
    %v5049 = vpack.c.b16 %v4983, %v4981
    %v5050 = vpack.c.b16 %v4984, %v4982
    %v5051 = vpack.c.b16 %v4987, %v4985
    %v5052 = vpack.c.b16 %v4988, %v4986
    %5117 = vmatprep.subr.bf16.mxu0 %v4990
    %5118 = vmatpush1.bf16.msra.mxu0 %v4989
    %5119 = vmatprep.subr.bf16.mxu0 %v4992
    %5120 = vmatpush1.bf16.msra.mxu0 %v4991
    %5121 = vmatprep.subr.bf16.mxu0 %v4994
    %5122 = vmatpush1.bf16.msra.mxu0 %v4993
    %5123 = vmatprep.subr.bf16.mxu0 %v4996
    %5124 = vmatpush1.bf16.msra.mxu0 %v4995
    %5125 = vmatprep.subr.bf16.mxu0 %v4998
    %5126 = vmatpush1.bf16.msra.mxu0 %v4997
    %5127 = vmatprep.subr.bf16.mxu0 %v5000
    %5128 = vmatpush1.bf16.msra.mxu0 %v4999
    %5129 = vmatprep.subr.bf16.mxu0 %v5002
    %5130 = vmatpush1.bf16.msra.mxu0 %v5001
    %5131 = vmatprep.subr.bf16.mxu0 %v5004
    %5132 = vmatpush1.bf16.msra.mxu0 %v5003
    %5133 = vmatprep.subr.bf16.mxu0 %v5006
    %5134 = vmatpush1.bf16.msra.mxu0 %v5005
    %5135 = vmatprep.subr.bf16.mxu0 %v5008
    %5136 = vmatpush1.bf16.msra.mxu0 %v5007
    %5137 = vmatprep.subr.bf16.mxu0 %v5010
    %5138 = vmatpush1.bf16.msra.mxu0 %v5009
    %5139 = vmatprep.subr.bf16.mxu0 %v5012
    %5140 = vmatpush1.bf16.msra.mxu0 %v5011
    %5141 = vmatprep.subr.bf16.mxu0 %v5014
    %5142 = vmatpush1.bf16.msra.mxu0 %v5013
    %5143 = vmatprep.subr.bf16.mxu0 %v5016
    %5144 = vmatpush1.bf16.msra.mxu0 %v5015
    %5145 = vmatprep.subr.bf16.mxu0 %v5018
    %5146 = vmatpush1.bf16.msra.mxu0 %v5017
    %5147 = vmatprep.subr.bf16.mxu0 %v5020
    %5148 = vmatpush1.bf16.msra.mxu0 %v5019
    %5149 = vmatprep.mubr.bf16.mxu0 %v4718
    %5150 = vmatmul.mubr.bf16.gmra.mrb[0].mxu0 %v4717
    %v5151 = vpop.f32.mrb[0].mxu0
    %v5152 = vadd.f32 %v4790, %v5151
    %v5153 = vpop.f32.mrb[0].mxu0
    %v5154 = vadd.f32 %v4794, %v5153
    %v5155 = vpop.f32.mrb[0].mxu0
    %v5156 = vpop.f32.mrb[0].mxu0
    %5157 = vdwg.mxu0
    %5158 = vmatprep.subr.bf16.mxu0 %v5022
    %5159 = vmatpush1.bf16.msra.mxu0 %v5021
    %5160 = vmatprep.subr.bf16.mxu0 %v5024
    %5161 = vmatpush1.bf16.msra.mxu0 %v5023
    %5162 = vmatprep.subr.bf16.mxu0 %v5026
    %5163 = vmatpush1.bf16.msra.mxu0 %v5025
    %5164 = vmatprep.subr.bf16.mxu0 %v5028
    %5165 = vmatpush1.bf16.msra.mxu0 %v5027
    %5166 = vmatprep.subr.bf16.mxu0 %v5030
    %5167 = vmatpush1.bf16.msra.mxu0 %v5029
    %5168 = vmatprep.subr.bf16.mxu0 %v5032
    %5169 = vmatpush1.bf16.msra.mxu0 %v5031
    %5170 = vmatprep.subr.bf16.mxu0 %v5034
    %5171 = vmatpush1.bf16.msra.mxu0 %v5033
    %5172 = vmatprep.subr.bf16.mxu0 %v5036
    %5173 = vmatpush1.bf16.msra.mxu0 %v5035
    %5174 = vmatprep.subr.bf16.mxu0 %v5038
    %5175 = vmatpush1.bf16.msra.mxu0 %v5037
    %5176 = vmatprep.subr.bf16.mxu0 %v5040
    %5177 = vmatpush1.bf16.msra.mxu0 %v5039
    %5178 = vmatprep.subr.bf16.mxu0 %v5042
    %5179 = vmatpush1.bf16.msra.mxu0 %v5041
    %5180 = vmatprep.subr.bf16.mxu0 %v5044
    %5181 = vmatpush1.bf16.msra.mxu0 %v5043
    %5182 = vmatprep.subr.bf16.mxu0 %v5046
    %5183 = vmatpush1.bf16.msra.mxu0 %v5045
    %5184 = vmatprep.subr.bf16.mxu0 %v5048
    %5185 = vmatpush1.bf16.msra.mxu0 %v5047
    %5186 = vmatprep.subr.bf16.mxu0 %v5050
    %5187 = vmatpush1.bf16.msra.mxu0 %v5049
    %5188 = vmatprep.subr.bf16.mxu0 %v5052
    %5189 = vmatpush1.bf16.msra.mxu0 %v5051
    %5190 = vmatprep.mubr.bf16.mxu0 %v4720
    %5191 = vmatmul.mubr.bf16.gmra.mrb[0].mxu0 %v4719
    %v5192 = vpop.f32.mrb[0].mxu0
    %v5193 = vadd.f32 %v5152, %v5192
    %v5194 = vpop.f32.mrb[0].mxu0
    %v5195 = vadd.f32 %v5154, %v5194
    %v5196 = vpop.f32.mrb[0].mxu0
    %v5197 = vpop.f32.mrb[0].mxu0
    %5198 = vdwg.mxu0
    %v5199 = vmax.f32 %v5193, 0.0
    %v5200 = vmax.f32 %v5195, 0.0
    %v5201 = vld [vmem:[#allocation16] sm:$0x3]
    %v5203 = vlaneseq
    %v5204 = vshrl.u32 %v5203, 7
    %v5205 = vsub.s32 0, %v5204
    %v5206 = vrot.slane %v5201, %v5205
    %v5207 = vlaneseq
    %v5208 = vshrl.u32 %v5207, 7
    %v5209 = vsub.s32 1, %v5208
    %v5210 = vrot.slane %v5201, %v5209
    %v5213 = vmul.f32 %v5199, %v5206
    %v5214 = vmul.f32 %v5200, %v5210
    %v5215 = vadd.f32 %v5213, %v5214
    %5216 = vadd.xlane.f32.xlu0 %v5215
    %v5217 = vpop.xlane.xlu0 %5216
    %v5218 = vld [vmem:[#allocation2] sm:$0x1]
    %v5220 = vlaneseq
    %v5221 = vshrl.u32 %v5220, 7
    %v5222 = vsub.s32 0, %v5221
    %v5223 = vrot.slane %v5218, %v5222
    %v5225 = vadd.f32 %v5217, %v5223
    %5227 = vset.pattern.permute.xlu0 0
    %5228 = vperm.xlu0 %5227, %v5225
    %v5229 = vpop.permute.xlu0 %5228
    %5231 = vst [vmem:[%s11] sm:$0xff] %v5229
    // Predicated region
    $region82: #{forward.1} parent=1 // pred_check
      _
    $region83: #{forward.1} parent=1 // pred_check_branch
      %5233 = sbr.rel (0) target = $region85
    $region84: #{forward.1} parent=1 // pred_region
      _
    $region85: #{forward.1} parent=1 // pred_fallthru
      _
    // Predicated region
    $region86: #{forward.1} parent=1 // pred_check
      _
    $region87: #{forward.1} parent=1 // pred_check_branch
      %5235 = sbr.rel (0) target = $region89
    $region88: #{forward.1} parent=1 // pred_region
      _
    $region89: #{forward.1} parent=1 // pred_fallthru
      _
    %5236 = vsyncpa [#allocation4], 1
    %5237 = vsyncpa [#allocation6], 1
    %5238 = vsyncpa [#allocation9], 1
    %5239 = vsyncpa [#allocation12], 1
    %5240 = vsyncpa [#allocation15], 1

</llo_original>
